<compile_context>
chip_gen: v7x
topology: tpu7x:2x2x1
jax: 0.10.0
libtpu: 0.0.40
codegen_flags: <defaults>
</compile_context>

<pallas_src>
import functools

import jax
import jax.numpy as jnp
from jax.experimental import pallas as pl
from jax.experimental.pallas import tpu as pltpu


def bottleneck_kernel(x_ref, w1_ref, s1_ref, b1_ref,
                      w2_ref, s2_ref, b2_ref,
                      w3_ref, s3_ref, b3_ref,
                      o_ref, pad_ref, *, H, W, Cin, P):
    Cout = 4 * P
    HW = H * W

    # ---- conv1 (1x1) + bn1 + relu  (bf16 MXU operands, f32 accumulate) -----
    xb = x_ref[0].reshape(HW, Cin).astype(jnp.bfloat16)
    h1 = jnp.dot(xb, w1_ref[...], preferred_element_type=jnp.float32)
    h1 = jnp.maximum(h1 * s1_ref[...] + b1_ref[...], 0.0)           # (HW, P)

    # ---- conv2 (3x3, stride 1, pad 1) + bn2 + relu --------------------------
    # Re-zero only the 1-pixel border of the padded scratch; the interior is
    # fully overwritten every step, so the halo stays correct on every core.
    pad_ref[0:1, :, :] = jnp.zeros((1, W + 2, P), jnp.float32)
    pad_ref[H + 1:H + 2, :, :] = jnp.zeros((1, W + 2, P), jnp.float32)
    pad_ref[:, 0:1, :] = jnp.zeros((H + 2, 1, P), jnp.float32)
    pad_ref[:, W + 1:W + 2, :] = jnp.zeros((H + 2, 1, P), jnp.float32)
    pad_ref[1:H + 1, 1:W + 1, :] = h1.reshape(H, W, P)

    # im2col: 9 shifted patches concatenated along lanes (P=128 => each chunk
    # is exactly one lane tile), then a single K = 9P matmul against w2
    # pre-reshaped to (9P, P) on the host (row = (dh*3+dw)*P + cin).
    patches = [pad_ref[dh:dh + H, dw:dw + W, :].astype(jnp.bfloat16)
               for dh in range(3) for dw in range(3)]
    cols = jnp.concatenate(patches, axis=-1).reshape(HW, 9 * P)
    h2 = jnp.dot(cols, w2_ref[...], preferred_element_type=jnp.float32)
    h2 = jnp.maximum(h2 * s2_ref[...] + b2_ref[...], 0.0)           # (HW, P)

    # ---- conv3 (1x1) + bn3 + residual + relu --------------------------------
    h3 = jnp.dot(h2.astype(jnp.bfloat16), w3_ref[...],
                 preferred_element_type=jnp.float32)
    h3 = h3 * s3_ref[...] + b3_ref[...]                              # (HW, Cout)
    res = x_ref[0].reshape(HW, Cin)   # re-read identity (f32) only here so it
                                      # is not live across the three convs
    out = jnp.maximum(h3 + res, 0.0)
    o_ref[0] = out.reshape(H, W, Cout).astype(o_ref.dtype)


def bottleneck(x, params):
    """x: (N, H, W, Cin) f32 with Cin == 4 * planes (stride=1, no downsample)."""
    N, H, W, Cin = x.shape
    w1, s1, b1, w2, s2, b2, w3, s3, b3 = params
    P = w1.shape[1]
    Cout = 4 * P
    assert Cin == Cout, "residual add requires inplanes == planes * 4"
    assert P % 128 == 0, "planes must be a multiple of 128 (lane-aligned im2col)"

    # bf16 MXU operands; w2 reshaped host-side to (9P, P) for the single
    # im2col matmul (row index = (dh*3 + dw)*P + cin, matching the kernel's
    # patch concatenation order).
    w1b = w1.astype(jnp.bfloat16)
    w2b = w2.reshape(9 * P, P).astype(jnp.bfloat16)
    w3b = w3.astype(jnp.bfloat16)

    full = lambda a: pl.BlockSpec(a.shape, lambda n: (0,) * a.ndim)
    kernel = functools.partial(bottleneck_kernel, H=H, W=W, Cin=Cin, P=P)
    return pl.pallas_call(
        kernel,
        out_shape=jax.ShapeDtypeStruct((N, H, W, Cout), x.dtype),
        grid_spec=pltpu.PrefetchScalarGridSpec(
            num_scalar_prefetch=0,
            grid=(N,),
            in_specs=[
                pl.BlockSpec((1, H, W, Cin), lambda n: (n, 0, 0, 0)),
                full(w1b), full(s1), full(b1),
                full(w2b), full(s2), full(b2),
                full(w3b), full(s3), full(b3),
            ],
            out_specs=pl.BlockSpec((1, H, W, Cout), lambda n: (n, 0, 0, 0)),
            scratch_shapes=[pltpu.VMEM((H + 2, W + 2, P), jnp.float32)],
        ),
        compiler_params=pltpu.CompilerParams(
            dimension_semantics=("parallel",)),
    )(x, w1b, s1, b1, w2b, s2, b2, w3b, s3, b3)


def fold_bn(gamma, beta, mean, var, eps=1e-5):
    scale = gamma / jnp.sqrt(var + eps)
    bias = beta - mean * scale
    # keep 2D (1, C) so they broadcast against (H*W, C) inside the kernel
    return scale.reshape(1, -1), bias.reshape(1, -1)


def reference(x, params):
    """Pure-JAX reference with the same bf16-input / f32-accumulate convs."""
    w1, s1, b1, w2, s2, b2, w3, s3, b3 = params
    dn = ('NHWC', 'HWIO', 'NHWC')

    def conv(a, w, pad):
        return jax.lax.conv_general_dilated(
            a.astype(jnp.bfloat16), w.astype(jnp.bfloat16),
            window_strides=(1, 1), padding=pad, dimension_numbers=dn,
            preferred_element_type=jnp.float32)

    P = w1.shape[1]
    Cin = x.shape[-1]
    o = conv(x, w1.reshape(1, 1, Cin, P), 'VALID')
    o = jnp.maximum(o * s1.reshape(1, 1, 1, -1) + b1.reshape(1, 1, 1, -1), 0.0)
    o = conv(o, w2, 'SAME')
    o = jnp.maximum(o * s2.reshape(1, 1, 1, -1) + b2.reshape(1, 1, 1, -1), 0.0)
    o = conv(o, w3.reshape(1, 1, P, 4 * P), 'VALID')
    o = o * s3.reshape(1, 1, 1, -1) + b3.reshape(1, 1, 1, -1)
    return jnp.maximum(o + x, 0.0)


if __name__ == "__main__":
    # Lane-dense, ResNet-realistic block: planes = 128 => inplanes = out = 512.
    N, H, W = 2, 16, 16
    planes = 128
    inplanes = planes * 4

    key = jax.random.PRNGKey(0)
    ks = jax.random.split(key, 16)

    x = jax.random.normal(ks[0], (N, H, W, inplanes), dtype=jnp.float32)

    # conv weights (matmul-ready / HWIO-style), deterministic init
    w1 = 0.05 * jax.random.normal(ks[1], (inplanes, planes), dtype=jnp.float32)
    w2 = 0.05 * jax.random.normal(ks[2], (3, 3, planes, planes), dtype=jnp.float32)
    w3 = 0.05 * jax.random.normal(ks[3], (planes, planes * 4), dtype=jnp.float32)

    def bn_params(kg, kb, km, kv, c):
        gamma = 1.0 + 0.1 * jax.random.normal(kg, (c,), dtype=jnp.float32)
        beta = 0.1 * jax.random.normal(kb, (c,), dtype=jnp.float32)
        mean = 0.1 * jax.random.normal(km, (c,), dtype=jnp.float32)
        var = 0.5 + jnp.abs(jax.random.normal(kv, (c,), dtype=jnp.float32))
        return fold_bn(gamma, beta, mean, var)

    s1, b1 = bn_params(ks[4], ks[5], ks[6], ks[7], planes)
    s2, b2 = bn_params(ks[8], ks[9], ks[10], ks[11], planes)
    s3, b3 = bn_params(ks[12], ks[13], ks[14], ks[15], planes * 4)

    params = (w1, s1, b1, w2, s2, b2, w3, s3, b3)

    out = jax.block_until_ready(bottleneck(x, params))
    ref = jax.block_until_ready(reference(x, params))

    assert out.shape == (N, H, W, inplanes)
    err = float(jnp.max(jnp.abs(out - ref)))
    assert err < 2e-2, f"mismatch vs bf16 JAX reference: {err}"
    print("KERNEL_OK")
</pallas_src>

<mosaic_0001>
module attributes {stable_mosaic.version = 11 : i64} {
  func.func @bottleneck_kernel(%arg0: i32, %arg1: memref<1x16x16x512xf32, #tpu.memory_space<vmem>>, %arg2: memref<512x128xbf16, #tpu.memory_space<vmem>>, %arg3: memref<1x128xf32, #tpu.memory_space<vmem>>, %arg4: memref<1x128xf32, #tpu.memory_space<vmem>>, %arg5: memref<1152x128xbf16, #tpu.memory_space<vmem>>, %arg6: memref<1x128xf32, #tpu.memory_space<vmem>>, %arg7: memref<1x128xf32, #tpu.memory_space<vmem>>, %arg8: memref<128x512xbf16, #tpu.memory_space<vmem>>, %arg9: memref<1x512xf32, #tpu.memory_space<vmem>>, %arg10: memref<1x512xf32, #tpu.memory_space<vmem>>, %arg11: memref<1x16x16x512xf32, #tpu.memory_space<vmem>>, %arg12: memref<18x18x128xf32, #tpu.memory_space<vmem>>) attributes {dimension_semantics = [#tpu.dimension_semantics<parallel>], iteration_bounds = array<i64: 2>, scalar_prefetch = 0 : i64, scratch_operands = 1 : i64, tpu.core_type = #tpu.core_type<tc>, window_params = [{transform_indices = @transform_0, window_bounds = array<i64: 1, 16, 16, 512>}, {pipeline_mode = #tpu.pipeline_mode<synchronous>, transform_indices = @transform_1, window_bounds = array<i64: 512, 128>}, {pipeline_mode = #tpu.pipeline_mode<synchronous>, transform_indices = @transform_2, window_bounds = array<i64: 1, 128>}, {pipeline_mode = #tpu.pipeline_mode<synchronous>, transform_indices = @transform_3, window_bounds = array<i64: 1, 128>}, {pipeline_mode = #tpu.pipeline_mode<synchronous>, transform_indices = @transform_4, window_bounds = array<i64: 1152, 128>}, {pipeline_mode = #tpu.pipeline_mode<synchronous>, transform_indices = @transform_5, window_bounds = array<i64: 1, 128>}, {pipeline_mode = #tpu.pipeline_mode<synchronous>, transform_indices = @transform_6, window_bounds = array<i64: 1, 128>}, {pipeline_mode = #tpu.pipeline_mode<synchronous>, transform_indices = @transform_7, window_bounds = array<i64: 128, 512>}, {pipeline_mode = #tpu.pipeline_mode<synchronous>, transform_indices = @transform_8, window_bounds = array<i64: 1, 512>}, {pipeline_mode = #tpu.pipeline_mode<synchronous>, transform_indices = @transform_9, window_bounds = array<i64: 1, 512>}, {transform_indices = @transform_10, window_bounds = array<i64: 1, 16, 16, 512>}]} {
    %c0 = arith.constant 0 : index
    %c0_0 = arith.constant 0 : index
    %c0_1 = arith.constant 0 : index
    %c0_2 = arith.constant 0 : index
    %0 = vector.load %arg1[%c0, %c0_0, %c0_1, %c0_2] : memref<1x16x16x512xf32, #tpu.memory_space<vmem>>, vector<1x16x16x512xf32>
    %1 = vector.shape_cast %0 : vector<1x16x16x512xf32> to vector<16x16x512xf32>
    %2 = vector.shape_cast %1 : vector<16x16x512xf32> to vector<256x512xf32>
    %3 = arith.truncf %2 : vector<256x512xf32> to vector<256x512xbf16>
    %c0_3 = arith.constant 0 : index
    %c0_4 = arith.constant 0 : index
    %4 = vector.load %arg2[%c0_3, %c0_4] : memref<512x128xbf16, #tpu.memory_space<vmem>>, vector<512x128xbf16>
    %cst = arith.constant dense<0.000000e+00> : vector<256x128xf32>
    %5 = tpu.matmul %3, %4, %cst {dimension_numbers = #tpu.dot_dimension_numbers<[1], [0], [0], [1], [0, 0, 1, 1], [], []>} : vector<256x512xbf16>, vector<512x128xbf16>, vector<256x128xf32> -> vector<256x128xf32>
    %c0_5 = arith.constant 0 : index
    %c0_6 = arith.constant 0 : index
    %6 = vector.load %arg3[%c0_5, %c0_6] : memref<1x128xf32, #tpu.memory_space<vmem>>, vector<1x128xf32>
    %7 = vector.broadcast %6 : vector<1x128xf32> to vector<256x128xf32>
    %8 = arith.mulf %5, %7 : vector<256x128xf32>
    %c0_7 = arith.constant 0 : index
    %c0_8 = arith.constant 0 : index
    %9 = vector.load %arg4[%c0_7, %c0_8] : memref<1x128xf32, #tpu.memory_space<vmem>>, vector<1x128xf32>
    %10 = vector.broadcast %9 : vector<1x128xf32> to vector<256x128xf32>
    %11 = arith.addf %8, %10 : vector<256x128xf32>
    %cst_9 = arith.constant 0.000000e+00 : f32
    %12 = vector.broadcast %cst_9 : f32 to vector<256x128xf32>
    %13 = arith.maximumf %11, %12 : vector<256x128xf32>
    %cst_10 = arith.constant 0.000000e+00 : f32
    %14 = vector.broadcast %cst_10 : f32 to vector<1x18x128xf32>
    %c0_11 = arith.constant 0 : index
    %c0_12 = arith.constant 0 : index
    %c0_13 = arith.constant 0 : index
    %15 = vector.load %arg12[%c0_11, %c0_12, %c0_13] : memref<18x18x128xf32, #tpu.memory_space<vmem>>, vector<1x18x128xf32>
    tpu.vector_store %arg12[%c0_11, %c0_12, %c0_13], %14 {strides = array<i32>} : memref<18x18x128xf32, #tpu.memory_space<vmem>>, vector<1x18x128xf32>,
    %cst_14 = arith.constant 0.000000e+00 : f32
    %16 = vector.broadcast %cst_14 : f32 to vector<1x18x128xf32>
    %c17 = arith.constant 17 : index
    %c0_15 = arith.constant 0 : index
    %c0_16 = arith.constant 0 : index
    %17 = vector.load %arg12[%c17, %c0_15, %c0_16] : memref<18x18x128xf32, #tpu.memory_space<vmem>>, vector<1x18x128xf32>
    tpu.vector_store %arg12[%c17, %c0_15, %c0_16], %16 {strides = array<i32>} : memref<18x18x128xf32, #tpu.memory_space<vmem>>, vector<1x18x128xf32>,
    %cst_17 = arith.constant 0.000000e+00 : f32
    %18 = vector.broadcast %cst_17 : f32 to vector<18x1x128xf32>
    %c0_18 = arith.constant 0 : index
    %c0_19 = arith.constant 0 : index
    %c0_20 = arith.constant 0 : index
    %19 = vector.load %arg12[%c0_18, %c0_19, %c0_20] : memref<18x18x128xf32, #tpu.memory_space<vmem>>, vector<18x1x128xf32>
    tpu.vector_store %arg12[%c0_18, %c0_19, %c0_20], %18 {strides = array<i32>} : memref<18x18x128xf32, #tpu.memory_space<vmem>>, vector<18x1x128xf32>,
    %cst_21 = arith.constant 0.000000e+00 : f32
    %20 = vector.broadcast %cst_21 : f32 to vector<18x1x128xf32>
    %c0_22 = arith.constant 0 : index
    %c17_23 = arith.constant 17 : index
    %c0_24 = arith.constant 0 : index
    %21 = vector.load %arg12[%c0_22, %c17_23, %c0_24] : memref<18x18x128xf32, #tpu.memory_space<vmem>>, vector<18x1x128xf32>
    tpu.vector_store %arg12[%c0_22, %c17_23, %c0_24], %20 {strides = array<i32>} : memref<18x18x128xf32, #tpu.memory_space<vmem>>, vector<18x1x128xf32>,
    %22 = vector.shape_cast %13 : vector<256x128xf32> to vector<16x16x128xf32>
    %c1 = arith.constant 1 : index
    %c1_25 = arith.constant 1 : index
    %c0_26 = arith.constant 0 : index
    %23 = vector.load %arg12[%c1, %c1_25, %c0_26] : memref<18x18x128xf32, #tpu.memory_space<vmem>>, vector<16x16x128xf32>
    tpu.vector_store %arg12[%c1, %c1_25, %c0_26], %22 {strides = array<i32>} : memref<18x18x128xf32, #tpu.memory_space<vmem>>, vector<16x16x128xf32>,
    %c0_27 = arith.constant 0 : index
    %c0_28 = arith.constant 0 : index
    %c0_29 = arith.constant 0 : index
    %24 = vector.load %arg12[%c0_27, %c0_28, %c0_29] : memref<18x18x128xf32, #tpu.memory_space<vmem>>, vector<16x16x128xf32>
    %25 = arith.truncf %24 : vector<16x16x128xf32> to vector<16x16x128xbf16>
    %c0_30 = arith.constant 0 : index
    %c1_31 = arith.constant 1 : index
    %c0_32 = arith.constant 0 : index
    %26 = vector.load %arg12[%c0_30, %c1_31, %c0_32] : memref<18x18x128xf32, #tpu.memory_space<vmem>>, vector<16x16x128xf32>
    %27 = arith.truncf %26 : vector<16x16x128xf32> to vector<16x16x128xbf16>
    %c0_33 = arith.constant 0 : index
    %c2 = arith.constant 2 : index
    %c0_34 = arith.constant 0 : index
    %28 = vector.load %arg12[%c0_33, %c2, %c0_34] : memref<18x18x128xf32, #tpu.memory_space<vmem>>, vector<16x16x128xf32>
    %29 = arith.truncf %28 : vector<16x16x128xf32> to vector<16x16x128xbf16>
    %c1_35 = arith.constant 1 : index
    %c0_36 = arith.constant 0 : index
    %c0_37 = arith.constant 0 : index
    %30 = vector.load %arg12[%c1_35, %c0_36, %c0_37] : memref<18x18x128xf32, #tpu.memory_space<vmem>>, vector<16x16x128xf32>
    %31 = arith.truncf %30 : vector<16x16x128xf32> to vector<16x16x128xbf16>
    %c1_38 = arith.constant 1 : index
    %c1_39 = arith.constant 1 : index
    %c0_40 = arith.constant 0 : index
    %32 = vector.load %arg12[%c1_38, %c1_39, %c0_40] : memref<18x18x128xf32, #tpu.memory_space<vmem>>, vector<16x16x128xf32>
    %33 = arith.truncf %32 : vector<16x16x128xf32> to vector<16x16x128xbf16>
    %c1_41 = arith.constant 1 : index
    %c2_42 = arith.constant 2 : index
    %c0_43 = arith.constant 0 : index
    %34 = vector.load %arg12[%c1_41, %c2_42, %c0_43] : memref<18x18x128xf32, #tpu.memory_space<vmem>>, vector<16x16x128xf32>
    %35 = arith.truncf %34 : vector<16x16x128xf32> to vector<16x16x128xbf16>
    %c2_44 = arith.constant 2 : index
    %c0_45 = arith.constant 0 : index
    %c0_46 = arith.constant 0 : index
    %36 = vector.load %arg12[%c2_44, %c0_45, %c0_46] : memref<18x18x128xf32, #tpu.memory_space<vmem>>, vector<16x16x128xf32>
    %37 = arith.truncf %36 : vector<16x16x128xf32> to vector<16x16x128xbf16>
    %c2_47 = arith.constant 2 : index
    %c1_48 = arith.constant 1 : index
    %c0_49 = arith.constant 0 : index
    %38 = vector.load %arg12[%c2_47, %c1_48, %c0_49] : memref<18x18x128xf32, #tpu.memory_space<vmem>>, vector<16x16x128xf32>
    %39 = arith.truncf %38 : vector<16x16x128xf32> to vector<16x16x128xbf16>
    %c2_50 = arith.constant 2 : index
    %c2_51 = arith.constant 2 : index
    %c0_52 = arith.constant 0 : index
    %40 = vector.load %arg12[%c2_50, %c2_51, %c0_52] : memref<18x18x128xf32, #tpu.memory_space<vmem>>, vector<16x16x128xf32>
    %41 = arith.truncf %40 : vector<16x16x128xf32> to vector<16x16x128xbf16>
    %42 = tpu.concatenate %25, %27, %29, %31, %33, %35, %37, %39, %41 in 2 : vector<16x16x128xbf16>, vector<16x16x128xbf16>, vector<16x16x128xbf16>, vector<16x16x128xbf16>, vector<16x16x128xbf16>, vector<16x16x128xbf16>, vector<16x16x128xbf16>, vector<16x16x128xbf16>, vector<16x16x128xbf16> -> vector<16x16x1152xbf16>
    %43 = vector.shape_cast %42 : vector<16x16x1152xbf16> to vector<256x1152xbf16>
    %c0_53 = arith.constant 0 : index
    %c0_54 = arith.constant 0 : index
    %44 = vector.load %arg5[%c0_53, %c0_54] : memref<1152x128xbf16, #tpu.memory_space<vmem>>, vector<1152x128xbf16>
    %cst_55 = arith.constant dense<0.000000e+00> : vector<256x128xf32>
    %45 = tpu.matmul %43, %44, %cst_55 {dimension_numbers = #tpu.dot_dimension_numbers<[1], [0], [0], [1], [0, 0, 1, 1], [], []>} : vector<256x1152xbf16>, vector<1152x128xbf16>, vector<256x128xf32> -> vector<256x128xf32>
    %c0_56 = arith.constant 0 : index
    %c0_57 = arith.constant 0 : index
    %46 = vector.load %arg6[%c0_56, %c0_57] : memref<1x128xf32, #tpu.memory_space<vmem>>, vector<1x128xf32>
    %47 = vector.broadcast %46 : vector<1x128xf32> to vector<256x128xf32>
    %48 = arith.mulf %45, %47 : vector<256x128xf32>
    %c0_58 = arith.constant 0 : index
    %c0_59 = arith.constant 0 : index
    %49 = vector.load %arg7[%c0_58, %c0_59] : memref<1x128xf32, #tpu.memory_space<vmem>>, vector<1x128xf32>
    %50 = vector.broadcast %49 : vector<1x128xf32> to vector<256x128xf32>
    %51 = arith.addf %48, %50 : vector<256x128xf32>
    %cst_60 = arith.constant 0.000000e+00 : f32
    %52 = vector.broadcast %cst_60 : f32 to vector<256x128xf32>
    %53 = arith.maximumf %51, %52 : vector<256x128xf32>
    %54 = arith.truncf %53 : vector<256x128xf32> to vector<256x128xbf16>
    %c0_61 = arith.constant 0 : index
    %c0_62 = arith.constant 0 : index
    %55 = vector.load %arg8[%c0_61, %c0_62] : memref<128x512xbf16, #tpu.memory_space<vmem>>, vector<128x512xbf16>
    %cst_63 = arith.constant dense<0.000000e+00> : vector<256x512xf32>
    %56 = tpu.matmul %54, %55, %cst_63 {dimension_numbers = #tpu.dot_dimension_numbers<[1], [0], [0], [1], [0, 0, 1, 1], [], []>} : vector<256x128xbf16>, vector<128x512xbf16>, vector<256x512xf32> -> vector<256x512xf32>
    %c0_64 = arith.constant 0 : index
    %c0_65 = arith.constant 0 : index
    %57 = vector.load %arg9[%c0_64, %c0_65] : memref<1x512xf32, #tpu.memory_space<vmem>>, vector<1x512xf32>
    %58 = vector.broadcast %57 : vector<1x512xf32> to vector<256x512xf32>
    %59 = arith.mulf %56, %58 : vector<256x512xf32>
    %c0_66 = arith.constant 0 : index
    %c0_67 = arith.constant 0 : index
    %60 = vector.load %arg10[%c0_66, %c0_67] : memref<1x512xf32, #tpu.memory_space<vmem>>, vector<1x512xf32>
    %61 = vector.broadcast %60 : vector<1x512xf32> to vector<256x512xf32>
    %62 = arith.addf %59, %61 : vector<256x512xf32>
    %c0_68 = arith.constant 0 : index
    %c0_69 = arith.constant 0 : index
    %c0_70 = arith.constant 0 : index
    %c0_71 = arith.constant 0 : index
    %63 = vector.load %arg1[%c0_68, %c0_69, %c0_70, %c0_71] : memref<1x16x16x512xf32, #tpu.memory_space<vmem>>, vector<1x16x16x512xf32>
    %64 = vector.shape_cast %63 : vector<1x16x16x512xf32> to vector<16x16x512xf32>
    %65 = vector.shape_cast %64 : vector<16x16x512xf32> to vector<256x512xf32>
    %66 = arith.addf %62, %65 : vector<256x512xf32>
    %cst_72 = arith.constant 0.000000e+00 : f32
    %67 = vector.broadcast %cst_72 : f32 to vector<256x512xf32>
    %68 = arith.maximumf %66, %67 : vector<256x512xf32>
    %69 = vector.shape_cast %68 : vector<256x512xf32> to vector<16x16x512xf32>
    %c0_73 = arith.constant 0 : index
    %c0_74 = arith.constant 0 : index
    %c0_75 = arith.constant 0 : index
    %c0_76 = arith.constant 0 : index
    %70 = vector.load %arg11[%c0_73, %c0_74, %c0_75, %c0_76] : memref<1x16x16x512xf32, #tpu.memory_space<vmem>>, vector<1x16x16x512xf32>
    %71 = vector.shape_cast %70 : vector<1x16x16x512xf32> to vector<16x16x512xf32>
    %72 = vector.shape_cast %69 : vector<16x16x512xf32> to vector<1x16x16x512xf32>
    tpu.vector_store %arg11[%c0_73, %c0_74, %c0_75, %c0_76], %72 {strides = array<i32>} : memref<1x16x16x512xf32, #tpu.memory_space<vmem>>, vector<1x16x16x512xf32>,
    return
  }
  func.func @transform_0(%arg0: i32) -> (i32, i32, i32, i32) {
    %c0_i32 = arith.constant 0 : i32
    %c0_i32_0 = arith.constant 0 : i32
    %c0_i32_1 = arith.constant 0 : i32
    %c0_i32_2 = arith.constant 0 : i32
    return %arg0, %c0_i32, %c0_i32_0, %c0_i32_1 : i32, i32, i32, i32
  }
  func.func @transform_1(%arg0: i32) -> (i32, i32) {
    %c0_i32 = arith.constant 0 : i32
    %c0_i32_0 = arith.constant 0 : i32
    %c0_i32_1 = arith.constant 0 : i32
    return %c0_i32, %c0_i32_0 : i32, i32
  }
  func.func @transform_2(%arg0: i32) -> (i32, i32) {
    %c0_i32 = arith.constant 0 : i32
    %c0_i32_0 = arith.constant 0 : i32
    %c0_i32_1 = arith.constant 0 : i32
    return %c0_i32, %c0_i32_0 : i32, i32
  }
  func.func @transform_3(%arg0: i32) -> (i32, i32) {
    %c0_i32 = arith.constant 0 : i32
    %c0_i32_0 = arith.constant 0 : i32
    %c0_i32_1 = arith.constant 0 : i32
    return %c0_i32, %c0_i32_0 : i32, i32
  }
  func.func @transform_4(%arg0: i32) -> (i32, i32) {
    %c0_i32 = arith.constant 0 : i32
    %c0_i32_0 = arith.constant 0 : i32
    %c0_i32_1 = arith.constant 0 : i32
    return %c0_i32, %c0_i32_0 : i32, i32
  }
  func.func @transform_5(%arg0: i32) -> (i32, i32) {
    %c0_i32 = arith.constant 0 : i32
    %c0_i32_0 = arith.constant 0 : i32
    %c0_i32_1 = arith.constant 0 : i32
    return %c0_i32, %c0_i32_0 : i32, i32
  }
  func.func @transform_6(%arg0: i32) -> (i32, i32) {
    %c0_i32 = arith.constant 0 : i32
    %c0_i32_0 = arith.constant 0 : i32
    %c0_i32_1 = arith.constant 0 : i32
    return %c0_i32, %c0_i32_0 : i32, i32
  }
  func.func @transform_7(%arg0: i32) -> (i32, i32) {
    %c0_i32 = arith.constant 0 : i32
    %c0_i32_0 = arith.constant 0 : i32
    %c0_i32_1 = arith.constant 0 : i32
    return %c0_i32, %c0_i32_0 : i32, i32
  }
  func.func @transform_8(%arg0: i32) -> (i32, i32) {
    %c0_i32 = arith.constant 0 : i32
    %c0_i32_0 = arith.constant 0 : i32
    %c0_i32_1 = arith.constant 0 : i32
    return %c0_i32, %c0_i32_0 : i32, i32
  }
  func.func @transform_9(%arg0: i32) -> (i32, i32) {
    %c0_i32 = arith.constant 0 : i32
    %c0_i32_0 = arith.constant 0 : i32
    %c0_i32_1 = arith.constant 0 : i32
    return %c0_i32, %c0_i32_0 : i32, i32
  }
  func.func @transform_10(%arg0: i32) -> (i32, i32, i32, i32) {
    %c0_i32 = arith.constant 0 : i32
    %c0_i32_0 = arith.constant 0 : i32
    %c0_i32_1 = arith.constant 0 : i32
    %c0_i32_2 = arith.constant 0 : i32
    return %arg0, %c0_i32, %c0_i32_0, %c0_i32_1 : i32, i32, i32, i32
  }
}

</mosaic_0001>

<llo_original>
// kernel: tpu_custom_call.1
$region0: #{tpu_custom_call.1}
  #allocation0 [shape = 'u32[]', space=smem, size = 0x4, offset = 0x4, fixed_abs, tag = 'smem constant byte address 0x4 - core index']
  #allocation1 [shape = 'u32[144,128]{1,0:T(1,128)}', space=vmem, size = 0x12000, scoped, tag = 'internal scratch']
  #allocation2 [shape = 'f32[18,18,128]{2,1,0:T(8,128)}', space=vmem, size = 0x36000, scoped, tag = 'scratch operand']
  %s0 = inlined_call_operand.hbm [shape: f32[2,16,16,512], index: 0, kind: input, shape index: {}]
  %s1 = inlined_call_operand.hbm [shape: bf16[512,128], index: 1, kind: input, shape index: {}]
  %s2 = inlined_call_operand.vmem [shape: f32[1,128], index: 2, kind: input, shape index: {}]
  %s3 = inlined_call_operand.vmem [shape: f32[1,128], index: 3, kind: input, shape index: {}]
  %s4 = inlined_call_operand.hbm [shape: bf16[1152,128], index: 4, kind: input, shape index: {}]
  %s5 = inlined_call_operand.vmem [shape: f32[1,128], index: 5, kind: input, shape index: {}]
  %s6 = inlined_call_operand.vmem [shape: f32[1,128], index: 6, kind: input, shape index: {}]
  %s7 = inlined_call_operand.hbm [shape: bf16[128,512], index: 7, kind: input, shape index: {}]
  %s8 = inlined_call_operand.vmem [shape: f32[1,512], index: 8, kind: input, shape index: {}]
  %s9 = inlined_call_operand.vmem [shape: f32[1,512], index: 9, kind: input, shape index: {}]
  %s10 = inlined_call_operand.hbm [shape: f32[2,16,16,512], index: 10, kind: output, shape index: {}]
  %s11 = sld [smem:[#allocation0]]
  $region89: #{tpu_custom_call.1} parent=0
    _
  %s13 = ssub.s32 1, %s11
  %s14 = scalar_select 0, %s13, %s11
  $region1: #{tpu_custom_call.1} parent=0
    #allocation3 [shape = 'u8[1048576]{0}', space=vmem, size = 0x100000, scoped, tag = 'input window, operand 0']
    #allocation4 [shape = 's32[2]{0}', space=sflag, size = 0x8, scoped, tag = 'scoped memory for tpu_custom_call.1']
    #allocation5 [shape = 's32[2]{0}', space=sflag, size = 0x8, scoped, tag = 'scoped memory for tpu_custom_call.1']
    #allocation6 [shape = 'u8[131072]{0}', space=vmem, size = 0x20000, scoped, tag = 'input window, operand 1, single buffered']
    #allocation7 [shape = 's32[1]{0}', space=sflag, size = 0x4, scoped, tag = 'scoped memory for tpu_custom_call.1']
    #allocation8 [shape = 'u8[294912]{0}', space=vmem, size = 0x48000, scoped, tag = 'input window, operand 4, single buffered']
    #allocation9 [shape = 'u8[131072]{0}', space=vmem, size = 0x20000, scoped, tag = 'input window, operand 7, single buffered']
    #allocation10 [shape = 's32[1]{0}', space=sflag, size = 0x4, scoped, tag = 'scoped memory for tpu_custom_call.1']
    #allocation11 [shape = 'u8[1048576]{0}', space=vmem, size = 0x100000, scoped, tag = 'output window, operand 0']
    %15 = vsyncpa [#allocation4], 0
    %s16 = scalar_lea.sflag [#allocation4], 1
    %17 = vsyncpa %s16, 0
    %18 = vsyncpa [#allocation7], 0
    %19 = vsyncpa [#allocation10], 0
    %20 = vsyncpa [#allocation5], 0
    %s21 = scalar_lea.sflag [#allocation5], 1
    %22 = vsyncpa %s21, 0
    loop: start=0, step=1, limit=4
    $region2: #{tpu_custom_call.1} parent=1 // loop_pre_header
      _
    $region3: #{tpu_custom_call.1} parent=1 // loop_header
      %s24 = sphi 0, %s28
      %p25 = scmp.ge.s32.totalorder %s24, 4
      %s34 = sphi 0, %s36
      %s37 = sphi 0, %s34
      %s38 = sphi 0, %s37
      %s54 = sphi 0, %s38
      %s58 = sphi 0, %s58
      %s60 = sphi 0, %s58
      %s61 = sphi 0, %s60
      %s75 = sphi 0, %s61
      %s79 = sphi 0, %s79
      %s81 = sphi 0, %s79
      %s82 = sphi 0, %s81
      %s96 = sphi 0, %s82
      %s100 = sphi 0, %s100
      %s102 = sphi 0, %s100
      %s103 = sphi 0, %s102
      %s117 = sphi 0, %s103
      %s121 = sphi 0, %s121
      %s123 = sphi 0, %s121
      %s124 = sphi 0, %s123
      %s138 = sphi 0, %s124
      %s142 = sphi 0, %s142
      %s144 = sphi 0, %s142
      %s145 = sphi 0, %s144
      %s159 = sphi 0, %s145
      %s163 = sphi 0, %s163
      %s165 = sphi 0, %s163
      %s166 = sphi 0, %s165
      %s180 = sphi 0, %s166
      %s184 = sphi 0, %s184
      %s186 = sphi 0, %s184
      %s187 = sphi 0, %s186
      %s201 = sphi 0, %s187
      %s205 = sphi 0, %s205
      %s207 = sphi 0, %s205
      %s208 = sphi 0, %s207
      %s222 = sphi 0, %s208
      %s226 = sphi 0, %s226
      %s228 = sphi 0, %s226
      %s229 = sphi 0, %s228
      %s243 = sphi 0, %s229
      %s249 = sphi 0, %s251
      %s252 = sphi 0, %s249
      %s253 = sphi 0, %s252
      %s269 = sphi 0, %s253
    $region4: #{tpu_custom_call.1} parent=1 // loop_header_branch
      %27 = sbr.rel (%p25) target = $region8
    $region5: #{tpu_custom_call.1} parent=1 // loop_body
      %s29 = ssub.s32 %s24, 1
      %s30 = ssub.s32 %s24, 2
      %s31 = sadd.s32 %s24, 1
      %s32 = ssub.s32 %s24, %s31
      %p33 = scmp.eq.s32.totalorder %s32, 0
      %s35 = sadd.s32 %s34, 1
      %s36 = scalar_select %p33, %s34, %s35
      %p39 = pneg %p33
      %p40 = scmp.eq.s32.totalorder %s24, 1
      %p41 = por %p39, %p40
      %p42 = scmp.ne.s32.totalorder %s34, %s37
      %p43 = scmp.eq.s32.totalorder %s24, 0
      %p44 = por %p42, %p43
      %p45 = scmp.ne.s32.totalorder %s34, %s37
      %p46 = scmp.eq.s32.totalorder %s29, 1
      %p47 = por %p45, %p46
      %p48 = scmp.ne.s32.totalorder %s37, %s38
      %p49 = scmp.eq.s32.totalorder %s29, 0
      %p50 = por %p48, %p49
      %p51 = scmp.ne.s32.totalorder %s37, %s38
      %p52 = scmp.eq.s32.totalorder %s30, 1
      %p53 = por %p51, %p52
      %p55 = scmp.ne.s32.totalorder %s38, %s54
      %p56 = scmp.eq.s32.totalorder %s30, 0
      %p57 = por %p55, %p56
      %s59 = sadd.s32 %s58, 1
      %p62 = scmp.eq.s32.totalorder %s24, 1
      %p63 = scmp.ne.s32.totalorder %s58, %s60
      %p64 = scmp.eq.s32.totalorder %s24, 0
      %p65 = por %p63, %p64
      %p66 = scmp.ne.s32.totalorder %s58, %s60
      %p67 = scmp.eq.s32.totalorder %s29, 1
      %p68 = por %p66, %p67
      %p69 = scmp.ne.s32.totalorder %s60, %s61
      %p70 = scmp.eq.s32.totalorder %s29, 0
      %p71 = por %p69, %p70
      %p72 = scmp.ne.s32.totalorder %s60, %s61
      %p73 = scmp.eq.s32.totalorder %s30, 1
      %p74 = por %p72, %p73
      %p76 = scmp.ne.s32.totalorder %s61, %s75
      %p77 = scmp.eq.s32.totalorder %s30, 0
      %p78 = por %p76, %p77
      %s80 = sadd.s32 %s79, 1
      %p83 = scmp.eq.s32.totalorder %s24, 1
      %p84 = scmp.ne.s32.totalorder %s79, %s81
      %p85 = scmp.eq.s32.totalorder %s24, 0
      %p86 = por %p84, %p85
      %p87 = scmp.ne.s32.totalorder %s79, %s81
      %p88 = scmp.eq.s32.totalorder %s29, 1
      %p89 = por %p87, %p88
      %p90 = scmp.ne.s32.totalorder %s81, %s82
      %p91 = scmp.eq.s32.totalorder %s29, 0
      %p92 = por %p90, %p91
      %p93 = scmp.ne.s32.totalorder %s81, %s82
      %p94 = scmp.eq.s32.totalorder %s30, 1
      %p95 = por %p93, %p94
      %p97 = scmp.ne.s32.totalorder %s82, %s96
      %p98 = scmp.eq.s32.totalorder %s30, 0
      %p99 = por %p97, %p98
      %s101 = sadd.s32 %s100, 1
      %p104 = scmp.eq.s32.totalorder %s24, 1
      %p105 = scmp.ne.s32.totalorder %s100, %s102
      %p106 = scmp.eq.s32.totalorder %s24, 0
      %p107 = por %p105, %p106
      %p108 = scmp.ne.s32.totalorder %s100, %s102
      %p109 = scmp.eq.s32.totalorder %s29, 1
      %p110 = por %p108, %p109
      %p111 = scmp.ne.s32.totalorder %s102, %s103
      %p112 = scmp.eq.s32.totalorder %s29, 0
      %p113 = por %p111, %p112
      %p114 = scmp.ne.s32.totalorder %s102, %s103
      %p115 = scmp.eq.s32.totalorder %s30, 1
      %p116 = por %p114, %p115
      %p118 = scmp.ne.s32.totalorder %s103, %s117
      %p119 = scmp.eq.s32.totalorder %s30, 0
      %p120 = por %p118, %p119
      %s122 = sadd.s32 %s121, 1
      %p125 = scmp.eq.s32.totalorder %s24, 1
      %p126 = scmp.ne.s32.totalorder %s121, %s123
      %p127 = scmp.eq.s32.totalorder %s24, 0
      %p128 = por %p126, %p127
      %p129 = scmp.ne.s32.totalorder %s121, %s123
      %p130 = scmp.eq.s32.totalorder %s29, 1
      %p131 = por %p129, %p130
      %p132 = scmp.ne.s32.totalorder %s123, %s124
      %p133 = scmp.eq.s32.totalorder %s29, 0
      %p134 = por %p132, %p133
      %p135 = scmp.ne.s32.totalorder %s123, %s124
      %p136 = scmp.eq.s32.totalorder %s30, 1
      %p137 = por %p135, %p136
      %p139 = scmp.ne.s32.totalorder %s124, %s138
      %p140 = scmp.eq.s32.totalorder %s30, 0
      %p141 = por %p139, %p140
      %s143 = sadd.s32 %s142, 1
      %p146 = scmp.eq.s32.totalorder %s24, 1
      %p147 = scmp.ne.s32.totalorder %s142, %s144
      %p148 = scmp.eq.s32.totalorder %s24, 0
      %p149 = por %p147, %p148
      %p150 = scmp.ne.s32.totalorder %s142, %s144
      %p151 = scmp.eq.s32.totalorder %s29, 1
      %p152 = por %p150, %p151
      %p153 = scmp.ne.s32.totalorder %s144, %s145
      %p154 = scmp.eq.s32.totalorder %s29, 0
      %p155 = por %p153, %p154
      %p156 = scmp.ne.s32.totalorder %s144, %s145
      %p157 = scmp.eq.s32.totalorder %s30, 1
      %p158 = por %p156, %p157
      %p160 = scmp.ne.s32.totalorder %s145, %s159
      %p161 = scmp.eq.s32.totalorder %s30, 0
      %p162 = por %p160, %p161
      %s164 = sadd.s32 %s163, 1
      %p167 = scmp.eq.s32.totalorder %s24, 1
      %p168 = scmp.ne.s32.totalorder %s163, %s165
      %p169 = scmp.eq.s32.totalorder %s24, 0
      %p170 = por %p168, %p169
      %p171 = scmp.ne.s32.totalorder %s163, %s165
      %p172 = scmp.eq.s32.totalorder %s29, 1
      %p173 = por %p171, %p172
      %p174 = scmp.ne.s32.totalorder %s165, %s166
      %p175 = scmp.eq.s32.totalorder %s29, 0
      %p176 = por %p174, %p175
      %p177 = scmp.ne.s32.totalorder %s165, %s166
      %p178 = scmp.eq.s32.totalorder %s30, 1
      %p179 = por %p177, %p178
      %p181 = scmp.ne.s32.totalorder %s166, %s180
      %p182 = scmp.eq.s32.totalorder %s30, 0
      %p183 = por %p181, %p182
      %s185 = sadd.s32 %s184, 1
      %p188 = scmp.eq.s32.totalorder %s24, 1
      %p189 = scmp.ne.s32.totalorder %s184, %s186
      %p190 = scmp.eq.s32.totalorder %s24, 0
      %p191 = por %p189, %p190
      %p192 = scmp.ne.s32.totalorder %s184, %s186
      %p193 = scmp.eq.s32.totalorder %s29, 1
      %p194 = por %p192, %p193
      %p195 = scmp.ne.s32.totalorder %s186, %s187
      %p196 = scmp.eq.s32.totalorder %s29, 0
      %p197 = por %p195, %p196
      %p198 = scmp.ne.s32.totalorder %s186, %s187
      %p199 = scmp.eq.s32.totalorder %s30, 1
      %p200 = por %p198, %p199
      %p202 = scmp.ne.s32.totalorder %s187, %s201
      %p203 = scmp.eq.s32.totalorder %s30, 0
      %p204 = por %p202, %p203
      %s206 = sadd.s32 %s205, 1
      %p209 = scmp.eq.s32.totalorder %s24, 1
      %p210 = scmp.ne.s32.totalorder %s205, %s207
      %p211 = scmp.eq.s32.totalorder %s24, 0
      %p212 = por %p210, %p211
      %p213 = scmp.ne.s32.totalorder %s205, %s207
      %p214 = scmp.eq.s32.totalorder %s29, 1
      %p215 = por %p213, %p214
      %p216 = scmp.ne.s32.totalorder %s207, %s208
      %p217 = scmp.eq.s32.totalorder %s29, 0
      %p218 = por %p216, %p217
      %p219 = scmp.ne.s32.totalorder %s207, %s208
      %p220 = scmp.eq.s32.totalorder %s30, 1
      %p221 = por %p219, %p220
      %p223 = scmp.ne.s32.totalorder %s208, %s222
      %p224 = scmp.eq.s32.totalorder %s30, 0
      %p225 = por %p223, %p224
      %s227 = sadd.s32 %s226, 1
      %p230 = scmp.eq.s32.totalorder %s24, 1
      %p231 = scmp.ne.s32.totalorder %s226, %s228
      %p232 = scmp.eq.s32.totalorder %s24, 0
      %p233 = por %p231, %p232
      %p234 = scmp.ne.s32.totalorder %s226, %s228
      %p235 = scmp.eq.s32.totalorder %s29, 1
      %p236 = por %p234, %p235
      %p237 = scmp.ne.s32.totalorder %s228, %s229
      %p238 = scmp.eq.s32.totalorder %s29, 0
      %p239 = por %p237, %p238
      %p240 = scmp.ne.s32.totalorder %s228, %s229
      %p241 = scmp.eq.s32.totalorder %s30, 1
      %p242 = por %p240, %p241
      %p244 = scmp.ne.s32.totalorder %s229, %s243
      %p245 = scmp.eq.s32.totalorder %s30, 0
      %p246 = por %p244, %p245
      %s247 = ssub.s32 %s24, %s31
      %p248 = scmp.eq.s32.totalorder %s247, 0
      %s250 = sadd.s32 %s249, 1
      %s251 = scalar_select %p248, %s249, %s250
      %p254 = pneg %p248
      %p255 = scmp.eq.s32.totalorder %s24, 1
      %p256 = por %p254, %p255
      %p257 = scmp.ne.s32.totalorder %s249, %s252
      %p258 = scmp.eq.s32.totalorder %s24, 0
      %p259 = por %p257, %p258
      %p260 = scmp.ne.s32.totalorder %s249, %s252
      %p261 = scmp.eq.s32.totalorder %s29, 1
      %p262 = por %p260, %p261
      %p263 = scmp.ne.s32.totalorder %s252, %s253
      %p264 = scmp.eq.s32.totalorder %s29, 0
      %p265 = por %p263, %p264
      %p266 = scmp.ne.s32.totalorder %s252, %s253
      %p267 = scmp.eq.s32.totalorder %s30, 1
      %p268 = por %p266, %p267
      %p270 = scmp.ne.s32.totalorder %s253, %s269
      %p271 = scmp.eq.s32.totalorder %s30, 0
      %p272 = por %p270, %p271
      %p273 = scmp.le.s32.totalorder 1, %s24
      %p274 = scmp.lt.s32.totalorder %s24, 3
      %p275 = pnand %p273, %p274
      %p276 = pneg %p275
      // Predicated region
      $region9: #{tpu_custom_call.1} parent=5 // pred_check
        _
      $region10: #{tpu_custom_call.1} parent=5 // pred_check_branch
        %278 = sbr.rel (%p275) target = $region12
      $region11: #{tpu_custom_call.1} parent=5 // pred_region
        %s279 = ssub.s32 %s24, 1
        // Predicated region
        $region13: #{tpu_custom_call.1} parent=11 // pred_check
          %p280 = pneg %p71
        $region14: #{tpu_custom_call.1} parent=11 // pred_check_branch
          %282 = sbr.rel (%p280) target = $region16
        $region15: #{tpu_custom_call.1} parent=11 // pred_region
          %s284 = ssub.s32 4096, 4096
          %285 = vsyncadd [#allocation7], %s284
          %s286 = sshll.u32 [#allocation6], 4
          %s287 = int_to_ptr.vmem [resolvable:$true] %s286
          %292 = dma.hbm_to_vmem [thread:$0]  %s1, 4096, %s287, [#allocation7], 64, 64, 4
        $region16: #{tpu_custom_call.1} parent=11 // pred_fallthru
          _
        // Predicated region
        $region17: #{tpu_custom_call.1} parent=11 // pred_check
          %p293 = pneg %p92
        $region18: #{tpu_custom_call.1} parent=11 // pred_check_branch
          %295 = sbr.rel (%p293) target = $region20
        $region19: #{tpu_custom_call.1} parent=11 // pred_region
          _
        $region20: #{tpu_custom_call.1} parent=11 // pred_fallthru
          _
        // Predicated region
        $region21: #{tpu_custom_call.1} parent=11 // pred_check
          %p296 = pneg %p113
        $region22: #{tpu_custom_call.1} parent=11 // pred_check_branch
          %298 = sbr.rel (%p296) target = $region24
        $region23: #{tpu_custom_call.1} parent=11 // pred_region
          _
        $region24: #{tpu_custom_call.1} parent=11 // pred_fallthru
          _
        // Predicated region
        $region25: #{tpu_custom_call.1} parent=11 // pred_check
          %p299 = pneg %p134
        $region26: #{tpu_custom_call.1} parent=11 // pred_check_branch
          %301 = sbr.rel (%p299) target = $region28
        $region27: #{tpu_custom_call.1} parent=11 // pred_region
          %s303 = ssub.s32 9216, 9216
          %304 = vsyncadd [#allocation7], %s303
          %s305 = sshll.u32 [#allocation8], 4
          %s306 = int_to_ptr.vmem [resolvable:$true] %s305
          %311 = dma.hbm_to_vmem [thread:$0]  %s4, 9216, %s306, [#allocation7], 64, 64, 4
        $region28: #{tpu_custom_call.1} parent=11 // pred_fallthru
          _
        // Predicated region
        $region29: #{tpu_custom_call.1} parent=11 // pred_check
          %p312 = pneg %p155
        $region30: #{tpu_custom_call.1} parent=11 // pred_check_branch
          %314 = sbr.rel (%p312) target = $region32
        $region31: #{tpu_custom_call.1} parent=11 // pred_region
          _
        $region32: #{tpu_custom_call.1} parent=11 // pred_fallthru
          _
        // Predicated region
        $region33: #{tpu_custom_call.1} parent=11 // pred_check
          %p315 = pneg %p176
        $region34: #{tpu_custom_call.1} parent=11 // pred_check_branch
          %317 = sbr.rel (%p315) target = $region36
        $region35: #{tpu_custom_call.1} parent=11 // pred_region
          _
        $region36: #{tpu_custom_call.1} parent=11 // pred_fallthru
          _
        // Predicated region
        $region37: #{tpu_custom_call.1} parent=11 // pred_check
          %p318 = pneg %p197
        $region38: #{tpu_custom_call.1} parent=11 // pred_check_branch
          %320 = sbr.rel (%p318) target = $region40
        $region39: #{tpu_custom_call.1} parent=11 // pred_region
          %s322 = ssub.s32 4096, 4096
          %323 = vsyncadd [#allocation10], %s322
          %s324 = sshll.u32 [#allocation9], 4
          %s325 = int_to_ptr.vmem [resolvable:$true] %s324
          %330 = dma.hbm_to_vmem [thread:$0]  %s7, 4096, %s325, [#allocation10], 256, 256, 16
        $region40: #{tpu_custom_call.1} parent=11 // pred_fallthru
          _
        // Predicated region
        $region41: #{tpu_custom_call.1} parent=11 // pred_check
          %p331 = pneg %p218
        $region42: #{tpu_custom_call.1} parent=11 // pred_check_branch
          %333 = sbr.rel (%p331) target = $region44
        $region43: #{tpu_custom_call.1} parent=11 // pred_region
          _
        $region44: #{tpu_custom_call.1} parent=11 // pred_fallthru
          _
        // Predicated region
        $region45: #{tpu_custom_call.1} parent=11 // pred_check
          %p334 = pneg %p239
        $region46: #{tpu_custom_call.1} parent=11 // pred_check_branch
          %336 = sbr.rel (%p334) target = $region48
        $region47: #{tpu_custom_call.1} parent=11 // pred_region
          _
        $region48: #{tpu_custom_call.1} parent=11 // pred_fallthru
          _
      $region12: #{tpu_custom_call.1} parent=5 // pred_fallthru
        _
      %p337 = scmp.lt.s32.totalorder %s24, 2
      // Predicated region
      $region49: #{tpu_custom_call.1} parent=5 // pred_check
        %p338 = pneg %p337
      $region50: #{tpu_custom_call.1} parent=5 // pred_check_branch
        %340 = sbr.rel (%p338) target = $region52
      $region51: #{tpu_custom_call.1} parent=5 // pred_region
        // Predicated region
        $region53: #{tpu_custom_call.1} parent=51 // pred_check
          %p341 = pneg %p44
        $region54: #{tpu_custom_call.1} parent=51 // pred_check_branch
          %343 = sbr.rel (%p341) target = $region56
        $region55: #{tpu_custom_call.1} parent=51 // pred_region
          %s344 = sand.u32 %s34, 1
          %s345 = scalar_lea.sflag [#allocation4], %s344
          %s346 = sand.u32 %s34, 1
          %s347 = smul.addr %s346, 1024
          %s348 = scalar_lea.vmem [#allocation3], %s347
          %s350 = ssub.s32 16384, 16384
          %351 = vsyncadd %s345, %s350
          %s352 = smul.addr %s24, 128
          %s353 = smul.addr %s352, 128
          %s354 = scalar_lea.hbm %s0, %s353
          %s355 = sshll.u32 %s348, 4
          %s356 = int_to_ptr.vmem [resolvable:$true] %s355
          %361 = dma.hbm_to_vmem [thread:$0]  %s354, 16384, %s356, %s345, 512, 512, 32
        $region56: #{tpu_custom_call.1} parent=51 // pred_fallthru
          _
      $region52: #{tpu_custom_call.1} parent=5 // pred_fallthru
        _
      %p362 = scmp.le.s32.totalorder 1, %s24
      %p363 = scmp.lt.s32.totalorder %s24, 3
      %p364 = pnand %p362, %p363
      %p365 = pneg %p364
      // Predicated region
      $region57: #{tpu_custom_call.1} parent=5 // pred_check
        _
      $region58: #{tpu_custom_call.1} parent=5 // pred_check_branch
        %367 = sbr.rel (%p364) target = $region60
      $region59: #{tpu_custom_call.1} parent=5 // pred_region
        %s368 = ssub.s32 %s24, 1
        %s369 = sand.u32 %s37, 1
        %s370 = scalar_lea.sflag [#allocation4], %s369
        %s371 = sand.u32 %s37, 1
        %s372 = smul.addr %s371, 1024
        %s373 = scalar_lea.vmem [#allocation3], %s372
        // Predicated region
        $region61: #{tpu_custom_call.1} parent=59 // pred_check
          %p374 = pneg %p50
        $region62: #{tpu_custom_call.1} parent=59 // pred_check_branch
          %376 = sbr.rel (%p374) target = $region64
        $region63: #{tpu_custom_call.1} parent=59 // pred_region
          %377 = dma.done %s370, 16384
        $region64: #{tpu_custom_call.1} parent=59 // pred_fallthru
          _
        // Predicated region
        $region65: #{tpu_custom_call.1} parent=59 // pred_check
          %p378 = pneg %p71
        $region66: #{tpu_custom_call.1} parent=59 // pred_check_branch
          %380 = sbr.rel (%p378) target = $region68
        $region67: #{tpu_custom_call.1} parent=59 // pred_region
          %381 = dma.done [#allocation7], 4096
        $region68: #{tpu_custom_call.1} parent=59 // pred_fallthru
          _
        // Predicated region
        $region69: #{tpu_custom_call.1} parent=59 // pred_check
          %p382 = pneg %p134
        $region70: #{tpu_custom_call.1} parent=59 // pred_check_branch
          %384 = sbr.rel (%p382) target = $region72
        $region71: #{tpu_custom_call.1} parent=59 // pred_region
          %385 = dma.done [#allocation7], 9216
        $region72: #{tpu_custom_call.1} parent=59 // pred_fallthru
          _
        // Predicated region
        $region73: #{tpu_custom_call.1} parent=59 // pred_check
          %p386 = pneg %p197
        $region74: #{tpu_custom_call.1} parent=59 // pred_check_branch
          %388 = sbr.rel (%p386) target = $region76
        $region75: #{tpu_custom_call.1} parent=59 // pred_region
          %389 = dma.done [#allocation10], 4096
        $region76: #{tpu_custom_call.1} parent=59 // pred_fallthru
          _
        %s390 = sand.u32 %s37, 1
        %s391 = scalar_lea.sflag [#allocation4], %s390
        %s392 = sand.u32 %s37, 1
        %s393 = smul.addr %s392, 1024
        %s394 = scalar_lea.vmem [#allocation3], %s393
        %p395 = pneg %p50
        %p396 = pneg %p47
        %p397 = pneg %p71
        %p398 = pneg %p68
        %p399 = pneg %p92
        %p400 = pneg %p89
        %p401 = pneg %p113
        %p402 = pneg %p110
        %p403 = pneg %p134
        %p404 = pneg %p131
        %p405 = pneg %p155
        %p406 = pneg %p152
        %p407 = pneg %p176
        %p408 = pneg %p173
        %p409 = pneg %p197
        %p410 = pneg %p194
        %p411 = pneg %p218
        %p412 = pneg %p215
        %p413 = pneg %p239
        %p414 = pneg %p236
        %p415 = pneg %p265
        %p416 = pneg %p262
        %s417 = sand.u32 %s252, 1
        %s418 = scalar_lea.sflag [#allocation5], %s417
        %s419 = sand.u32 %s252, 1
        %s420 = smul.addr %s419, 1024
        %s421 = scalar_lea.vmem [#allocation11], %s420
        %v423 = vld [vmem:[%s373] sm:$0xff]
        %v424 = vld [vmem:[%s373 + $0x8] sm:$0xff]
        %v425 = vld [vmem:[%s373 + $0x10] sm:$0xff]
        %v426 = vld [vmem:[%s373 + $0x18] sm:$0xff]
        %v427 = vld [vmem:[%s373 + $0x20] sm:$0xff]
        %v428 = vld [vmem:[%s373 + $0x28] sm:$0xff]
        %v429 = vld [vmem:[%s373 + $0x30] sm:$0xff]
        %v430 = vld [vmem:[%s373 + $0x38] sm:$0xff]
        %v431 = vld [vmem:[%s373 + $0x40] sm:$0xff]
        %v432 = vld [vmem:[%s373 + $0x48] sm:$0xff]
        %v433 = vld [vmem:[%s373 + $0x50] sm:$0xff]
        %v434 = vld [vmem:[%s373 + $0x58] sm:$0xff]
        %v435 = vld [vmem:[%s373 + $0x60] sm:$0xff]
        %v436 = vld [vmem:[%s373 + $0x68] sm:$0xff]
        %v437 = vld [vmem:[%s373 + $0x70] sm:$0xff]
        %v438 = vld [vmem:[%s373 + $0x78] sm:$0xff]
        %v439 = vld [vmem:[%s373 + $0x80] sm:$0xff]
        %v440 = vld [vmem:[%s373 + $0x88] sm:$0xff]
        %v441 = vld [vmem:[%s373 + $0x90] sm:$0xff]
        %v442 = vld [vmem:[%s373 + $0x98] sm:$0xff]
        %v443 = vld [vmem:[%s373 + $0xa0] sm:$0xff]
        %v444 = vld [vmem:[%s373 + $0xa8] sm:$0xff]
        %v445 = vld [vmem:[%s373 + $0xb0] sm:$0xff]
        %v446 = vld [vmem:[%s373 + $0xb8] sm:$0xff]
        %v447 = vld [vmem:[%s373 + $0xc0] sm:$0xff]
        %v448 = vld [vmem:[%s373 + $0xc8] sm:$0xff]
        %v449 = vld [vmem:[%s373 + $0xd0] sm:$0xff]
        %v450 = vld [vmem:[%s373 + $0xd8] sm:$0xff]
        %v451 = vld [vmem:[%s373 + $0xe0] sm:$0xff]
        %v452 = vld [vmem:[%s373 + $0xe8] sm:$0xff]
        %v453 = vld [vmem:[%s373 + $0xf0] sm:$0xff]
        %v454 = vld [vmem:[%s373 + $0xf8] sm:$0xff]
        %v455 = vld [vmem:[%s373 + $0x100] sm:$0xff]
        %v456 = vld [vmem:[%s373 + $0x108] sm:$0xff]
        %v457 = vld [vmem:[%s373 + $0x110] sm:$0xff]
        %v458 = vld [vmem:[%s373 + $0x118] sm:$0xff]
        %v459 = vld [vmem:[%s373 + $0x120] sm:$0xff]
        %v460 = vld [vmem:[%s373 + $0x128] sm:$0xff]
        %v461 = vld [vmem:[%s373 + $0x130] sm:$0xff]
        %v462 = vld [vmem:[%s373 + $0x138] sm:$0xff]
        %v463 = vld [vmem:[%s373 + $0x140] sm:$0xff]
        %v464 = vld [vmem:[%s373 + $0x148] sm:$0xff]
        %v465 = vld [vmem:[%s373 + $0x150] sm:$0xff]
        %v466 = vld [vmem:[%s373 + $0x158] sm:$0xff]
        %v467 = vld [vmem:[%s373 + $0x160] sm:$0xff]
        %v468 = vld [vmem:[%s373 + $0x168] sm:$0xff]
        %v469 = vld [vmem:[%s373 + $0x170] sm:$0xff]
        %v470 = vld [vmem:[%s373 + $0x178] sm:$0xff]
        %v471 = vld [vmem:[%s373 + $0x180] sm:$0xff]
        %v472 = vld [vmem:[%s373 + $0x188] sm:$0xff]
        %v473 = vld [vmem:[%s373 + $0x190] sm:$0xff]
        %v474 = vld [vmem:[%s373 + $0x198] sm:$0xff]
        %v475 = vld [vmem:[%s373 + $0x1a0] sm:$0xff]
        %v476 = vld [vmem:[%s373 + $0x1a8] sm:$0xff]
        %v477 = vld [vmem:[%s373 + $0x1b0] sm:$0xff]
        %v478 = vld [vmem:[%s373 + $0x1b8] sm:$0xff]
        %v479 = vld [vmem:[%s373 + $0x1c0] sm:$0xff]
        %v480 = vld [vmem:[%s373 + $0x1c8] sm:$0xff]
        %v481 = vld [vmem:[%s373 + $0x1d0] sm:$0xff]
        %v482 = vld [vmem:[%s373 + $0x1d8] sm:$0xff]
        %v483 = vld [vmem:[%s373 + $0x1e0] sm:$0xff]
        %v484 = vld [vmem:[%s373 + $0x1e8] sm:$0xff]
        %v485 = vld [vmem:[%s373 + $0x1f0] sm:$0xff]
        %v486 = vld [vmem:[%s373 + $0x1f8] sm:$0xff]
        %v487 = vld [vmem:[%s373 + $0x200] sm:$0xff]
        %v488 = vld [vmem:[%s373 + $0x208] sm:$0xff]
        %v489 = vld [vmem:[%s373 + $0x210] sm:$0xff]
        %v490 = vld [vmem:[%s373 + $0x218] sm:$0xff]
        %v491 = vld [vmem:[%s373 + $0x220] sm:$0xff]
        %v492 = vld [vmem:[%s373 + $0x228] sm:$0xff]
        %v493 = vld [vmem:[%s373 + $0x230] sm:$0xff]
        %v494 = vld [vmem:[%s373 + $0x238] sm:$0xff]
        %v495 = vld [vmem:[%s373 + $0x240] sm:$0xff]
        %v496 = vld [vmem:[%s373 + $0x248] sm:$0xff]
        %v497 = vld [vmem:[%s373 + $0x250] sm:$0xff]
        %v498 = vld [vmem:[%s373 + $0x258] sm:$0xff]
        %v499 = vld [vmem:[%s373 + $0x260] sm:$0xff]
        %v500 = vld [vmem:[%s373 + $0x268] sm:$0xff]
        %v501 = vld [vmem:[%s373 + $0x270] sm:$0xff]
        %v502 = vld [vmem:[%s373 + $0x278] sm:$0xff]
        %v503 = vld [vmem:[%s373 + $0x280] sm:$0xff]
        %v504 = vld [vmem:[%s373 + $0x288] sm:$0xff]
        %v505 = vld [vmem:[%s373 + $0x290] sm:$0xff]
        %v506 = vld [vmem:[%s373 + $0x298] sm:$0xff]
        %v507 = vld [vmem:[%s373 + $0x2a0] sm:$0xff]
        %v508 = vld [vmem:[%s373 + $0x2a8] sm:$0xff]
        %v509 = vld [vmem:[%s373 + $0x2b0] sm:$0xff]
        %v510 = vld [vmem:[%s373 + $0x2b8] sm:$0xff]
        %v511 = vld [vmem:[%s373 + $0x2c0] sm:$0xff]
        %v512 = vld [vmem:[%s373 + $0x2c8] sm:$0xff]
        %v513 = vld [vmem:[%s373 + $0x2d0] sm:$0xff]
        %v514 = vld [vmem:[%s373 + $0x2d8] sm:$0xff]
        %v515 = vld [vmem:[%s373 + $0x2e0] sm:$0xff]
        %v516 = vld [vmem:[%s373 + $0x2e8] sm:$0xff]
        %v517 = vld [vmem:[%s373 + $0x2f0] sm:$0xff]
        %v518 = vld [vmem:[%s373 + $0x2f8] sm:$0xff]
        %v519 = vld [vmem:[%s373 + $0x300] sm:$0xff]
        %v520 = vld [vmem:[%s373 + $0x308] sm:$0xff]
        %v521 = vld [vmem:[%s373 + $0x310] sm:$0xff]
        %v522 = vld [vmem:[%s373 + $0x318] sm:$0xff]
        %v523 = vld [vmem:[%s373 + $0x320] sm:$0xff]
        %v524 = vld [vmem:[%s373 + $0x328] sm:$0xff]
        %v525 = vld [vmem:[%s373 + $0x330] sm:$0xff]
        %v526 = vld [vmem:[%s373 + $0x338] sm:$0xff]
        %v527 = vld [vmem:[%s373 + $0x340] sm:$0xff]
        %v528 = vld [vmem:[%s373 + $0x348] sm:$0xff]
        %v529 = vld [vmem:[%s373 + $0x350] sm:$0xff]
        %v530 = vld [vmem:[%s373 + $0x358] sm:$0xff]
        %v531 = vld [vmem:[%s373 + $0x360] sm:$0xff]
        %v532 = vld [vmem:[%s373 + $0x368] sm:$0xff]
        %v533 = vld [vmem:[%s373 + $0x370] sm:$0xff]
        %v534 = vld [vmem:[%s373 + $0x378] sm:$0xff]
        %v535 = vld [vmem:[%s373 + $0x380] sm:$0xff]
        %v536 = vld [vmem:[%s373 + $0x388] sm:$0xff]
        %v537 = vld [vmem:[%s373 + $0x390] sm:$0xff]
        %v538 = vld [vmem:[%s373 + $0x398] sm:$0xff]
        %v539 = vld [vmem:[%s373 + $0x3a0] sm:$0xff]
        %v540 = vld [vmem:[%s373 + $0x3a8] sm:$0xff]
        %v541 = vld [vmem:[%s373 + $0x3b0] sm:$0xff]
        %v542 = vld [vmem:[%s373 + $0x3b8] sm:$0xff]
        %v543 = vld [vmem:[%s373 + $0x3c0] sm:$0xff]
        %v544 = vld [vmem:[%s373 + $0x3c8] sm:$0xff]
        %v545 = vld [vmem:[%s373 + $0x3d0] sm:$0xff]
        %v546 = vld [vmem:[%s373 + $0x3d8] sm:$0xff]
        %v547 = vld [vmem:[%s373 + $0x3e0] sm:$0xff]
        %v548 = vld [vmem:[%s373 + $0x3e8] sm:$0xff]
        %v549 = vld [vmem:[%s373 + $0x3f0] sm:$0xff]
        %v550 = vld [vmem:[%s373 + $0x3f8] sm:$0xff]
        %v551 = vpack.c.bf16 %v427, %v423
        %v552 = vpack.c.bf16 %v428, %v424
        %v553 = vpack.c.bf16 %v429, %v425
        %v554 = vpack.c.bf16 %v430, %v426
        %v555 = vpack.c.bf16 %v435, %v431
        %v556 = vpack.c.bf16 %v436, %v432
        %v557 = vpack.c.bf16 %v437, %v433
        %v558 = vpack.c.bf16 %v438, %v434
        %v559 = vpack.c.bf16 %v443, %v439
        %v560 = vpack.c.bf16 %v444, %v440
        %v561 = vpack.c.bf16 %v445, %v441
        %v562 = vpack.c.bf16 %v446, %v442
        %v563 = vpack.c.bf16 %v451, %v447
        %v564 = vpack.c.bf16 %v452, %v448
        %v565 = vpack.c.bf16 %v453, %v449
        %v566 = vpack.c.bf16 %v454, %v450
        %v567 = vpack.c.bf16 %v459, %v455
        %v568 = vpack.c.bf16 %v460, %v456
        %v569 = vpack.c.bf16 %v461, %v457
        %v570 = vpack.c.bf16 %v462, %v458
        %v571 = vpack.c.bf16 %v467, %v463
        %v572 = vpack.c.bf16 %v468, %v464
        %v573 = vpack.c.bf16 %v469, %v465
        %v574 = vpack.c.bf16 %v470, %v466
        %v575 = vpack.c.bf16 %v475, %v471
        %v576 = vpack.c.bf16 %v476, %v472
        %v577 = vpack.c.bf16 %v477, %v473
        %v578 = vpack.c.bf16 %v478, %v474
        %v579 = vpack.c.bf16 %v483, %v479
        %v580 = vpack.c.bf16 %v484, %v480
        %v581 = vpack.c.bf16 %v485, %v481
        %v582 = vpack.c.bf16 %v486, %v482
        %v583 = vpack.c.bf16 %v491, %v487
        %v584 = vpack.c.bf16 %v492, %v488
        %v585 = vpack.c.bf16 %v493, %v489
        %v586 = vpack.c.bf16 %v494, %v490
        %v587 = vpack.c.bf16 %v499, %v495
        %v588 = vpack.c.bf16 %v500, %v496
        %v589 = vpack.c.bf16 %v501, %v497
        %v590 = vpack.c.bf16 %v502, %v498
        %v591 = vpack.c.bf16 %v507, %v503
        %v592 = vpack.c.bf16 %v508, %v504
        %v593 = vpack.c.bf16 %v509, %v505
        %v594 = vpack.c.bf16 %v510, %v506
        %v595 = vpack.c.bf16 %v515, %v511
        %v596 = vpack.c.bf16 %v516, %v512
        %v597 = vpack.c.bf16 %v517, %v513
        %v598 = vpack.c.bf16 %v518, %v514
        %v599 = vpack.c.bf16 %v523, %v519
        %v600 = vpack.c.bf16 %v524, %v520
        %v601 = vpack.c.bf16 %v525, %v521
        %v602 = vpack.c.bf16 %v526, %v522
        %v603 = vpack.c.bf16 %v531, %v527
        %v604 = vpack.c.bf16 %v532, %v528
        %v605 = vpack.c.bf16 %v533, %v529
        %v606 = vpack.c.bf16 %v534, %v530
        %v607 = vpack.c.bf16 %v539, %v535
        %v608 = vpack.c.bf16 %v540, %v536
        %v609 = vpack.c.bf16 %v541, %v537
        %v610 = vpack.c.bf16 %v542, %v538
        %v611 = vpack.c.bf16 %v547, %v543
        %v612 = vpack.c.bf16 %v548, %v544
        %v613 = vpack.c.bf16 %v549, %v545
        %v614 = vpack.c.bf16 %v550, %v546
        %v615 = vld [vmem:[#allocation6] sm:$0xf]
        %v616 = vld [vmem:[#allocation6 + $0x4] sm:$0xf]
        %v617 = vld [vmem:[#allocation6 + $0x8] sm:$0xf]
        %v618 = vld [vmem:[#allocation6 + $0xc] sm:$0xf]
        %v619 = vld [vmem:[#allocation6 + $0x10] sm:$0xf]
        %v620 = vld [vmem:[#allocation6 + $0x14] sm:$0xf]
        %v621 = vld [vmem:[#allocation6 + $0x18] sm:$0xf]
        %v622 = vld [vmem:[#allocation6 + $0x1c] sm:$0xf]
        %v623 = vld [vmem:[#allocation6 + $0x20] sm:$0xf]
        %v624 = vld [vmem:[#allocation6 + $0x24] sm:$0xf]
        %v625 = vld [vmem:[#allocation6 + $0x28] sm:$0xf]
        %v626 = vld [vmem:[#allocation6 + $0x2c] sm:$0xf]
        %v627 = vld [vmem:[#allocation6 + $0x30] sm:$0xf]
        %v628 = vld [vmem:[#allocation6 + $0x34] sm:$0xf]
        %v629 = vld [vmem:[#allocation6 + $0x38] sm:$0xf]
        %v630 = vld [vmem:[#allocation6 + $0x3c] sm:$0xf]
        %v631 = vld [vmem:[#allocation6 + $0x40] sm:$0xf]
        %v632 = vld [vmem:[#allocation6 + $0x44] sm:$0xf]
        %v633 = vld [vmem:[#allocation6 + $0x48] sm:$0xf]
        %v634 = vld [vmem:[#allocation6 + $0x4c] sm:$0xf]
        %v635 = vld [vmem:[#allocation6 + $0x50] sm:$0xf]
        %v636 = vld [vmem:[#allocation6 + $0x54] sm:$0xf]
        %v637 = vld [vmem:[#allocation6 + $0x58] sm:$0xf]
        %v638 = vld [vmem:[#allocation6 + $0x5c] sm:$0xf]
        %v639 = vld [vmem:[#allocation6 + $0x60] sm:$0xf]
        %v640 = vld [vmem:[#allocation6 + $0x64] sm:$0xf]
        %v641 = vld [vmem:[#allocation6 + $0x68] sm:$0xf]
        %v642 = vld [vmem:[#allocation6 + $0x6c] sm:$0xf]
        %v643 = vld [vmem:[#allocation6 + $0x70] sm:$0xf]
        %v644 = vld [vmem:[#allocation6 + $0x74] sm:$0xf]
        %v645 = vld [vmem:[#allocation6 + $0x78] sm:$0xf]
        %v646 = vld [vmem:[#allocation6 + $0x7c] sm:$0xf]
        %v647 = vld [vmem:[#allocation6 + $0x80] sm:$0xf]
        %v648 = vld [vmem:[#allocation6 + $0x84] sm:$0xf]
        %v649 = vld [vmem:[#allocation6 + $0x88] sm:$0xf]
        %v650 = vld [vmem:[#allocation6 + $0x8c] sm:$0xf]
        %v651 = vld [vmem:[#allocation6 + $0x90] sm:$0xf]
        %v652 = vld [vmem:[#allocation6 + $0x94] sm:$0xf]
        %v653 = vld [vmem:[#allocation6 + $0x98] sm:$0xf]
        %v654 = vld [vmem:[#allocation6 + $0x9c] sm:$0xf]
        %v655 = vld [vmem:[#allocation6 + $0xa0] sm:$0xf]
        %v656 = vld [vmem:[#allocation6 + $0xa4] sm:$0xf]
        %v657 = vld [vmem:[#allocation6 + $0xa8] sm:$0xf]
        %v658 = vld [vmem:[#allocation6 + $0xac] sm:$0xf]
        %v659 = vld [vmem:[#allocation6 + $0xb0] sm:$0xf]
        %v660 = vld [vmem:[#allocation6 + $0xb4] sm:$0xf]
        %v661 = vld [vmem:[#allocation6 + $0xb8] sm:$0xf]
        %v662 = vld [vmem:[#allocation6 + $0xbc] sm:$0xf]
        %v663 = vld [vmem:[#allocation6 + $0xc0] sm:$0xf]
        %v664 = vld [vmem:[#allocation6 + $0xc4] sm:$0xf]
        %v665 = vld [vmem:[#allocation6 + $0xc8] sm:$0xf]
        %v666 = vld [vmem:[#allocation6 + $0xcc] sm:$0xf]
        %v667 = vld [vmem:[#allocation6 + $0xd0] sm:$0xf]
        %v668 = vld [vmem:[#allocation6 + $0xd4] sm:$0xf]
        %v669 = vld [vmem:[#allocation6 + $0xd8] sm:$0xf]
        %v670 = vld [vmem:[#allocation6 + $0xdc] sm:$0xf]
        %v671 = vld [vmem:[#allocation6 + $0xe0] sm:$0xf]
        %v672 = vld [vmem:[#allocation6 + $0xe4] sm:$0xf]
        %v673 = vld [vmem:[#allocation6 + $0xe8] sm:$0xf]
        %v674 = vld [vmem:[#allocation6 + $0xec] sm:$0xf]
        %v675 = vld [vmem:[#allocation6 + $0xf0] sm:$0xf]
        %v676 = vld [vmem:[#allocation6 + $0xf4] sm:$0xf]
        %v677 = vld [vmem:[#allocation6 + $0xf8] sm:$0xf]
        %v678 = vld [vmem:[#allocation6 + $0xfc] sm:$0xf]
        %v743 = vunpack.c.l.b16 %v615
        %v744 = vunpack.c.l.b16 %v616
        %v745 = vunpack.c.l.b16 %v617
        %v746 = vunpack.c.l.b16 %v618
        %v747 = vunpack.c.l.b16 %v619
        %v748 = vunpack.c.l.b16 %v620
        %v749 = vunpack.c.l.b16 %v621
        %v750 = vunpack.c.l.b16 %v622
        %v751 = vunpack.c.l.b16 %v623
        %v752 = vunpack.c.l.b16 %v624
        %v753 = vunpack.c.l.b16 %v625
        %v754 = vunpack.c.l.b16 %v626
        %v755 = vunpack.c.l.b16 %v627
        %v756 = vunpack.c.l.b16 %v628
        %v757 = vunpack.c.l.b16 %v629
        %v758 = vunpack.c.l.b16 %v630
        %v759 = vunpack.c.l.b16 %v631
        %v760 = vunpack.c.l.b16 %v632
        %v761 = vunpack.c.l.b16 %v633
        %v762 = vunpack.c.l.b16 %v634
        %v763 = vunpack.c.l.b16 %v635
        %v764 = vunpack.c.l.b16 %v636
        %v765 = vunpack.c.l.b16 %v637
        %v766 = vunpack.c.l.b16 %v638
        %v767 = vunpack.c.l.b16 %v639
        %v768 = vunpack.c.l.b16 %v640
        %v769 = vunpack.c.l.b16 %v641
        %v770 = vunpack.c.l.b16 %v642
        %v771 = vunpack.c.l.b16 %v643
        %v772 = vunpack.c.l.b16 %v644
        %v773 = vunpack.c.l.b16 %v645
        %v774 = vunpack.c.l.b16 %v646
        %v775 = vunpack.c.l.b16 %v647
        %v776 = vunpack.c.l.b16 %v648
        %v777 = vunpack.c.l.b16 %v649
        %v778 = vunpack.c.l.b16 %v650
        %v779 = vunpack.c.l.b16 %v651
        %v780 = vunpack.c.l.b16 %v652
        %v781 = vunpack.c.l.b16 %v653
        %v782 = vunpack.c.l.b16 %v654
        %v783 = vunpack.c.l.b16 %v655
        %v784 = vunpack.c.l.b16 %v656
        %v785 = vunpack.c.l.b16 %v657
        %v786 = vunpack.c.l.b16 %v658
        %v787 = vunpack.c.l.b16 %v659
        %v788 = vunpack.c.l.b16 %v660
        %v789 = vunpack.c.l.b16 %v661
        %v790 = vunpack.c.l.b16 %v662
        %v791 = vunpack.c.l.b16 %v663
        %v792 = vunpack.c.l.b16 %v664
        %v793 = vunpack.c.l.b16 %v665
        %v794 = vunpack.c.l.b16 %v666
        %v795 = vunpack.c.l.b16 %v667
        %v796 = vunpack.c.l.b16 %v668
        %v797 = vunpack.c.l.b16 %v669
        %v798 = vunpack.c.l.b16 %v670
        %v799 = vunpack.c.l.b16 %v671
        %v800 = vunpack.c.l.b16 %v672
        %v801 = vunpack.c.l.b16 %v673
        %v802 = vunpack.c.l.b16 %v674
        %v803 = vunpack.c.l.b16 %v675
        %v804 = vunpack.c.l.b16 %v676
        %v805 = vunpack.c.l.b16 %v677
        %v806 = vunpack.c.l.b16 %v678
        %v807 = vpack.c.b16 %v744, %v743
        %v808 = vpack.c.b16 %v746, %v745
        %v809 = vpack.c.b16 %v748, %v747
        %v810 = vpack.c.b16 %v750, %v749
        %v811 = vpack.c.b16 %v752, %v751
        %v812 = vpack.c.b16 %v754, %v753
        %v813 = vpack.c.b16 %v756, %v755
        %v814 = vpack.c.b16 %v758, %v757
        %v815 = vpack.c.b16 %v760, %v759
        %v816 = vpack.c.b16 %v762, %v761
        %v817 = vpack.c.b16 %v764, %v763
        %v818 = vpack.c.b16 %v766, %v765
        %v819 = vpack.c.b16 %v768, %v767
        %v820 = vpack.c.b16 %v770, %v769
        %v821 = vpack.c.b16 %v772, %v771
        %v822 = vpack.c.b16 %v774, %v773
        %v823 = vpack.c.b16 %v776, %v775
        %v824 = vpack.c.b16 %v778, %v777
        %v825 = vpack.c.b16 %v780, %v779
        %v826 = vpack.c.b16 %v782, %v781
        %v827 = vpack.c.b16 %v784, %v783
        %v828 = vpack.c.b16 %v786, %v785
        %v829 = vpack.c.b16 %v788, %v787
        %v830 = vpack.c.b16 %v790, %v789
        %v831 = vpack.c.b16 %v792, %v791
        %v832 = vpack.c.b16 %v794, %v793
        %v833 = vpack.c.b16 %v796, %v795
        %v834 = vpack.c.b16 %v798, %v797
        %v835 = vpack.c.b16 %v800, %v799
        %v836 = vpack.c.b16 %v802, %v801
        %v837 = vpack.c.b16 %v804, %v803
        %v838 = vpack.c.b16 %v806, %v805
        %871 = vmatprep.subr.bf16.mxu0 0
        %872 = vmatpush1.bf16.msra.mxu0 %v807
        %873 = vmatprep.subr.bf16.mxu0 0
        %874 = vmatpush1.bf16.msra.mxu0 %v808
        %875 = vmatprep.subr.bf16.mxu0 0
        %876 = vmatpush1.bf16.msra.mxu0 %v809
        %877 = vmatprep.subr.bf16.mxu0 0
        %878 = vmatpush1.bf16.msra.mxu0 %v810
        %879 = vmatprep.subr.bf16.mxu0 0
        %880 = vmatpush1.bf16.msra.mxu0 %v811
        %881 = vmatprep.subr.bf16.mxu0 0
        %882 = vmatpush1.bf16.msra.mxu0 %v812
        %883 = vmatprep.subr.bf16.mxu0 0
        %884 = vmatpush1.bf16.msra.mxu0 %v813
        %885 = vmatprep.subr.bf16.mxu0 0
        %886 = vmatpush1.bf16.msra.mxu0 %v814
        %887 = vmatprep.subr.bf16.mxu0 0
        %888 = vmatpush1.bf16.msra.mxu0 %v815
        %889 = vmatprep.subr.bf16.mxu0 0
        %890 = vmatpush1.bf16.msra.mxu0 %v816
        %891 = vmatprep.subr.bf16.mxu0 0
        %892 = vmatpush1.bf16.msra.mxu0 %v817
        %893 = vmatprep.subr.bf16.mxu0 0
        %894 = vmatpush1.bf16.msra.mxu0 %v818
        %895 = vmatprep.subr.bf16.mxu0 0
        %896 = vmatpush1.bf16.msra.mxu0 %v819
        %897 = vmatprep.subr.bf16.mxu0 0
        %898 = vmatpush1.bf16.msra.mxu0 %v820
        %899 = vmatprep.subr.bf16.mxu0 0
        %900 = vmatpush1.bf16.msra.mxu0 %v821
        %901 = vmatprep.subr.bf16.mxu0 0
        %902 = vmatpush1.bf16.msra.mxu0 %v822
        %903 = vmatprep.mubr.bf16.mxu0 %v552
        %904 = vmatmul.mubr.bf16.gmra.mrb[0].mxu0 %v551
        %v905 = vpop.f32.mrb[0].mxu0
        %v906 = vadd.f32 0.0, %v905
        %v907 = vpop.f32.mrb[0].mxu0
        %v908 = vpop.f32.mrb[0].mxu0
        %v909 = vadd.f32 0.0, %v908
        %v910 = vpop.f32.mrb[0].mxu0
        %911 = vmatprep.mubr.bf16.mxu0 %v556
        %912 = vmatmul.mubr.bf16.gmra.mrb[0].mxu0 %v555
        %v913 = vpop.f32.mrb[0].mxu0
        %v914 = vadd.f32 0.0, %v913
        %v915 = vpop.f32.mrb[0].mxu0
        %v916 = vpop.f32.mrb[0].mxu0
        %v917 = vadd.f32 0.0, %v916
        %v918 = vpop.f32.mrb[0].mxu0
        %919 = vmatprep.mubr.bf16.mxu0 %v560
        %920 = vmatmul.mubr.bf16.gmra.mrb[0].mxu0 %v559
        %v921 = vpop.f32.mrb[0].mxu0
        %v922 = vadd.f32 0.0, %v921
        %v923 = vpop.f32.mrb[0].mxu0
        %v924 = vpop.f32.mrb[0].mxu0
        %v925 = vadd.f32 0.0, %v924
        %v926 = vpop.f32.mrb[0].mxu0
        %927 = vmatprep.mubr.bf16.mxu0 %v564
        %928 = vmatmul.mubr.bf16.gmra.mrb[0].mxu0 %v563
        %v929 = vpop.f32.mrb[0].mxu0
        %v930 = vadd.f32 0.0, %v929
        %v931 = vpop.f32.mrb[0].mxu0
        %v932 = vpop.f32.mrb[0].mxu0
        %v933 = vadd.f32 0.0, %v932
        %v934 = vpop.f32.mrb[0].mxu0
        %935 = vmatprep.mubr.bf16.mxu0 %v568
        %936 = vmatmul.mubr.bf16.gmra.mrb[0].mxu0 %v567
        %v937 = vpop.f32.mrb[0].mxu0
        %v938 = vadd.f32 0.0, %v937
        %v939 = vpop.f32.mrb[0].mxu0
        %v940 = vpop.f32.mrb[0].mxu0
        %v941 = vadd.f32 0.0, %v940
        %v942 = vpop.f32.mrb[0].mxu0
        %943 = vmatprep.mubr.bf16.mxu0 %v572
        %944 = vmatmul.mubr.bf16.gmra.mrb[0].mxu0 %v571
        %v945 = vpop.f32.mrb[0].mxu0
        %v946 = vadd.f32 0.0, %v945
        %v947 = vpop.f32.mrb[0].mxu0
        %v948 = vpop.f32.mrb[0].mxu0
        %v949 = vadd.f32 0.0, %v948
        %v950 = vpop.f32.mrb[0].mxu0
        %951 = vmatprep.mubr.bf16.mxu0 %v576
        %952 = vmatmul.mubr.bf16.gmra.mrb[0].mxu0 %v575
        %v953 = vpop.f32.mrb[0].mxu0
        %v954 = vadd.f32 0.0, %v953
        %v955 = vpop.f32.mrb[0].mxu0
        %v956 = vpop.f32.mrb[0].mxu0
        %v957 = vadd.f32 0.0, %v956
        %v958 = vpop.f32.mrb[0].mxu0
        %959 = vmatprep.mubr.bf16.mxu0 %v580
        %960 = vmatmul.mubr.bf16.gmra.mrb[0].mxu0 %v579
        %v961 = vpop.f32.mrb[0].mxu0
        %v962 = vadd.f32 0.0, %v961
        %v963 = vpop.f32.mrb[0].mxu0
        %v964 = vpop.f32.mrb[0].mxu0
        %v965 = vadd.f32 0.0, %v964
        %v966 = vpop.f32.mrb[0].mxu0
        %967 = vmatprep.mubr.bf16.mxu0 %v584
        %968 = vmatmul.mubr.bf16.gmra.mrb[0].mxu0 %v583
        %v969 = vpop.f32.mrb[0].mxu0
        %v970 = vadd.f32 0.0, %v969
        %v971 = vpop.f32.mrb[0].mxu0
        %v972 = vpop.f32.mrb[0].mxu0
        %v973 = vadd.f32 0.0, %v972
        %v974 = vpop.f32.mrb[0].mxu0
        %975 = vmatprep.mubr.bf16.mxu0 %v588
        %976 = vmatmul.mubr.bf16.gmra.mrb[0].mxu0 %v587
        %v977 = vpop.f32.mrb[0].mxu0
        %v978 = vadd.f32 0.0, %v977
        %v979 = vpop.f32.mrb[0].mxu0
        %v980 = vpop.f32.mrb[0].mxu0
        %v981 = vadd.f32 0.0, %v980
        %v982 = vpop.f32.mrb[0].mxu0
        %983 = vmatprep.mubr.bf16.mxu0 %v592
        %984 = vmatmul.mubr.bf16.gmra.mrb[0].mxu0 %v591
        %v985 = vpop.f32.mrb[0].mxu0
        %v986 = vadd.f32 0.0, %v985
        %v987 = vpop.f32.mrb[0].mxu0
        %v988 = vpop.f32.mrb[0].mxu0
        %v989 = vadd.f32 0.0, %v988
        %v990 = vpop.f32.mrb[0].mxu0
        %991 = vmatprep.mubr.bf16.mxu0 %v596
        %992 = vmatmul.mubr.bf16.gmra.mrb[0].mxu0 %v595
        %v993 = vpop.f32.mrb[0].mxu0
        %v994 = vadd.f32 0.0, %v993
        %v995 = vpop.f32.mrb[0].mxu0
        %v996 = vpop.f32.mrb[0].mxu0
        %v997 = vadd.f32 0.0, %v996
        %v998 = vpop.f32.mrb[0].mxu0
        %999 = vmatprep.mubr.bf16.mxu0 %v600
        %1000 = vmatmul.mubr.bf16.gmra.mrb[0].mxu0 %v599
        %v1001 = vpop.f32.mrb[0].mxu0
        %v1002 = vadd.f32 0.0, %v1001
        %v1003 = vpop.f32.mrb[0].mxu0
        %v1004 = vpop.f32.mrb[0].mxu0
        %v1005 = vadd.f32 0.0, %v1004
        %v1006 = vpop.f32.mrb[0].mxu0
        %1007 = vmatprep.mubr.bf16.mxu0 %v604
        %1008 = vmatmul.mubr.bf16.gmra.mrb[0].mxu0 %v603
        %v1009 = vpop.f32.mrb[0].mxu0
        %v1010 = vadd.f32 0.0, %v1009
        %v1011 = vpop.f32.mrb[0].mxu0
        %v1012 = vpop.f32.mrb[0].mxu0
        %v1013 = vadd.f32 0.0, %v1012
        %v1014 = vpop.f32.mrb[0].mxu0
        %1015 = vmatprep.mubr.bf16.mxu0 %v608
        %1016 = vmatmul.mubr.bf16.gmra.mrb[0].mxu0 %v607
        %v1017 = vpop.f32.mrb[0].mxu0
        %v1018 = vadd.f32 0.0, %v1017
        %v1019 = vpop.f32.mrb[0].mxu0
        %v1020 = vpop.f32.mrb[0].mxu0
        %v1021 = vadd.f32 0.0, %v1020
        %v1022 = vpop.f32.mrb[0].mxu0
        %1023 = vmatprep.mubr.bf16.mxu0 %v612
        %1024 = vmatmul.mubr.bf16.gmra.mrb[0].mxu0 %v611
        %v1025 = vpop.f32.mrb[0].mxu0
        %v1026 = vadd.f32 0.0, %v1025
        %v1027 = vpop.f32.mrb[0].mxu0
        %v1028 = vpop.f32.mrb[0].mxu0
        %v1029 = vadd.f32 0.0, %v1028
        %v1030 = vpop.f32.mrb[0].mxu0
        %1031 = vdwg.mxu0
        %1032 = vmatprep.subr.bf16.mxu0 0
        %1033 = vmatpush1.bf16.msra.mxu0 %v823
        %1034 = vmatprep.subr.bf16.mxu0 0
        %1035 = vmatpush1.bf16.msra.mxu0 %v824
        %1036 = vmatprep.subr.bf16.mxu0 0
        %1037 = vmatpush1.bf16.msra.mxu0 %v825
        %1038 = vmatprep.subr.bf16.mxu0 0
        %1039 = vmatpush1.bf16.msra.mxu0 %v826
        %1040 = vmatprep.subr.bf16.mxu0 0
        %1041 = vmatpush1.bf16.msra.mxu0 %v827
        %1042 = vmatprep.subr.bf16.mxu0 0
        %1043 = vmatpush1.bf16.msra.mxu0 %v828
        %1044 = vmatprep.subr.bf16.mxu0 0
        %1045 = vmatpush1.bf16.msra.mxu0 %v829
        %1046 = vmatprep.subr.bf16.mxu0 0
        %1047 = vmatpush1.bf16.msra.mxu0 %v830
        %1048 = vmatprep.subr.bf16.mxu0 0
        %1049 = vmatpush1.bf16.msra.mxu0 %v831
        %1050 = vmatprep.subr.bf16.mxu0 0
        %1051 = vmatpush1.bf16.msra.mxu0 %v832
        %1052 = vmatprep.subr.bf16.mxu0 0
        %1053 = vmatpush1.bf16.msra.mxu0 %v833
        %1054 = vmatprep.subr.bf16.mxu0 0
        %1055 = vmatpush1.bf16.msra.mxu0 %v834
        %1056 = vmatprep.subr.bf16.mxu0 0
        %1057 = vmatpush1.bf16.msra.mxu0 %v835
        %1058 = vmatprep.subr.bf16.mxu0 0
        %1059 = vmatpush1.bf16.msra.mxu0 %v836
        %1060 = vmatprep.subr.bf16.mxu0 0
        %1061 = vmatpush1.bf16.msra.mxu0 %v837
        %1062 = vmatprep.subr.bf16.mxu0 0
        %1063 = vmatpush1.bf16.msra.mxu0 %v838
        %1064 = vmatprep.mubr.bf16.mxu0 %v554
        %1065 = vmatmul.mubr.bf16.gmra.mrb[0].mxu0 %v553
        %v1066 = vpop.f32.mrb[0].mxu0
        %v1067 = vadd.f32 %v906, %v1066
        %v1068 = vpop.f32.mrb[0].mxu0
        %v1069 = vpop.f32.mrb[0].mxu0
        %v1070 = vadd.f32 %v909, %v1069
        %v1071 = vpop.f32.mrb[0].mxu0
        %1072 = vmatprep.mubr.bf16.mxu0 %v558
        %1073 = vmatmul.mubr.bf16.gmra.mrb[0].mxu0 %v557
        %v1074 = vpop.f32.mrb[0].mxu0
        %v1075 = vadd.f32 %v914, %v1074
        %v1076 = vpop.f32.mrb[0].mxu0
        %v1077 = vpop.f32.mrb[0].mxu0
        %v1078 = vadd.f32 %v917, %v1077
        %v1079 = vpop.f32.mrb[0].mxu0
        %1080 = vmatprep.mubr.bf16.mxu0 %v562
        %1081 = vmatmul.mubr.bf16.gmra.mrb[0].mxu0 %v561
        %v1082 = vpop.f32.mrb[0].mxu0
        %v1083 = vadd.f32 %v922, %v1082
        %v1084 = vpop.f32.mrb[0].mxu0
        %v1085 = vpop.f32.mrb[0].mxu0
        %v1086 = vadd.f32 %v925, %v1085
        %v1087 = vpop.f32.mrb[0].mxu0
        %1088 = vmatprep.mubr.bf16.mxu0 %v566
        %1089 = vmatmul.mubr.bf16.gmra.mrb[0].mxu0 %v565
        %v1090 = vpop.f32.mrb[0].mxu0
        %v1091 = vadd.f32 %v930, %v1090
        %v1092 = vpop.f32.mrb[0].mxu0
        %v1093 = vpop.f32.mrb[0].mxu0
        %v1094 = vadd.f32 %v933, %v1093
        %v1095 = vpop.f32.mrb[0].mxu0
        %1096 = vmatprep.mubr.bf16.mxu0 %v570
        %1097 = vmatmul.mubr.bf16.gmra.mrb[0].mxu0 %v569
        %v1098 = vpop.f32.mrb[0].mxu0
        %v1099 = vadd.f32 %v938, %v1098
        %v1100 = vpop.f32.mrb[0].mxu0
        %v1101 = vpop.f32.mrb[0].mxu0
        %v1102 = vadd.f32 %v941, %v1101
        %v1103 = vpop.f32.mrb[0].mxu0
        %1104 = vmatprep.mubr.bf16.mxu0 %v574
        %1105 = vmatmul.mubr.bf16.gmra.mrb[0].mxu0 %v573
        %v1106 = vpop.f32.mrb[0].mxu0
        %v1107 = vadd.f32 %v946, %v1106
        %v1108 = vpop.f32.mrb[0].mxu0
        %v1109 = vpop.f32.mrb[0].mxu0
        %v1110 = vadd.f32 %v949, %v1109
        %v1111 = vpop.f32.mrb[0].mxu0
        %1112 = vmatprep.mubr.bf16.mxu0 %v578
        %1113 = vmatmul.mubr.bf16.gmra.mrb[0].mxu0 %v577
        %v1114 = vpop.f32.mrb[0].mxu0
        %v1115 = vadd.f32 %v954, %v1114
        %v1116 = vpop.f32.mrb[0].mxu0
        %v1117 = vpop.f32.mrb[0].mxu0
        %v1118 = vadd.f32 %v957, %v1117
        %v1119 = vpop.f32.mrb[0].mxu0
        %1120 = vmatprep.mubr.bf16.mxu0 %v582
        %1121 = vmatmul.mubr.bf16.gmra.mrb[0].mxu0 %v581
        %v1122 = vpop.f32.mrb[0].mxu0
        %v1123 = vadd.f32 %v962, %v1122
        %v1124 = vpop.f32.mrb[0].mxu0
        %v1125 = vpop.f32.mrb[0].mxu0
        %v1126 = vadd.f32 %v965, %v1125
        %v1127 = vpop.f32.mrb[0].mxu0
        %1128 = vmatprep.mubr.bf16.mxu0 %v586
        %1129 = vmatmul.mubr.bf16.gmra.mrb[0].mxu0 %v585
        %v1130 = vpop.f32.mrb[0].mxu0
        %v1131 = vadd.f32 %v970, %v1130
        %v1132 = vpop.f32.mrb[0].mxu0
        %v1133 = vpop.f32.mrb[0].mxu0
        %v1134 = vadd.f32 %v973, %v1133
        %v1135 = vpop.f32.mrb[0].mxu0
        %1136 = vmatprep.mubr.bf16.mxu0 %v590
        %1137 = vmatmul.mubr.bf16.gmra.mrb[0].mxu0 %v589
        %v1138 = vpop.f32.mrb[0].mxu0
        %v1139 = vadd.f32 %v978, %v1138
        %v1140 = vpop.f32.mrb[0].mxu0
        %v1141 = vpop.f32.mrb[0].mxu0
        %v1142 = vadd.f32 %v981, %v1141
        %v1143 = vpop.f32.mrb[0].mxu0
        %1144 = vmatprep.mubr.bf16.mxu0 %v594
        %1145 = vmatmul.mubr.bf16.gmra.mrb[0].mxu0 %v593
        %v1146 = vpop.f32.mrb[0].mxu0
        %v1147 = vadd.f32 %v986, %v1146
        %v1148 = vpop.f32.mrb[0].mxu0
        %v1149 = vpop.f32.mrb[0].mxu0
        %v1150 = vadd.f32 %v989, %v1149
        %v1151 = vpop.f32.mrb[0].mxu0
        %1152 = vmatprep.mubr.bf16.mxu0 %v598
        %1153 = vmatmul.mubr.bf16.gmra.mrb[0].mxu0 %v597
        %v1154 = vpop.f32.mrb[0].mxu0
        %v1155 = vadd.f32 %v994, %v1154
        %v1156 = vpop.f32.mrb[0].mxu0
        %v1157 = vpop.f32.mrb[0].mxu0
        %v1158 = vadd.f32 %v997, %v1157
        %v1159 = vpop.f32.mrb[0].mxu0
        %1160 = vmatprep.mubr.bf16.mxu0 %v602
        %1161 = vmatmul.mubr.bf16.gmra.mrb[0].mxu0 %v601
        %v1162 = vpop.f32.mrb[0].mxu0
        %v1163 = vadd.f32 %v1002, %v1162
        %v1164 = vpop.f32.mrb[0].mxu0
        %v1165 = vpop.f32.mrb[0].mxu0
        %v1166 = vadd.f32 %v1005, %v1165
        %v1167 = vpop.f32.mrb[0].mxu0
        %1168 = vmatprep.mubr.bf16.mxu0 %v606
        %1169 = vmatmul.mubr.bf16.gmra.mrb[0].mxu0 %v605
        %v1170 = vpop.f32.mrb[0].mxu0
        %v1171 = vadd.f32 %v1010, %v1170
        %v1172 = vpop.f32.mrb[0].mxu0
        %v1173 = vpop.f32.mrb[0].mxu0
        %v1174 = vadd.f32 %v1013, %v1173
        %v1175 = vpop.f32.mrb[0].mxu0
        %1176 = vmatprep.mubr.bf16.mxu0 %v610
        %1177 = vmatmul.mubr.bf16.gmra.mrb[0].mxu0 %v609
        %v1178 = vpop.f32.mrb[0].mxu0
        %v1179 = vadd.f32 %v1018, %v1178
        %v1180 = vpop.f32.mrb[0].mxu0
        %v1181 = vpop.f32.mrb[0].mxu0
        %v1182 = vadd.f32 %v1021, %v1181
        %v1183 = vpop.f32.mrb[0].mxu0
        %1184 = vmatprep.mubr.bf16.mxu0 %v614
        %1185 = vmatmul.mubr.bf16.gmra.mrb[0].mxu0 %v613
        %v1186 = vpop.f32.mrb[0].mxu0
        %v1187 = vadd.f32 %v1026, %v1186
        %v1188 = vpop.f32.mrb[0].mxu0
        %v1189 = vpop.f32.mrb[0].mxu0
        %v1190 = vadd.f32 %v1029, %v1189
        %v1191 = vpop.f32.mrb[0].mxu0
        %1192 = vdwg.mxu0
        %v1193 = vld [vmem:[%s2] sm:$0x1]
        %v1195 = vlaneseq
        %v1196 = vshrl.u32 %v1195, 7
        %v1197 = vsub.s32 0, %v1196
        %v1198 = vrot.slane %v1193, %v1197
        %v1200 = vmul.f32 %v1067, %v1198
        %v1201 = vmul.f32 %v1070, %v1198
        %v1202 = vmul.f32 %v1075, %v1198
        %v1203 = vmul.f32 %v1078, %v1198
        %v1204 = vmul.f32 %v1083, %v1198
        %v1205 = vmul.f32 %v1086, %v1198
        %v1206 = vmul.f32 %v1091, %v1198
        %v1207 = vmul.f32 %v1094, %v1198
        %v1208 = vmul.f32 %v1099, %v1198
        %v1209 = vmul.f32 %v1102, %v1198
        %v1210 = vmul.f32 %v1107, %v1198
        %v1211 = vmul.f32 %v1110, %v1198
        %v1212 = vmul.f32 %v1115, %v1198
        %v1213 = vmul.f32 %v1118, %v1198
        %v1214 = vmul.f32 %v1123, %v1198
        %v1215 = vmul.f32 %v1126, %v1198
        %v1216 = vmul.f32 %v1131, %v1198
        %v1217 = vmul.f32 %v1134, %v1198
        %v1218 = vmul.f32 %v1139, %v1198
        %v1219 = vmul.f32 %v1142, %v1198
        %v1220 = vmul.f32 %v1147, %v1198
        %v1221 = vmul.f32 %v1150, %v1198
        %v1222 = vmul.f32 %v1155, %v1198
        %v1223 = vmul.f32 %v1158, %v1198
        %v1224 = vmul.f32 %v1163, %v1198
        %v1225 = vmul.f32 %v1166, %v1198
        %v1226 = vmul.f32 %v1171, %v1198
        %v1227 = vmul.f32 %v1174, %v1198
        %v1228 = vmul.f32 %v1179, %v1198
        %v1229 = vmul.f32 %v1182, %v1198
        %v1230 = vmul.f32 %v1187, %v1198
        %v1231 = vmul.f32 %v1190, %v1198
        %v1232 = vld [vmem:[%s3] sm:$0x1]
        %v1234 = vlaneseq
        %v1235 = vshrl.u32 %v1234, 7
        %v1236 = vsub.s32 0, %v1235
        %v1237 = vrot.slane %v1232, %v1236
        %v1239 = vadd.f32 %v1200, %v1237
        %v1240 = vadd.f32 %v1201, %v1237
        %v1241 = vadd.f32 %v1202, %v1237
        %v1242 = vadd.f32 %v1203, %v1237
        %v1243 = vadd.f32 %v1204, %v1237
        %v1244 = vadd.f32 %v1205, %v1237
        %v1245 = vadd.f32 %v1206, %v1237
        %v1246 = vadd.f32 %v1207, %v1237
        %v1247 = vadd.f32 %v1208, %v1237
        %v1248 = vadd.f32 %v1209, %v1237
        %v1249 = vadd.f32 %v1210, %v1237
        %v1250 = vadd.f32 %v1211, %v1237
        %v1251 = vadd.f32 %v1212, %v1237
        %v1252 = vadd.f32 %v1213, %v1237
        %v1253 = vadd.f32 %v1214, %v1237
        %v1254 = vadd.f32 %v1215, %v1237
        %v1255 = vadd.f32 %v1216, %v1237
        %v1256 = vadd.f32 %v1217, %v1237
        %v1257 = vadd.f32 %v1218, %v1237
        %v1258 = vadd.f32 %v1219, %v1237
        %v1259 = vadd.f32 %v1220, %v1237
        %v1260 = vadd.f32 %v1221, %v1237
        %v1261 = vadd.f32 %v1222, %v1237
        %v1262 = vadd.f32 %v1223, %v1237
        %v1263 = vadd.f32 %v1224, %v1237
        %v1264 = vadd.f32 %v1225, %v1237
        %v1265 = vadd.f32 %v1226, %v1237
        %v1266 = vadd.f32 %v1227, %v1237
        %v1267 = vadd.f32 %v1228, %v1237
        %v1268 = vadd.f32 %v1229, %v1237
        %v1269 = vadd.f32 %v1230, %v1237
        %v1270 = vadd.f32 %v1231, %v1237
        %v1271 = vmax.f32 %v1239, 0.0
        %v1272 = vmax.f32 %v1240, 0.0
        %v1273 = vmax.f32 %v1241, 0.0
        %v1274 = vmax.f32 %v1242, 0.0
        %v1275 = vmax.f32 %v1243, 0.0
        %v1276 = vmax.f32 %v1244, 0.0
        %v1277 = vmax.f32 %v1245, 0.0
        %v1278 = vmax.f32 %v1246, 0.0
        %v1279 = vmax.f32 %v1247, 0.0
        %v1280 = vmax.f32 %v1248, 0.0
        %v1281 = vmax.f32 %v1249, 0.0
        %v1282 = vmax.f32 %v1250, 0.0
        %v1283 = vmax.f32 %v1251, 0.0
        %v1284 = vmax.f32 %v1252, 0.0
        %v1285 = vmax.f32 %v1253, 0.0
        %v1286 = vmax.f32 %v1254, 0.0
        %v1287 = vmax.f32 %v1255, 0.0
        %v1288 = vmax.f32 %v1256, 0.0
        %v1289 = vmax.f32 %v1257, 0.0
        %v1290 = vmax.f32 %v1258, 0.0
        %v1291 = vmax.f32 %v1259, 0.0
        %v1292 = vmax.f32 %v1260, 0.0
        %v1293 = vmax.f32 %v1261, 0.0
        %v1294 = vmax.f32 %v1262, 0.0
        %v1295 = vmax.f32 %v1263, 0.0
        %v1296 = vmax.f32 %v1264, 0.0
        %v1297 = vmax.f32 %v1265, 0.0
        %v1298 = vmax.f32 %v1266, 0.0
        %v1299 = vmax.f32 %v1267, 0.0
        %v1300 = vmax.f32 %v1268, 0.0
        %v1301 = vmax.f32 %v1269, 0.0
        %v1302 = vmax.f32 %v1270, 0.0
        %1303 = vst [vmem:[#allocation2] sm:$0xff] 0.0
        %1304 = vst [vmem:[#allocation2 + $0x8] sm:$0xff] 0.0
        %1305 = vst [vmem:[#allocation2 + $0x10] sm:$0x3] 0.0
        %s1306 = scalar_lea.vmem [#allocation2], 408
        %1307 = vst [vmem:[%s1306] sm:$0xff] 0.0
        %1308 = vst [vmem:[%s1306 + $0x8] sm:$0xff] 0.0
        %1309 = vst [vmem:[%s1306 + $0x10] sm:$0x3] 0.0
        %1310 = vst [vmem:[#allocation2] sm:$0x1] 0.0
        %1311 = vst [vmem:[#allocation2 + $0x18] sm:$0x1] 0.0
        %1312 = vst [vmem:[#allocation2 + $0x30] sm:$0x1] 0.0
        %1313 = vst [vmem:[#allocation2 + $0x48] sm:$0x1] 0.0
        %1314 = vst [vmem:[#allocation2 + $0x60] sm:$0x1] 0.0
        %1315 = vst [vmem:[#allocation2 + $0x78] sm:$0x1] 0.0
        %1316 = vst [vmem:[#allocation2 + $0x90] sm:$0x1] 0.0
        %1317 = vst [vmem:[#allocation2 + $0xa8] sm:$0x1] 0.0
        %1318 = vst [vmem:[#allocation2 + $0xc0] sm:$0x1] 0.0
        %1319 = vst [vmem:[#allocation2 + $0xd8] sm:$0x1] 0.0
        %1320 = vst [vmem:[#allocation2 + $0xf0] sm:$0x1] 0.0
        %1321 = vst [vmem:[#allocation2 + $0x108] sm:$0x1] 0.0
        %1322 = vst [vmem:[#allocation2 + $0x120] sm:$0x1] 0.0
        %1323 = vst [vmem:[#allocation2 + $0x138] sm:$0x1] 0.0
        %1324 = vst [vmem:[#allocation2 + $0x150] sm:$0x1] 0.0
        %1325 = vst [vmem:[#allocation2 + $0x168] sm:$0x1] 0.0
        %1326 = vst [vmem:[#allocation2 + $0x180] sm:$0x1] 0.0
        %1327 = vst [vmem:[#allocation2 + $0x198] sm:$0x1] 0.0
        %1328 = vst [vmem:[#allocation2 + $0x11] sm:$0x1] 0.0
        %1329 = vst [vmem:[#allocation2 + $0x29] sm:$0x1] 0.0
        %1330 = vst [vmem:[#allocation2 + $0x41] sm:$0x1] 0.0
        %1331 = vst [vmem:[#allocation2 + $0x59] sm:$0x1] 0.0
        %1332 = vst [vmem:[#allocation2 + $0x71] sm:$0x1] 0.0
        %1333 = vst [vmem:[#allocation2 + $0x89] sm:$0x1] 0.0
        %1334 = vst [vmem:[#allocation2 + $0xa1] sm:$0x1] 0.0
        %1335 = vst [vmem:[#allocation2 + $0xb9] sm:$0x1] 0.0
        %1336 = vst [vmem:[#allocation2 + $0xd1] sm:$0x1] 0.0
        %1337 = vst [vmem:[#allocation2 + $0xe9] sm:$0x1] 0.0
        %1338 = vst [vmem:[#allocation2 + $0x101] sm:$0x1] 0.0
        %1339 = vst [vmem:[#allocation2 + $0x119] sm:$0x1] 0.0
        %1340 = vst [vmem:[#allocation2 + $0x131] sm:$0x1] 0.0
        %1341 = vst [vmem:[#allocation2 + $0x149] sm:$0x1] 0.0
        %1342 = vst [vmem:[#allocation2 + $0x161] sm:$0x1] 0.0
        %1343 = vst [vmem:[#allocation2 + $0x179] sm:$0x1] 0.0
        %1344 = vst [vmem:[#allocation2 + $0x191] sm:$0x1] 0.0
        %1345 = vst [vmem:[#allocation2 + $0x1a9] sm:$0x1] 0.0
        %s1346 = scalar_lea.vmem [#allocation2], 24
        %1347 = vst [vmem:[%s1346 + $0x1] sm:$0xff] %v1271
        %1348 = vst [vmem:[%s1346 + $0x9] sm:$0xff] %v1272
        %1349 = vst [vmem:[%s1346 + $0x19] sm:$0xff] %v1273
        %1350 = vst [vmem:[%s1346 + $0x21] sm:$0xff] %v1274
        %1351 = vst [vmem:[%s1346 + $0x31] sm:$0xff] %v1275
        %1352 = vst [vmem:[%s1346 + $0x39] sm:$0xff] %v1276
        %1353 = vst [vmem:[%s1346 + $0x49] sm:$0xff] %v1277
        %1354 = vst [vmem:[%s1346 + $0x51] sm:$0xff] %v1278
        %1355 = vst [vmem:[%s1346 + $0x61] sm:$0xff] %v1279
        %1356 = vst [vmem:[%s1346 + $0x69] sm:$0xff] %v1280
        %1357 = vst [vmem:[%s1346 + $0x79] sm:$0xff] %v1281
        %1358 = vst [vmem:[%s1346 + $0x81] sm:$0xff] %v1282
        %1359 = vst [vmem:[%s1346 + $0x91] sm:$0xff] %v1283
        %1360 = vst [vmem:[%s1346 + $0x99] sm:$0xff] %v1284
        %1361 = vst [vmem:[%s1346 + $0xa9] sm:$0xff] %v1285
        %1362 = vst [vmem:[%s1346 + $0xb1] sm:$0xff] %v1286
        %1363 = vst [vmem:[%s1346 + $0xc1] sm:$0xff] %v1287
        %1364 = vst [vmem:[%s1346 + $0xc9] sm:$0xff] %v1288
        %1365 = vst [vmem:[%s1346 + $0xd9] sm:$0xff] %v1289
        %1366 = vst [vmem:[%s1346 + $0xe1] sm:$0xff] %v1290
        %1367 = vst [vmem:[%s1346 + $0xf1] sm:$0xff] %v1291
        %1368 = vst [vmem:[%s1346 + $0xf9] sm:$0xff] %v1292
        %1369 = vst [vmem:[%s1346 + $0x109] sm:$0xff] %v1293
        %1370 = vst [vmem:[%s1346 + $0x111] sm:$0xff] %v1294
        %1371 = vst [vmem:[%s1346 + $0x121] sm:$0xff] %v1295
        %1372 = vst [vmem:[%s1346 + $0x129] sm:$0xff] %v1296
        %1373 = vst [vmem:[%s1346 + $0x139] sm:$0xff] %v1297
        %1374 = vst [vmem:[%s1346 + $0x141] sm:$0xff] %v1298
        %1375 = vst [vmem:[%s1346 + $0x151] sm:$0xff] %v1299
        %1376 = vst [vmem:[%s1346 + $0x159] sm:$0xff] %v1300
        %1377 = vst [vmem:[%s1346 + $0x169] sm:$0xff] %v1301
        %1378 = vst [vmem:[%s1346 + $0x171] sm:$0xff] %v1302
        %v1379 = vld [vmem:[#allocation2] sm:$0xff]
        %v1380 = vld [vmem:[#allocation2 + $0x8] sm:$0xff]
        %v1381 = vld [vmem:[#allocation2 + $0x18] sm:$0xff]
        %v1382 = vld [vmem:[#allocation2 + $0x20] sm:$0xff]
        %v1383 = vld [vmem:[#allocation2 + $0x30] sm:$0xff]
        %v1384 = vld [vmem:[#allocation2 + $0x38] sm:$0xff]
        %v1385 = vld [vmem:[#allocation2 + $0x48] sm:$0xff]
        %v1386 = vld [vmem:[#allocation2 + $0x50] sm:$0xff]
        %v1387 = vld [vmem:[#allocation2 + $0x60] sm:$0xff]
        %v1388 = vld [vmem:[#allocation2 + $0x68] sm:$0xff]
        %v1389 = vld [vmem:[#allocation2 + $0x78] sm:$0xff]
        %v1390 = vld [vmem:[#allocation2 + $0x80] sm:$0xff]
        %v1391 = vld [vmem:[#allocation2 + $0x90] sm:$0xff]
        %v1392 = vld [vmem:[#allocation2 + $0x98] sm:$0xff]
        %v1393 = vld [vmem:[#allocation2 + $0xa8] sm:$0xff]
        %v1394 = vld [vmem:[#allocation2 + $0xb0] sm:$0xff]
        %v1395 = vld [vmem:[#allocation2 + $0xc0] sm:$0xff]
        %v1396 = vld [vmem:[#allocation2 + $0xc8] sm:$0xff]
        %v1397 = vld [vmem:[#allocation2 + $0xd8] sm:$0xff]
        %v1398 = vld [vmem:[#allocation2 + $0xe0] sm:$0xff]
        %v1399 = vld [vmem:[#allocation2 + $0xf0] sm:$0xff]
        %v1400 = vld [vmem:[#allocation2 + $0xf8] sm:$0xff]
        %v1401 = vld [vmem:[#allocation2 + $0x108] sm:$0xff]
        %v1402 = vld [vmem:[#allocation2 + $0x110] sm:$0xff]
        %v1403 = vld [vmem:[#allocation2 + $0x120] sm:$0xff]
        %v1404 = vld [vmem:[#allocation2 + $0x128] sm:$0xff]
        %v1405 = vld [vmem:[#allocation2 + $0x138] sm:$0xff]
        %v1406 = vld [vmem:[#allocation2 + $0x140] sm:$0xff]
        %v1407 = vld [vmem:[#allocation2 + $0x150] sm:$0xff]
        %v1408 = vld [vmem:[#allocation2 + $0x158] sm:$0xff]
        %v1409 = vld [vmem:[#allocation2 + $0x168] sm:$0xff]
        %v1410 = vld [vmem:[#allocation2 + $0x170] sm:$0xff]
        %v1411 = vpack.c.bf16 %v1380, %v1379
        %v1412 = vpack.c.bf16 %v1382, %v1381
        %v1413 = vpack.c.bf16 %v1384, %v1383
        %v1414 = vpack.c.bf16 %v1386, %v1385
        %v1415 = vpack.c.bf16 %v1388, %v1387
        %v1416 = vpack.c.bf16 %v1390, %v1389
        %v1417 = vpack.c.bf16 %v1392, %v1391
        %v1418 = vpack.c.bf16 %v1394, %v1393
        %v1419 = vpack.c.bf16 %v1396, %v1395
        %v1420 = vpack.c.bf16 %v1398, %v1397
        %v1421 = vpack.c.bf16 %v1400, %v1399
        %v1422 = vpack.c.bf16 %v1402, %v1401
        %v1423 = vpack.c.bf16 %v1404, %v1403
        %v1424 = vpack.c.bf16 %v1406, %v1405
        %v1425 = vpack.c.bf16 %v1408, %v1407
        %v1426 = vpack.c.bf16 %v1410, %v1409
        %v1427 = vld [vmem:[#allocation2 + $0x1] sm:$0xff]
        %v1428 = vld [vmem:[#allocation2 + $0x9] sm:$0xff]
        %v1429 = vld [vmem:[#allocation2 + $0x19] sm:$0xff]
        %v1430 = vld [vmem:[#allocation2 + $0x21] sm:$0xff]
        %v1431 = vld [vmem:[#allocation2 + $0x31] sm:$0xff]
        %v1432 = vld [vmem:[#allocation2 + $0x39] sm:$0xff]
        %v1433 = vld [vmem:[#allocation2 + $0x49] sm:$0xff]
        %v1434 = vld [vmem:[#allocation2 + $0x51] sm:$0xff]
        %v1435 = vld [vmem:[#allocation2 + $0x61] sm:$0xff]
        %v1436 = vld [vmem:[#allocation2 + $0x69] sm:$0xff]
        %v1437 = vld [vmem:[#allocation2 + $0x79] sm:$0xff]
        %v1438 = vld [vmem:[#allocation2 + $0x81] sm:$0xff]
        %v1439 = vld [vmem:[#allocation2 + $0x91] sm:$0xff]
        %v1440 = vld [vmem:[#allocation2 + $0x99] sm:$0xff]
        %v1441 = vld [vmem:[#allocation2 + $0xa9] sm:$0xff]
        %v1442 = vld [vmem:[#allocation2 + $0xb1] sm:$0xff]
        %v1443 = vld [vmem:[#allocation2 + $0xc1] sm:$0xff]
        %v1444 = vld [vmem:[#allocation2 + $0xc9] sm:$0xff]
        %v1445 = vld [vmem:[#allocation2 + $0xd9] sm:$0xff]
        %v1446 = vld [vmem:[#allocation2 + $0xe1] sm:$0xff]
        %v1447 = vld [vmem:[#allocation2 + $0xf1] sm:$0xff]
        %v1448 = vld [vmem:[#allocation2 + $0xf9] sm:$0xff]
        %v1449 = vld [vmem:[#allocation2 + $0x109] sm:$0xff]
        %v1450 = vld [vmem:[#allocation2 + $0x111] sm:$0xff]
        %v1451 = vld [vmem:[#allocation2 + $0x121] sm:$0xff]
        %v1452 = vld [vmem:[#allocation2 + $0x129] sm:$0xff]
        %v1453 = vld [vmem:[#allocation2 + $0x139] sm:$0xff]
        %v1454 = vld [vmem:[#allocation2 + $0x141] sm:$0xff]
        %v1455 = vld [vmem:[#allocation2 + $0x151] sm:$0xff]
        %v1456 = vld [vmem:[#allocation2 + $0x159] sm:$0xff]
        %v1457 = vld [vmem:[#allocation2 + $0x169] sm:$0xff]
        %v1458 = vld [vmem:[#allocation2 + $0x171] sm:$0xff]
        %v1459 = vpack.c.bf16 %v1428, %v1427
        %v1460 = vpack.c.bf16 %v1430, %v1429
        %v1461 = vpack.c.bf16 %v1432, %v1431
        %v1462 = vpack.c.bf16 %v1434, %v1433
        %v1463 = vpack.c.bf16 %v1436, %v1435
        %v1464 = vpack.c.bf16 %v1438, %v1437
        %v1465 = vpack.c.bf16 %v1440, %v1439
        %v1466 = vpack.c.bf16 %v1442, %v1441
        %v1467 = vpack.c.bf16 %v1444, %v1443
        %v1468 = vpack.c.bf16 %v1446, %v1445
        %v1469 = vpack.c.bf16 %v1448, %v1447
        %v1470 = vpack.c.bf16 %v1450, %v1449
        %v1471 = vpack.c.bf16 %v1452, %v1451
        %v1472 = vpack.c.bf16 %v1454, %v1453
        %v1473 = vpack.c.bf16 %v1456, %v1455
        %v1474 = vpack.c.bf16 %v1458, %v1457
        %v1475 = vld [vmem:[#allocation2 + $0x2] sm:$0xff]
        %v1476 = vld [vmem:[#allocation2 + $0xa] sm:$0xff]
        %v1477 = vld [vmem:[#allocation2 + $0x1a] sm:$0xff]
        %v1478 = vld [vmem:[#allocation2 + $0x22] sm:$0xff]
        %v1479 = vld [vmem:[#allocation2 + $0x32] sm:$0xff]
        %v1480 = vld [vmem:[#allocation2 + $0x3a] sm:$0xff]
        %v1481 = vld [vmem:[#allocation2 + $0x4a] sm:$0xff]
        %v1482 = vld [vmem:[#allocation2 + $0x52] sm:$0xff]
        %v1483 = vld [vmem:[#allocation2 + $0x62] sm:$0xff]
        %v1484 = vld [vmem:[#allocation2 + $0x6a] sm:$0xff]
        %v1485 = vld [vmem:[#allocation2 + $0x7a] sm:$0xff]
        %v1486 = vld [vmem:[#allocation2 + $0x82] sm:$0xff]
        %v1487 = vld [vmem:[#allocation2 + $0x92] sm:$0xff]
        %v1488 = vld [vmem:[#allocation2 + $0x9a] sm:$0xff]
        %v1489 = vld [vmem:[#allocation2 + $0xaa] sm:$0xff]
        %v1490 = vld [vmem:[#allocation2 + $0xb2] sm:$0xff]
        %v1491 = vld [vmem:[#allocation2 + $0xc2] sm:$0xff]
        %v1492 = vld [vmem:[#allocation2 + $0xca] sm:$0xff]
        %v1493 = vld [vmem:[#allocation2 + $0xda] sm:$0xff]
        %v1494 = vld [vmem:[#allocation2 + $0xe2] sm:$0xff]
        %v1495 = vld [vmem:[#allocation2 + $0xf2] sm:$0xff]
        %v1496 = vld [vmem:[#allocation2 + $0xfa] sm:$0xff]
        %v1497 = vld [vmem:[#allocation2 + $0x10a] sm:$0xff]
        %v1498 = vld [vmem:[#allocation2 + $0x112] sm:$0xff]
        %v1499 = vld [vmem:[#allocation2 + $0x122] sm:$0xff]
        %v1500 = vld [vmem:[#allocation2 + $0x12a] sm:$0xff]
        %v1501 = vld [vmem:[#allocation2 + $0x13a] sm:$0xff]
        %v1502 = vld [vmem:[#allocation2 + $0x142] sm:$0xff]
        %v1503 = vld [vmem:[#allocation2 + $0x152] sm:$0xff]
        %v1504 = vld [vmem:[#allocation2 + $0x15a] sm:$0xff]
        %v1505 = vld [vmem:[#allocation2 + $0x16a] sm:$0xff]
        %v1506 = vld [vmem:[#allocation2 + $0x172] sm:$0xff]
        %v1507 = vpack.c.bf16 %v1476, %v1475
        %v1508 = vpack.c.bf16 %v1478, %v1477
        %v1509 = vpack.c.bf16 %v1480, %v1479
        %v1510 = vpack.c.bf16 %v1482, %v1481
        %v1511 = vpack.c.bf16 %v1484, %v1483
        %v1512 = vpack.c.bf16 %v1486, %v1485
        %v1513 = vpack.c.bf16 %v1488, %v1487
        %v1514 = vpack.c.bf16 %v1490, %v1489
        %v1515 = vpack.c.bf16 %v1492, %v1491
        %v1516 = vpack.c.bf16 %v1494, %v1493
        %v1517 = vpack.c.bf16 %v1496, %v1495
        %v1518 = vpack.c.bf16 %v1498, %v1497
        %v1519 = vpack.c.bf16 %v1500, %v1499
        %v1520 = vpack.c.bf16 %v1502, %v1501
        %v1521 = vpack.c.bf16 %v1504, %v1503
        %v1522 = vpack.c.bf16 %v1506, %v1505
        %v1523 = vld [vmem:[%s1346] sm:$0xff]
        %v1524 = vld [vmem:[%s1346 + $0x8] sm:$0xff]
        %v1525 = vld [vmem:[%s1346 + $0x18] sm:$0xff]
        %v1526 = vld [vmem:[%s1346 + $0x20] sm:$0xff]
        %v1527 = vld [vmem:[%s1346 + $0x30] sm:$0xff]
        %v1528 = vld [vmem:[%s1346 + $0x38] sm:$0xff]
        %v1529 = vld [vmem:[%s1346 + $0x48] sm:$0xff]
        %v1530 = vld [vmem:[%s1346 + $0x50] sm:$0xff]
        %v1531 = vld [vmem:[%s1346 + $0x60] sm:$0xff]
        %v1532 = vld [vmem:[%s1346 + $0x68] sm:$0xff]
        %v1533 = vld [vmem:[%s1346 + $0x78] sm:$0xff]
        %v1534 = vld [vmem:[%s1346 + $0x80] sm:$0xff]
        %v1535 = vld [vmem:[%s1346 + $0x90] sm:$0xff]
        %v1536 = vld [vmem:[%s1346 + $0x98] sm:$0xff]
        %v1537 = vld [vmem:[%s1346 + $0xa8] sm:$0xff]
        %v1538 = vld [vmem:[%s1346 + $0xb0] sm:$0xff]
        %v1539 = vld [vmem:[%s1346 + $0xc0] sm:$0xff]
        %v1540 = vld [vmem:[%s1346 + $0xc8] sm:$0xff]
        %v1541 = vld [vmem:[%s1346 + $0xd8] sm:$0xff]
        %v1542 = vld [vmem:[%s1346 + $0xe0] sm:$0xff]
        %v1543 = vld [vmem:[%s1346 + $0xf0] sm:$0xff]
        %v1544 = vld [vmem:[%s1346 + $0xf8] sm:$0xff]
        %v1545 = vld [vmem:[%s1346 + $0x108] sm:$0xff]
        %v1546 = vld [vmem:[%s1346 + $0x110] sm:$0xff]
        %v1547 = vld [vmem:[%s1346 + $0x120] sm:$0xff]
        %v1548 = vld [vmem:[%s1346 + $0x128] sm:$0xff]
        %v1549 = vld [vmem:[%s1346 + $0x138] sm:$0xff]
        %v1550 = vld [vmem:[%s1346 + $0x140] sm:$0xff]
        %v1551 = vld [vmem:[%s1346 + $0x150] sm:$0xff]
        %v1552 = vld [vmem:[%s1346 + $0x158] sm:$0xff]
        %v1553 = vld [vmem:[%s1346 + $0x168] sm:$0xff]
        %v1554 = vld [vmem:[%s1346 + $0x170] sm:$0xff]
        %v1555 = vpack.c.bf16 %v1524, %v1523
        %v1556 = vpack.c.bf16 %v1526, %v1525
        %v1557 = vpack.c.bf16 %v1528, %v1527
        %v1558 = vpack.c.bf16 %v1530, %v1529
        %v1559 = vpack.c.bf16 %v1532, %v1531
        %v1560 = vpack.c.bf16 %v1534, %v1533
        %v1561 = vpack.c.bf16 %v1536, %v1535
        %v1562 = vpack.c.bf16 %v1538, %v1537
        %v1563 = vpack.c.bf16 %v1540, %v1539
        %v1564 = vpack.c.bf16 %v1542, %v1541
        %v1565 = vpack.c.bf16 %v1544, %v1543
        %v1566 = vpack.c.bf16 %v1546, %v1545
        %v1567 = vpack.c.bf16 %v1548, %v1547
        %v1568 = vpack.c.bf16 %v1550, %v1549
        %v1569 = vpack.c.bf16 %v1552, %v1551
        %v1570 = vpack.c.bf16 %v1554, %v1553
        %v1571 = vld [vmem:[%s1346 + $0x1] sm:$0xff]
        %v1572 = vld [vmem:[%s1346 + $0x9] sm:$0xff]
        %v1573 = vld [vmem:[%s1346 + $0x19] sm:$0xff]
        %v1574 = vld [vmem:[%s1346 + $0x21] sm:$0xff]
        %v1575 = vld [vmem:[%s1346 + $0x31] sm:$0xff]
        %v1576 = vld [vmem:[%s1346 + $0x39] sm:$0xff]
        %v1577 = vld [vmem:[%s1346 + $0x49] sm:$0xff]
        %v1578 = vld [vmem:[%s1346 + $0x51] sm:$0xff]
        %v1579 = vld [vmem:[%s1346 + $0x61] sm:$0xff]
        %v1580 = vld [vmem:[%s1346 + $0x69] sm:$0xff]
        %v1581 = vld [vmem:[%s1346 + $0x79] sm:$0xff]
        %v1582 = vld [vmem:[%s1346 + $0x81] sm:$0xff]
        %v1583 = vld [vmem:[%s1346 + $0x91] sm:$0xff]
        %v1584 = vld [vmem:[%s1346 + $0x99] sm:$0xff]
        %v1585 = vld [vmem:[%s1346 + $0xa9] sm:$0xff]
        %v1586 = vld [vmem:[%s1346 + $0xb1] sm:$0xff]
        %v1587 = vld [vmem:[%s1346 + $0xc1] sm:$0xff]
        %v1588 = vld [vmem:[%s1346 + $0xc9] sm:$0xff]
        %v1589 = vld [vmem:[%s1346 + $0xd9] sm:$0xff]
        %v1590 = vld [vmem:[%s1346 + $0xe1] sm:$0xff]
        %v1591 = vld [vmem:[%s1346 + $0xf1] sm:$0xff]
        %v1592 = vld [vmem:[%s1346 + $0xf9] sm:$0xff]
        %v1593 = vld [vmem:[%s1346 + $0x109] sm:$0xff]
        %v1594 = vld [vmem:[%s1346 + $0x111] sm:$0xff]
        %v1595 = vld [vmem:[%s1346 + $0x121] sm:$0xff]
        %v1596 = vld [vmem:[%s1346 + $0x129] sm:$0xff]
        %v1597 = vld [vmem:[%s1346 + $0x139] sm:$0xff]
        %v1598 = vld [vmem:[%s1346 + $0x141] sm:$0xff]
        %v1599 = vld [vmem:[%s1346 + $0x151] sm:$0xff]
        %v1600 = vld [vmem:[%s1346 + $0x159] sm:$0xff]
        %v1601 = vld [vmem:[%s1346 + $0x169] sm:$0xff]
        %v1602 = vld [vmem:[%s1346 + $0x171] sm:$0xff]
        %v1603 = vpack.c.bf16 %v1572, %v1571
        %v1604 = vpack.c.bf16 %v1574, %v1573
        %v1605 = vpack.c.bf16 %v1576, %v1575
        %v1606 = vpack.c.bf16 %v1578, %v1577
        %v1607 = vpack.c.bf16 %v1580, %v1579
        %v1608 = vpack.c.bf16 %v1582, %v1581
        %v1609 = vpack.c.bf16 %v1584, %v1583
        %v1610 = vpack.c.bf16 %v1586, %v1585
        %v1611 = vpack.c.bf16 %v1588, %v1587
        %v1612 = vpack.c.bf16 %v1590, %v1589
        %v1613 = vpack.c.bf16 %v1592, %v1591
        %v1614 = vpack.c.bf16 %v1594, %v1593
        %v1615 = vpack.c.bf16 %v1596, %v1595
        %v1616 = vpack.c.bf16 %v1598, %v1597
        %v1617 = vpack.c.bf16 %v1600, %v1599
        %v1618 = vpack.c.bf16 %v1602, %v1601
        %v1619 = vld [vmem:[%s1346 + $0x2] sm:$0xff]
        %v1620 = vld [vmem:[%s1346 + $0xa] sm:$0xff]
        %v1621 = vld [vmem:[%s1346 + $0x1a] sm:$0xff]
        %v1622 = vld [vmem:[%s1346 + $0x22] sm:$0xff]
        %v1623 = vld [vmem:[%s1346 + $0x32] sm:$0xff]
        %v1624 = vld [vmem:[%s1346 + $0x3a] sm:$0xff]
        %v1625 = vld [vmem:[%s1346 + $0x4a] sm:$0xff]
        %v1626 = vld [vmem:[%s1346 + $0x52] sm:$0xff]
        %v1627 = vld [vmem:[%s1346 + $0x62] sm:$0xff]
        %v1628 = vld [vmem:[%s1346 + $0x6a] sm:$0xff]
        %v1629 = vld [vmem:[%s1346 + $0x7a] sm:$0xff]
        %v1630 = vld [vmem:[%s1346 + $0x82] sm:$0xff]
        %v1631 = vld [vmem:[%s1346 + $0x92] sm:$0xff]
        %v1632 = vld [vmem:[%s1346 + $0x9a] sm:$0xff]
        %v1633 = vld [vmem:[%s1346 + $0xaa] sm:$0xff]
        %v1634 = vld [vmem:[%s1346 + $0xb2] sm:$0xff]
        %v1635 = vld [vmem:[%s1346 + $0xc2] sm:$0xff]
        %v1636 = vld [vmem:[%s1346 + $0xca] sm:$0xff]
        %v1637 = vld [vmem:[%s1346 + $0xda] sm:$0xff]
        %v1638 = vld [vmem:[%s1346 + $0xe2] sm:$0xff]
        %v1639 = vld [vmem:[%s1346 + $0xf2] sm:$0xff]
        %v1640 = vld [vmem:[%s1346 + $0xfa] sm:$0xff]
        %v1641 = vld [vmem:[%s1346 + $0x10a] sm:$0xff]
        %v1642 = vld [vmem:[%s1346 + $0x112] sm:$0xff]
        %v1643 = vld [vmem:[%s1346 + $0x122] sm:$0xff]
        %v1644 = vld [vmem:[%s1346 + $0x12a] sm:$0xff]
        %v1645 = vld [vmem:[%s1346 + $0x13a] sm:$0xff]
        %v1646 = vld [vmem:[%s1346 + $0x142] sm:$0xff]
        %v1647 = vld [vmem:[%s1346 + $0x152] sm:$0xff]
        %v1648 = vld [vmem:[%s1346 + $0x15a] sm:$0xff]
        %v1649 = vld [vmem:[%s1346 + $0x16a] sm:$0xff]
        %v1650 = vld [vmem:[%s1346 + $0x172] sm:$0xff]
        %v1651 = vpack.c.bf16 %v1620, %v1619
        %v1652 = vpack.c.bf16 %v1622, %v1621
        %v1653 = vpack.c.bf16 %v1624, %v1623
        %v1654 = vpack.c.bf16 %v1626, %v1625
        %v1655 = vpack.c.bf16 %v1628, %v1627
        %v1656 = vpack.c.bf16 %v1630, %v1629
        %v1657 = vpack.c.bf16 %v1632, %v1631
        %v1658 = vpack.c.bf16 %v1634, %v1633
        %v1659 = vpack.c.bf16 %v1636, %v1635
        %v1660 = vpack.c.bf16 %v1638, %v1637
        %v1661 = vpack.c.bf16 %v1640, %v1639
        %v1662 = vpack.c.bf16 %v1642, %v1641
        %v1663 = vpack.c.bf16 %v1644, %v1643
        %v1664 = vpack.c.bf16 %v1646, %v1645
        %v1665 = vpack.c.bf16 %v1648, %v1647
        %v1666 = vpack.c.bf16 %v1650, %v1649
        %s1667 = scalar_lea.vmem [#allocation2], 48
        %v1668 = vld [vmem:[%s1667] sm:$0xff]
        %v1669 = vld [vmem:[%s1667 + $0x8] sm:$0xff]
        %v1670 = vld [vmem:[%s1667 + $0x18] sm:$0xff]
        %v1671 = vld [vmem:[%s1667 + $0x20] sm:$0xff]
        %v1672 = vld [vmem:[%s1667 + $0x30] sm:$0xff]
        %v1673 = vld [vmem:[%s1667 + $0x38] sm:$0xff]
        %v1674 = vld [vmem:[%s1667 + $0x48] sm:$0xff]
        %v1675 = vld [vmem:[%s1667 + $0x50] sm:$0xff]
        %v1676 = vld [vmem:[%s1667 + $0x60] sm:$0xff]
        %v1677 = vld [vmem:[%s1667 + $0x68] sm:$0xff]
        %v1678 = vld [vmem:[%s1667 + $0x78] sm:$0xff]
        %v1679 = vld [vmem:[%s1667 + $0x80] sm:$0xff]
        %v1680 = vld [vmem:[%s1667 + $0x90] sm:$0xff]
        %v1681 = vld [vmem:[%s1667 + $0x98] sm:$0xff]
        %v1682 = vld [vmem:[%s1667 + $0xa8] sm:$0xff]
        %v1683 = vld [vmem:[%s1667 + $0xb0] sm:$0xff]
        %v1684 = vld [vmem:[%s1667 + $0xc0] sm:$0xff]
        %v1685 = vld [vmem:[%s1667 + $0xc8] sm:$0xff]
        %v1686 = vld [vmem:[%s1667 + $0xd8] sm:$0xff]
        %v1687 = vld [vmem:[%s1667 + $0xe0] sm:$0xff]
        %v1688 = vld [vmem:[%s1667 + $0xf0] sm:$0xff]
        %v1689 = vld [vmem:[%s1667 + $0xf8] sm:$0xff]
        %v1690 = vld [vmem:[%s1667 + $0x108] sm:$0xff]
        %v1691 = vld [vmem:[%s1667 + $0x110] sm:$0xff]
        %v1692 = vld [vmem:[%s1667 + $0x120] sm:$0xff]
        %v1693 = vld [vmem:[%s1667 + $0x128] sm:$0xff]
        %v1694 = vld [vmem:[%s1667 + $0x138] sm:$0xff]
        %v1695 = vld [vmem:[%s1667 + $0x140] sm:$0xff]
        %v1696 = vld [vmem:[%s1667 + $0x150] sm:$0xff]
        %v1697 = vld [vmem:[%s1667 + $0x158] sm:$0xff]
        %v1698 = vld [vmem:[%s1667 + $0x168] sm:$0xff]
        %v1699 = vld [vmem:[%s1667 + $0x170] sm:$0xff]
        %v1700 = vpack.c.bf16 %v1669, %v1668
        %v1701 = vpack.c.bf16 %v1671, %v1670
        %v1702 = vpack.c.bf16 %v1673, %v1672
        %v1703 = vpack.c.bf16 %v1675, %v1674
        %v1704 = vpack.c.bf16 %v1677, %v1676
        %v1705 = vpack.c.bf16 %v1679, %v1678
        %v1706 = vpack.c.bf16 %v1681, %v1680
        %v1707 = vpack.c.bf16 %v1683, %v1682
        %v1708 = vpack.c.bf16 %v1685, %v1684
        %v1709 = vpack.c.bf16 %v1687, %v1686
        %v1710 = vpack.c.bf16 %v1689, %v1688
        %v1711 = vpack.c.bf16 %v1691, %v1690
        %v1712 = vpack.c.bf16 %v1693, %v1692
        %v1713 = vpack.c.bf16 %v1695, %v1694
        %v1714 = vpack.c.bf16 %v1697, %v1696
        %v1715 = vpack.c.bf16 %v1699, %v1698
        %v1716 = vld [vmem:[%s1667 + $0x1] sm:$0xff]
        %v1717 = vld [vmem:[%s1667 + $0x9] sm:$0xff]
        %v1718 = vld [vmem:[%s1667 + $0x19] sm:$0xff]
        %v1719 = vld [vmem:[%s1667 + $0x21] sm:$0xff]
        %v1720 = vld [vmem:[%s1667 + $0x31] sm:$0xff]
        %v1721 = vld [vmem:[%s1667 + $0x39] sm:$0xff]
        %v1722 = vld [vmem:[%s1667 + $0x49] sm:$0xff]
        %v1723 = vld [vmem:[%s1667 + $0x51] sm:$0xff]
        %v1724 = vld [vmem:[%s1667 + $0x61] sm:$0xff]
        %v1725 = vld [vmem:[%s1667 + $0x69] sm:$0xff]
        %v1726 = vld [vmem:[%s1667 + $0x79] sm:$0xff]
        %v1727 = vld [vmem:[%s1667 + $0x81] sm:$0xff]
        %v1728 = vld [vmem:[%s1667 + $0x91] sm:$0xff]
        %v1729 = vld [vmem:[%s1667 + $0x99] sm:$0xff]
        %v1730 = vld [vmem:[%s1667 + $0xa9] sm:$0xff]
        %v1731 = vld [vmem:[%s1667 + $0xb1] sm:$0xff]
        %v1732 = vld [vmem:[%s1667 + $0xc1] sm:$0xff]
        %v1733 = vld [vmem:[%s1667 + $0xc9] sm:$0xff]
        %v1734 = vld [vmem:[%s1667 + $0xd9] sm:$0xff]
        %v1735 = vld [vmem:[%s1667 + $0xe1] sm:$0xff]
        %v1736 = vld [vmem:[%s1667 + $0xf1] sm:$0xff]
        %v1737 = vld [vmem:[%s1667 + $0xf9] sm:$0xff]
        %v1738 = vld [vmem:[%s1667 + $0x109] sm:$0xff]
        %v1739 = vld [vmem:[%s1667 + $0x111] sm:$0xff]
        %v1740 = vld [vmem:[%s1667 + $0x121] sm:$0xff]
        %v1741 = vld [vmem:[%s1667 + $0x129] sm:$0xff]
        %v1742 = vld [vmem:[%s1667 + $0x139] sm:$0xff]
        %v1743 = vld [vmem:[%s1667 + $0x141] sm:$0xff]
        %v1744 = vld [vmem:[%s1667 + $0x151] sm:$0xff]
        %v1745 = vld [vmem:[%s1667 + $0x159] sm:$0xff]
        %v1746 = vld [vmem:[%s1667 + $0x169] sm:$0xff]
        %v1747 = vld [vmem:[%s1667 + $0x171] sm:$0xff]
        %v1748 = vpack.c.bf16 %v1717, %v1716
        %v1749 = vpack.c.bf16 %v1719, %v1718
        %v1750 = vpack.c.bf16 %v1721, %v1720
        %v1751 = vpack.c.bf16 %v1723, %v1722
        %v1752 = vpack.c.bf16 %v1725, %v1724
        %v1753 = vpack.c.bf16 %v1727, %v1726
        %v1754 = vpack.c.bf16 %v1729, %v1728
        %v1755 = vpack.c.bf16 %v1731, %v1730
        %v1756 = vpack.c.bf16 %v1733, %v1732
        %v1757 = vpack.c.bf16 %v1735, %v1734
        %v1758 = vpack.c.bf16 %v1737, %v1736
        %v1759 = vpack.c.bf16 %v1739, %v1738
        %v1760 = vpack.c.bf16 %v1741, %v1740
        %v1761 = vpack.c.bf16 %v1743, %v1742
        %v1762 = vpack.c.bf16 %v1745, %v1744
        %v1763 = vpack.c.bf16 %v1747, %v1746
        %v1764 = vld [vmem:[%s1667 + $0x2] sm:$0xff]
        %v1765 = vld [vmem:[%s1667 + $0xa] sm:$0xff]
        %v1766 = vld [vmem:[%s1667 + $0x1a] sm:$0xff]
        %v1767 = vld [vmem:[%s1667 + $0x22] sm:$0xff]
        %v1768 = vld [vmem:[%s1667 + $0x32] sm:$0xff]
        %v1769 = vld [vmem:[%s1667 + $0x3a] sm:$0xff]
        %v1770 = vld [vmem:[%s1667 + $0x4a] sm:$0xff]
        %v1771 = vld [vmem:[%s1667 + $0x52] sm:$0xff]
        %v1772 = vld [vmem:[%s1667 + $0x62] sm:$0xff]
        %v1773 = vld [vmem:[%s1667 + $0x6a] sm:$0xff]
        %v1774 = vld [vmem:[%s1667 + $0x7a] sm:$0xff]
        %v1775 = vld [vmem:[%s1667 + $0x82] sm:$0xff]
        %v1776 = vld [vmem:[%s1667 + $0x92] sm:$0xff]
        %v1777 = vld [vmem:[%s1667 + $0x9a] sm:$0xff]
        %v1778 = vld [vmem:[%s1667 + $0xaa] sm:$0xff]
        %v1779 = vld [vmem:[%s1667 + $0xb2] sm:$0xff]
        %v1780 = vld [vmem:[%s1667 + $0xc2] sm:$0xff]
        %v1781 = vld [vmem:[%s1667 + $0xca] sm:$0xff]
        %v1782 = vld [vmem:[%s1667 + $0xda] sm:$0xff]
        %v1783 = vld [vmem:[%s1667 + $0xe2] sm:$0xff]
        %v1784 = vld [vmem:[%s1667 + $0xf2] sm:$0xff]
        %v1785 = vld [vmem:[%s1667 + $0xfa] sm:$0xff]
        %v1786 = vld [vmem:[%s1667 + $0x10a] sm:$0xff]
        %v1787 = vld [vmem:[%s1667 + $0x112] sm:$0xff]
        %v1788 = vld [vmem:[%s1667 + $0x122] sm:$0xff]
        %v1789 = vld [vmem:[%s1667 + $0x12a] sm:$0xff]
        %v1790 = vld [vmem:[%s1667 + $0x13a] sm:$0xff]
        %v1791 = vld [vmem:[%s1667 + $0x142] sm:$0xff]
        %v1792 = vld [vmem:[%s1667 + $0x152] sm:$0xff]
        %v1793 = vld [vmem:[%s1667 + $0x15a] sm:$0xff]
        %v1794 = vld [vmem:[%s1667 + $0x16a] sm:$0xff]
        %v1795 = vld [vmem:[%s1667 + $0x172] sm:$0xff]
        %v1796 = vpack.c.bf16 %v1765, %v1764
        %v1797 = vpack.c.bf16 %v1767, %v1766
        %v1798 = vpack.c.bf16 %v1769, %v1768
        %v1799 = vpack.c.bf16 %v1771, %v1770
        %v1800 = vpack.c.bf16 %v1773, %v1772
        %v1801 = vpack.c.bf16 %v1775, %v1774
        %v1802 = vpack.c.bf16 %v1777, %v1776
        %v1803 = vpack.c.bf16 %v1779, %v1778
        %v1804 = vpack.c.bf16 %v1781, %v1780
        %v1805 = vpack.c.bf16 %v1783, %v1782
        %v1806 = vpack.c.bf16 %v1785, %v1784
        %v1807 = vpack.c.bf16 %v1787, %v1786
        %v1808 = vpack.c.bf16 %v1789, %v1788
        %v1809 = vpack.c.bf16 %v1791, %v1790
        %v1810 = vpack.c.bf16 %v1793, %v1792
        %v1811 = vpack.c.bf16 %v1795, %v1794
        %v1812 = vld [vmem:[#allocation8] sm:$0xf]
        %v1813 = vld [vmem:[#allocation8 + $0x4] sm:$0xf]
        %v1814 = vld [vmem:[#allocation8 + $0x8] sm:$0xf]
        %v1815 = vld [vmem:[#allocation8 + $0xc] sm:$0xf]
        %v1816 = vld [vmem:[#allocation8 + $0x10] sm:$0xf]
        %v1817 = vld [vmem:[#allocation8 + $0x14] sm:$0xf]
        %v1818 = vld [vmem:[#allocation8 + $0x18] sm:$0xf]
        %v1819 = vld [vmem:[#allocation8 + $0x1c] sm:$0xf]
        %v1820 = vld [vmem:[#allocation8 + $0x20] sm:$0xf]
        %v1821 = vld [vmem:[#allocation8 + $0x24] sm:$0xf]
        %v1822 = vld [vmem:[#allocation8 + $0x28] sm:$0xf]
        %v1823 = vld [vmem:[#allocation8 + $0x2c] sm:$0xf]
        %v1824 = vld [vmem:[#allocation8 + $0x30] sm:$0xf]
        %v1825 = vld [vmem:[#allocation8 + $0x34] sm:$0xf]
        %v1826 = vld [vmem:[#allocation8 + $0x38] sm:$0xf]
        %v1827 = vld [vmem:[#allocation8 + $0x3c] sm:$0xf]
        %v1828 = vld [vmem:[#allocation8 + $0x40] sm:$0xf]
        %v1829 = vld [vmem:[#allocation8 + $0x44] sm:$0xf]
        %v1830 = vld [vmem:[#allocation8 + $0x48] sm:$0xf]
        %v1831 = vld [vmem:[#allocation8 + $0x4c] sm:$0xf]
        %v1832 = vld [vmem:[#allocation8 + $0x50] sm:$0xf]
        %v1833 = vld [vmem:[#allocation8 + $0x54] sm:$0xf]
        %v1834 = vld [vmem:[#allocation8 + $0x58] sm:$0xf]
        %v1835 = vld [vmem:[#allocation8 + $0x5c] sm:$0xf]
        %v1836 = vld [vmem:[#allocation8 + $0x60] sm:$0xf]
        %v1837 = vld [vmem:[#allocation8 + $0x64] sm:$0xf]
        %v1838 = vld [vmem:[#allocation8 + $0x68] sm:$0xf]
        %v1839 = vld [vmem:[#allocation8 + $0x6c] sm:$0xf]
        %v1840 = vld [vmem:[#allocation8 + $0x70] sm:$0xf]
        %v1841 = vld [vmem:[#allocation8 + $0x74] sm:$0xf]
        %v1842 = vld [vmem:[#allocation8 + $0x78] sm:$0xf]
        %v1843 = vld [vmem:[#allocation8 + $0x7c] sm:$0xf]
        %v1844 = vld [vmem:[#allocation8 + $0x80] sm:$0xf]
        %v1845 = vld [vmem:[#allocation8 + $0x84] sm:$0xf]
        %v1846 = vld [vmem:[#allocation8 + $0x88] sm:$0xf]
        %v1847 = vld [vmem:[#allocation8 + $0x8c] sm:$0xf]
        %v1848 = vld [vmem:[#allocation8 + $0x90] sm:$0xf]
        %v1849 = vld [vmem:[#allocation8 + $0x94] sm:$0xf]
        %v1850 = vld [vmem:[#allocation8 + $0x98] sm:$0xf]
        %v1851 = vld [vmem:[#allocation8 + $0x9c] sm:$0xf]
        %v1852 = vld [vmem:[#allocation8 + $0xa0] sm:$0xf]
        %v1853 = vld [vmem:[#allocation8 + $0xa4] sm:$0xf]
        %v1854 = vld [vmem:[#allocation8 + $0xa8] sm:$0xf]
        %v1855 = vld [vmem:[#allocation8 + $0xac] sm:$0xf]
        %v1856 = vld [vmem:[#allocation8 + $0xb0] sm:$0xf]
        %v1857 = vld [vmem:[#allocation8 + $0xb4] sm:$0xf]
        %v1858 = vld [vmem:[#allocation8 + $0xb8] sm:$0xf]
        %v1859 = vld [vmem:[#allocation8 + $0xbc] sm:$0xf]
        %v1860 = vld [vmem:[#allocation8 + $0xc0] sm:$0xf]
        %v1861 = vld [vmem:[#allocation8 + $0xc4] sm:$0xf]
        %v1862 = vld [vmem:[#allocation8 + $0xc8] sm:$0xf]
        %v1863 = vld [vmem:[#allocation8 + $0xcc] sm:$0xf]
        %v1864 = vld [vmem:[#allocation8 + $0xd0] sm:$0xf]
        %v1865 = vld [vmem:[#allocation8 + $0xd4] sm:$0xf]
        %v1866 = vld [vmem:[#allocation8 + $0xd8] sm:$0xf]
        %v1867 = vld [vmem:[#allocation8 + $0xdc] sm:$0xf]
        %v1868 = vld [vmem:[#allocation8 + $0xe0] sm:$0xf]
        %v1869 = vld [vmem:[#allocation8 + $0xe4] sm:$0xf]
        %v1870 = vld [vmem:[#allocation8 + $0xe8] sm:$0xf]
        %v1871 = vld [vmem:[#allocation8 + $0xec] sm:$0xf]
        %v1872 = vld [vmem:[#allocation8 + $0xf0] sm:$0xf]
        %v1873 = vld [vmem:[#allocation8 + $0xf4] sm:$0xf]
        %v1874 = vld [vmem:[#allocation8 + $0xf8] sm:$0xf]
        %v1875 = vld [vmem:[#allocation8 + $0xfc] sm:$0xf]
        %v1876 = vld [vmem:[#allocation8 + $0x100] sm:$0xf]
        %v1877 = vld [vmem:[#allocation8 + $0x104] sm:$0xf]
        %v1878 = vld [vmem:[#allocation8 + $0x108] sm:$0xf]
        %v1879 = vld [vmem:[#allocation8 + $0x10c] sm:$0xf]
        %v1880 = vld [vmem:[#allocation8 + $0x110] sm:$0xf]
        %v1881 = vld [vmem:[#allocation8 + $0x114] sm:$0xf]
        %v1882 = vld [vmem:[#allocation8 + $0x118] sm:$0xf]
        %v1883 = vld [vmem:[#allocation8 + $0x11c] sm:$0xf]
        %v1884 = vld [vmem:[#allocation8 + $0x120] sm:$0xf]
        %v1885 = vld [vmem:[#allocation8 + $0x124] sm:$0xf]
        %v1886 = vld [vmem:[#allocation8 + $0x128] sm:$0xf]
        %v1887 = vld [vmem:[#allocation8 + $0x12c] sm:$0xf]
        %v1888 = vld [vmem:[#allocation8 + $0x130] sm:$0xf]
        %v1889 = vld [vmem:[#allocation8 + $0x134] sm:$0xf]
        %v1890 = vld [vmem:[#allocation8 + $0x138] sm:$0xf]
        %v1891 = vld [vmem:[#allocation8 + $0x13c] sm:$0xf]
        %v1892 = vld [vmem:[#allocation8 + $0x140] sm:$0xf]
        %v1893 = vld [vmem:[#allocation8 + $0x144] sm:$0xf]
        %v1894 = vld [vmem:[#allocation8 + $0x148] sm:$0xf]
        %v1895 = vld [vmem:[#allocation8 + $0x14c] sm:$0xf]
        %v1896 = vld [vmem:[#allocation8 + $0x150] sm:$0xf]
        %v1897 = vld [vmem:[#allocation8 + $0x154] sm:$0xf]
        %v1898 = vld [vmem:[#allocation8 + $0x158] sm:$0xf]
        %v1899 = vld [vmem:[#allocation8 + $0x15c] sm:$0xf]
        %v1900 = vld [vmem:[#allocation8 + $0x160] sm:$0xf]
        %v1901 = vld [vmem:[#allocation8 + $0x164] sm:$0xf]
        %v1902 = vld [vmem:[#allocation8 + $0x168] sm:$0xf]
        %v1903 = vld [vmem:[#allocation8 + $0x16c] sm:$0xf]
        %v1904 = vld [vmem:[#allocation8 + $0x170] sm:$0xf]
        %v1905 = vld [vmem:[#allocation8 + $0x174] sm:$0xf]
        %v1906 = vld [vmem:[#allocation8 + $0x178] sm:$0xf]
        %v1907 = vld [vmem:[#allocation8 + $0x17c] sm:$0xf]
        %v1908 = vld [vmem:[#allocation8 + $0x180] sm:$0xf]
        %v1909 = vld [vmem:[#allocation8 + $0x184] sm:$0xf]
        %v1910 = vld [vmem:[#allocation8 + $0x188] sm:$0xf]
        %v1911 = vld [vmem:[#allocation8 + $0x18c] sm:$0xf]
        %v1912 = vld [vmem:[#allocation8 + $0x190] sm:$0xf]
        %v1913 = vld [vmem:[#allocation8 + $0x194] sm:$0xf]
        %v1914 = vld [vmem:[#allocation8 + $0x198] sm:$0xf]
        %v1915 = vld [vmem:[#allocation8 + $0x19c] sm:$0xf]
        %v1916 = vld [vmem:[#allocation8 + $0x1a0] sm:$0xf]
        %v1917 = vld [vmem:[#allocation8 + $0x1a4] sm:$0xf]
        %v1918 = vld [vmem:[#allocation8 + $0x1a8] sm:$0xf]
        %v1919 = vld [vmem:[#allocation8 + $0x1ac] sm:$0xf]
        %v1920 = vld [vmem:[#allocation8 + $0x1b0] sm:$0xf]
        %v1921 = vld [vmem:[#allocation8 + $0x1b4] sm:$0xf]
        %v1922 = vld [vmem:[#allocation8 + $0x1b8] sm:$0xf]
        %v1923 = vld [vmem:[#allocation8 + $0x1bc] sm:$0xf]
        %v1924 = vld [vmem:[#allocation8 + $0x1c0] sm:$0xf]
        %v1925 = vld [vmem:[#allocation8 + $0x1c4] sm:$0xf]
        %v1926 = vld [vmem:[#allocation8 + $0x1c8] sm:$0xf]
        %v1927 = vld [vmem:[#allocation8 + $0x1cc] sm:$0xf]
        %v1928 = vld [vmem:[#allocation8 + $0x1d0] sm:$0xf]
        %v1929 = vld [vmem:[#allocation8 + $0x1d4] sm:$0xf]
        %v1930 = vld [vmem:[#allocation8 + $0x1d8] sm:$0xf]
        %v1931 = vld [vmem:[#allocation8 + $0x1dc] sm:$0xf]
        %v1932 = vld [vmem:[#allocation8 + $0x1e0] sm:$0xf]
        %v1933 = vld [vmem:[#allocation8 + $0x1e4] sm:$0xf]
        %v1934 = vld [vmem:[#allocation8 + $0x1e8] sm:$0xf]
        %v1935 = vld [vmem:[#allocation8 + $0x1ec] sm:$0xf]
        %v1936 = vld [vmem:[#allocation8 + $0x1f0] sm:$0xf]
        %v1937 = vld [vmem:[#allocation8 + $0x1f4] sm:$0xf]
        %v1938 = vld [vmem:[#allocation8 + $0x1f8] sm:$0xf]
        %v1939 = vld [vmem:[#allocation8 + $0x1fc] sm:$0xf]
        %v1940 = vld [vmem:[#allocation8 + $0x200] sm:$0xf]
        %v1941 = vld [vmem:[#allocation8 + $0x204] sm:$0xf]
        %v1942 = vld [vmem:[#allocation8 + $0x208] sm:$0xf]
        %v1943 = vld [vmem:[#allocation8 + $0x20c] sm:$0xf]
        %v1944 = vld [vmem:[#allocation8 + $0x210] sm:$0xf]
        %v1945 = vld [vmem:[#allocation8 + $0x214] sm:$0xf]
        %v1946 = vld [vmem:[#allocation8 + $0x218] sm:$0xf]
        %v1947 = vld [vmem:[#allocation8 + $0x21c] sm:$0xf]
        %v1948 = vld [vmem:[#allocation8 + $0x220] sm:$0xf]
        %v1949 = vld [vmem:[#allocation8 + $0x224] sm:$0xf]
        %v1950 = vld [vmem:[#allocation8 + $0x228] sm:$0xf]
        %v1951 = vld [vmem:[#allocation8 + $0x22c] sm:$0xf]
        %v1952 = vld [vmem:[#allocation8 + $0x230] sm:$0xf]
        %v1953 = vld [vmem:[#allocation8 + $0x234] sm:$0xf]
        %v1954 = vld [vmem:[#allocation8 + $0x238] sm:$0xf]
        %v1955 = vld [vmem:[#allocation8 + $0x23c] sm:$0xf]
        %v2100 = vunpack.c.l.b16 %v1812
        %v2101 = vunpack.c.l.b16 %v1813
        %v2102 = vunpack.c.l.b16 %v1814
        %v2103 = vunpack.c.l.b16 %v1815
        %v2104 = vunpack.c.l.b16 %v1816
        %v2105 = vunpack.c.l.b16 %v1817
        %v2106 = vunpack.c.l.b16 %v1818
        %v2107 = vunpack.c.l.b16 %v1819
        %v2108 = vunpack.c.l.b16 %v1820
        %v2109 = vunpack.c.l.b16 %v1821
        %v2110 = vunpack.c.l.b16 %v1822
        %v2111 = vunpack.c.l.b16 %v1823
        %v2112 = vunpack.c.l.b16 %v1824
        %v2113 = vunpack.c.l.b16 %v1825
        %v2114 = vunpack.c.l.b16 %v1826
        %v2115 = vunpack.c.l.b16 %v1827
        %v2116 = vunpack.c.l.b16 %v1828
        %v2117 = vunpack.c.l.b16 %v1829
        %v2118 = vunpack.c.l.b16 %v1830
        %v2119 = vunpack.c.l.b16 %v1831
        %v2120 = vunpack.c.l.b16 %v1832
        %v2121 = vunpack.c.l.b16 %v1833
        %v2122 = vunpack.c.l.b16 %v1834
        %v2123 = vunpack.c.l.b16 %v1835
        %v2124 = vunpack.c.l.b16 %v1836
        %v2125 = vunpack.c.l.b16 %v1837
        %v2126 = vunpack.c.l.b16 %v1838
        %v2127 = vunpack.c.l.b16 %v1839
        %v2128 = vunpack.c.l.b16 %v1840
        %v2129 = vunpack.c.l.b16 %v1841
        %v2130 = vunpack.c.l.b16 %v1842
        %v2131 = vunpack.c.l.b16 %v1843
        %v2132 = vunpack.c.l.b16 %v1844
        %v2133 = vunpack.c.l.b16 %v1845
        %v2134 = vunpack.c.l.b16 %v1846
        %v2135 = vunpack.c.l.b16 %v1847
        %v2136 = vunpack.c.l.b16 %v1848
        %v2137 = vunpack.c.l.b16 %v1849
        %v2138 = vunpack.c.l.b16 %v1850
        %v2139 = vunpack.c.l.b16 %v1851
        %v2140 = vunpack.c.l.b16 %v1852
        %v2141 = vunpack.c.l.b16 %v1853
        %v2142 = vunpack.c.l.b16 %v1854
        %v2143 = vunpack.c.l.b16 %v1855
        %v2144 = vunpack.c.l.b16 %v1856
        %v2145 = vunpack.c.l.b16 %v1857
        %v2146 = vunpack.c.l.b16 %v1858
        %v2147 = vunpack.c.l.b16 %v1859
        %v2148 = vunpack.c.l.b16 %v1860
        %v2149 = vunpack.c.l.b16 %v1861
        %v2150 = vunpack.c.l.b16 %v1862
        %v2151 = vunpack.c.l.b16 %v1863
        %v2152 = vunpack.c.l.b16 %v1864
        %v2153 = vunpack.c.l.b16 %v1865
        %v2154 = vunpack.c.l.b16 %v1866
        %v2155 = vunpack.c.l.b16 %v1867
        %v2156 = vunpack.c.l.b16 %v1868
        %v2157 = vunpack.c.l.b16 %v1869
        %v2158 = vunpack.c.l.b16 %v1870
        %v2159 = vunpack.c.l.b16 %v1871
        %v2160 = vunpack.c.l.b16 %v1872
        %v2161 = vunpack.c.l.b16 %v1873
        %v2162 = vunpack.c.l.b16 %v1874
        %v2163 = vunpack.c.l.b16 %v1875
        %v2164 = vunpack.c.l.b16 %v1876
        %v2165 = vunpack.c.l.b16 %v1877
        %v2166 = vunpack.c.l.b16 %v1878
        %v2167 = vunpack.c.l.b16 %v1879
        %v2168 = vunpack.c.l.b16 %v1880
        %v2169 = vunpack.c.l.b16 %v1881
        %v2170 = vunpack.c.l.b16 %v1882
        %v2171 = vunpack.c.l.b16 %v1883
        %v2172 = vunpack.c.l.b16 %v1884
        %v2173 = vunpack.c.l.b16 %v1885
        %v2174 = vunpack.c.l.b16 %v1886
        %v2175 = vunpack.c.l.b16 %v1887
        %v2176 = vunpack.c.l.b16 %v1888
        %v2177 = vunpack.c.l.b16 %v1889
        %v2178 = vunpack.c.l.b16 %v1890
        %v2179 = vunpack.c.l.b16 %v1891
        %v2180 = vunpack.c.l.b16 %v1892
        %v2181 = vunpack.c.l.b16 %v1893
        %v2182 = vunpack.c.l.b16 %v1894
        %v2183 = vunpack.c.l.b16 %v1895
        %v2184 = vunpack.c.l.b16 %v1896
        %v2185 = vunpack.c.l.b16 %v1897
        %v2186 = vunpack.c.l.b16 %v1898
        %v2187 = vunpack.c.l.b16 %v1899
        %v2188 = vunpack.c.l.b16 %v1900
        %v2189 = vunpack.c.l.b16 %v1901
        %v2190 = vunpack.c.l.b16 %v1902
        %v2191 = vunpack.c.l.b16 %v1903
        %v2192 = vunpack.c.l.b16 %v1904
        %v2193 = vunpack.c.l.b16 %v1905
        %v2194 = vunpack.c.l.b16 %v1906
        %v2195 = vunpack.c.l.b16 %v1907
        %v2196 = vunpack.c.l.b16 %v1908
        %v2197 = vunpack.c.l.b16 %v1909
        %v2198 = vunpack.c.l.b16 %v1910
        %v2199 = vunpack.c.l.b16 %v1911
        %v2200 = vunpack.c.l.b16 %v1912
        %v2201 = vunpack.c.l.b16 %v1913
        %v2202 = vunpack.c.l.b16 %v1914
        %v2203 = vunpack.c.l.b16 %v1915
        %v2204 = vunpack.c.l.b16 %v1916
        %v2205 = vunpack.c.l.b16 %v1917
        %v2206 = vunpack.c.l.b16 %v1918
        %v2207 = vunpack.c.l.b16 %v1919
        %v2208 = vunpack.c.l.b16 %v1920
        %v2209 = vunpack.c.l.b16 %v1921
        %v2210 = vunpack.c.l.b16 %v1922
        %v2211 = vunpack.c.l.b16 %v1923
        %v2212 = vunpack.c.l.b16 %v1924
        %v2213 = vunpack.c.l.b16 %v1925
        %v2214 = vunpack.c.l.b16 %v1926
        %v2215 = vunpack.c.l.b16 %v1927
        %v2216 = vunpack.c.l.b16 %v1928
        %v2217 = vunpack.c.l.b16 %v1929
        %v2218 = vunpack.c.l.b16 %v1930
        %v2219 = vunpack.c.l.b16 %v1931
        %v2220 = vunpack.c.l.b16 %v1932
        %v2221 = vunpack.c.l.b16 %v1933
        %v2222 = vunpack.c.l.b16 %v1934
        %v2223 = vunpack.c.l.b16 %v1935
        %v2224 = vunpack.c.l.b16 %v1936
        %v2225 = vunpack.c.l.b16 %v1937
        %v2226 = vunpack.c.l.b16 %v1938
        %v2227 = vunpack.c.l.b16 %v1939
        %v2228 = vunpack.c.l.b16 %v1940
        %v2229 = vunpack.c.l.b16 %v1941
        %v2230 = vunpack.c.l.b16 %v1942
        %v2231 = vunpack.c.l.b16 %v1943
        %v2232 = vunpack.c.l.b16 %v1944
        %v2233 = vunpack.c.l.b16 %v1945
        %v2234 = vunpack.c.l.b16 %v1946
        %v2235 = vunpack.c.l.b16 %v1947
        %v2236 = vunpack.c.l.b16 %v1948
        %v2237 = vunpack.c.l.b16 %v1949
        %v2238 = vunpack.c.l.b16 %v1950
        %v2239 = vunpack.c.l.b16 %v1951
        %v2240 = vunpack.c.l.b16 %v1952
        %v2241 = vunpack.c.l.b16 %v1953
        %v2242 = vunpack.c.l.b16 %v1954
        %v2243 = vunpack.c.l.b16 %v1955
        %v2244 = vpack.c.b16 %v2101, %v2100
        %v2245 = vpack.c.b16 %v2103, %v2102
        %v2246 = vpack.c.b16 %v2105, %v2104
        %v2247 = vpack.c.b16 %v2107, %v2106
        %v2248 = vpack.c.b16 %v2109, %v2108
        %v2249 = vpack.c.b16 %v2111, %v2110
        %v2250 = vpack.c.b16 %v2113, %v2112
        %v2251 = vpack.c.b16 %v2115, %v2114
        %v2252 = vpack.c.b16 %v2117, %v2116
        %v2253 = vpack.c.b16 %v2119, %v2118
        %v2254 = vpack.c.b16 %v2121, %v2120
        %v2255 = vpack.c.b16 %v2123, %v2122
        %v2256 = vpack.c.b16 %v2125, %v2124
        %v2257 = vpack.c.b16 %v2127, %v2126
        %v2258 = vpack.c.b16 %v2129, %v2128
        %v2259 = vpack.c.b16 %v2131, %v2130
        %v2260 = vpack.c.b16 %v2133, %v2132
        %v2261 = vpack.c.b16 %v2135, %v2134
        %v2262 = vpack.c.b16 %v2137, %v2136
        %v2263 = vpack.c.b16 %v2139, %v2138
        %v2264 = vpack.c.b16 %v2141, %v2140
        %v2265 = vpack.c.b16 %v2143, %v2142
        %v2266 = vpack.c.b16 %v2145, %v2144
        %v2267 = vpack.c.b16 %v2147, %v2146
        %v2268 = vpack.c.b16 %v2149, %v2148
        %v2269 = vpack.c.b16 %v2151, %v2150
        %v2270 = vpack.c.b16 %v2153, %v2152
        %v2271 = vpack.c.b16 %v2155, %v2154
        %v2272 = vpack.c.b16 %v2157, %v2156
        %v2273 = vpack.c.b16 %v2159, %v2158
        %v2274 = vpack.c.b16 %v2161, %v2160
        %v2275 = vpack.c.b16 %v2163, %v2162
        %v2276 = vpack.c.b16 %v2165, %v2164
        %v2277 = vpack.c.b16 %v2167, %v2166
        %v2278 = vpack.c.b16 %v2169, %v2168
        %v2279 = vpack.c.b16 %v2171, %v2170
        %v2280 = vpack.c.b16 %v2173, %v2172
        %v2281 = vpack.c.b16 %v2175, %v2174
        %v2282 = vpack.c.b16 %v2177, %v2176
        %v2283 = vpack.c.b16 %v2179, %v2178
        %v2284 = vpack.c.b16 %v2181, %v2180
        %v2285 = vpack.c.b16 %v2183, %v2182
        %v2286 = vpack.c.b16 %v2185, %v2184
        %v2287 = vpack.c.b16 %v2187, %v2186
        %v2288 = vpack.c.b16 %v2189, %v2188
        %v2289 = vpack.c.b16 %v2191, %v2190
        %v2290 = vpack.c.b16 %v2193, %v2192
        %v2291 = vpack.c.b16 %v2195, %v2194
        %v2292 = vpack.c.b16 %v2197, %v2196
        %v2293 = vpack.c.b16 %v2199, %v2198
        %v2294 = vpack.c.b16 %v2201, %v2200
        %v2295 = vpack.c.b16 %v2203, %v2202
        %v2296 = vpack.c.b16 %v2205, %v2204
        %v2297 = vpack.c.b16 %v2207, %v2206
        %v2298 = vpack.c.b16 %v2209, %v2208
        %v2299 = vpack.c.b16 %v2211, %v2210
        %v2300 = vpack.c.b16 %v2213, %v2212
        %v2301 = vpack.c.b16 %v2215, %v2214
        %v2302 = vpack.c.b16 %v2217, %v2216
        %v2303 = vpack.c.b16 %v2219, %v2218
        %v2304 = vpack.c.b16 %v2221, %v2220
        %v2305 = vpack.c.b16 %v2223, %v2222
        %v2306 = vpack.c.b16 %v2225, %v2224
        %v2307 = vpack.c.b16 %v2227, %v2226
        %v2308 = vpack.c.b16 %v2229, %v2228
        %v2309 = vpack.c.b16 %v2231, %v2230
        %v2310 = vpack.c.b16 %v2233, %v2232
        %v2311 = vpack.c.b16 %v2235, %v2234
        %v2312 = vpack.c.b16 %v2237, %v2236
        %v2313 = vpack.c.b16 %v2239, %v2238
        %v2314 = vpack.c.b16 %v2241, %v2240
        %v2315 = vpack.c.b16 %v2243, %v2242
        %2388 = vmatprep.subr.bf16.mxu0 0
        %2389 = vmatpush1.bf16.msra.mxu0 %v2244
        %2390 = vmatprep.subr.bf16.mxu0 0
        %2391 = vmatpush1.bf16.msra.mxu0 %v2245
        %2392 = vmatprep.subr.bf16.mxu0 0
        %2393 = vmatpush1.bf16.msra.mxu0 %v2246
        %2394 = vmatprep.subr.bf16.mxu0 0
        %2395 = vmatpush1.bf16.msra.mxu0 %v2247
        %2396 = vmatprep.subr.bf16.mxu0 0
        %2397 = vmatpush1.bf16.msra.mxu0 %v2248
        %2398 = vmatprep.subr.bf16.mxu0 0
        %2399 = vmatpush1.bf16.msra.mxu0 %v2249
        %2400 = vmatprep.subr.bf16.mxu0 0
        %2401 = vmatpush1.bf16.msra.mxu0 %v2250
        %2402 = vmatprep.subr.bf16.mxu0 0
        %2403 = vmatpush1.bf16.msra.mxu0 %v2251
        %2404 = vmatprep.subr.bf16.mxu0 0
        %2405 = vmatpush1.bf16.msra.mxu0 %v2252
        %2406 = vmatprep.subr.bf16.mxu0 0
        %2407 = vmatpush1.bf16.msra.mxu0 %v2253
        %2408 = vmatprep.subr.bf16.mxu0 0
        %2409 = vmatpush1.bf16.msra.mxu0 %v2254
        %2410 = vmatprep.subr.bf16.mxu0 0
        %2411 = vmatpush1.bf16.msra.mxu0 %v2255
        %2412 = vmatprep.subr.bf16.mxu0 0
        %2413 = vmatpush1.bf16.msra.mxu0 %v2256
        %2414 = vmatprep.subr.bf16.mxu0 0
        %2415 = vmatpush1.bf16.msra.mxu0 %v2257
        %2416 = vmatprep.subr.bf16.mxu0 0
        %2417 = vmatpush1.bf16.msra.mxu0 %v2258
        %2418 = vmatprep.subr.bf16.mxu0 0
        %2419 = vmatpush1.bf16.msra.mxu0 %v2259
        %2420 = vmatprep.mubr.bf16.mxu0 %v1459
        %2421 = vmatmul.mubr.bf16.gmra.mrb[0].mxu0 %v1411
        %v2422 = vpop.f32.mrb[0].mxu0
        %v2423 = vadd.f32 0.0, %v2422
        %v2424 = vpop.f32.mrb[0].mxu0
        %v2425 = vpop.f32.mrb[0].mxu0
        %v2426 = vadd.f32 0.0, %v2425
        %v2427 = vpop.f32.mrb[0].mxu0
        %2428 = vmatprep.mubr.bf16.mxu0 %v1460
        %2429 = vmatmul.mubr.bf16.gmra.mrb[0].mxu0 %v1412
        %v2430 = vpop.f32.mrb[0].mxu0
        %v2431 = vadd.f32 0.0, %v2430
        %v2432 = vpop.f32.mrb[0].mxu0
        %v2433 = vpop.f32.mrb[0].mxu0
        %v2434 = vadd.f32 0.0, %v2433
        %v2435 = vpop.f32.mrb[0].mxu0
        %2436 = vmatprep.mubr.bf16.mxu0 %v1461
        %2437 = vmatmul.mubr.bf16.gmra.mrb[0].mxu0 %v1413
        %v2438 = vpop.f32.mrb[0].mxu0
        %v2439 = vadd.f32 0.0, %v2438
        %v2440 = vpop.f32.mrb[0].mxu0
        %v2441 = vpop.f32.mrb[0].mxu0
        %v2442 = vadd.f32 0.0, %v2441
        %v2443 = vpop.f32.mrb[0].mxu0
        %2444 = vmatprep.mubr.bf16.mxu0 %v1462
        %2445 = vmatmul.mubr.bf16.gmra.mrb[0].mxu0 %v1414
        %v2446 = vpop.f32.mrb[0].mxu0
        %v2447 = vadd.f32 0.0, %v2446
        %v2448 = vpop.f32.mrb[0].mxu0
        %v2449 = vpop.f32.mrb[0].mxu0
        %v2450 = vadd.f32 0.0, %v2449
        %v2451 = vpop.f32.mrb[0].mxu0
        %2452 = vmatprep.mubr.bf16.mxu0 %v1463
        %2453 = vmatmul.mubr.bf16.gmra.mrb[0].mxu0 %v1415
        %v2454 = vpop.f32.mrb[0].mxu0
        %v2455 = vadd.f32 0.0, %v2454
        %v2456 = vpop.f32.mrb[0].mxu0
        %v2457 = vpop.f32.mrb[0].mxu0
        %v2458 = vadd.f32 0.0, %v2457
        %v2459 = vpop.f32.mrb[0].mxu0
        %2460 = vmatprep.mubr.bf16.mxu0 %v1464
        %2461 = vmatmul.mubr.bf16.gmra.mrb[0].mxu0 %v1416
        %v2462 = vpop.f32.mrb[0].mxu0
        %v2463 = vadd.f32 0.0, %v2462
        %v2464 = vpop.f32.mrb[0].mxu0
        %v2465 = vpop.f32.mrb[0].mxu0
        %v2466 = vadd.f32 0.0, %v2465
        %v2467 = vpop.f32.mrb[0].mxu0
        %2468 = vmatprep.mubr.bf16.mxu0 %v1465
        %2469 = vmatmul.mubr.bf16.gmra.mrb[0].mxu0 %v1417
        %v2470 = vpop.f32.mrb[0].mxu0
        %v2471 = vadd.f32 0.0, %v2470
        %v2472 = vpop.f32.mrb[0].mxu0
        %v2473 = vpop.f32.mrb[0].mxu0
        %v2474 = vadd.f32 0.0, %v2473
        %v2475 = vpop.f32.mrb[0].mxu0
        %2476 = vmatprep.mubr.bf16.mxu0 %v1466
        %2477 = vmatmul.mubr.bf16.gmra.mrb[0].mxu0 %v1418
        %v2478 = vpop.f32.mrb[0].mxu0
        %v2479 = vadd.f32 0.0, %v2478
        %v2480 = vpop.f32.mrb[0].mxu0
        %v2481 = vpop.f32.mrb[0].mxu0
        %v2482 = vadd.f32 0.0, %v2481
        %v2483 = vpop.f32.mrb[0].mxu0
        %2484 = vmatprep.mubr.bf16.mxu0 %v1467
        %2485 = vmatmul.mubr.bf16.gmra.mrb[0].mxu0 %v1419
        %v2486 = vpop.f32.mrb[0].mxu0
        %v2487 = vadd.f32 0.0, %v2486
        %v2488 = vpop.f32.mrb[0].mxu0
        %v2489 = vpop.f32.mrb[0].mxu0
        %v2490 = vadd.f32 0.0, %v2489
        %v2491 = vpop.f32.mrb[0].mxu0
        %2492 = vmatprep.mubr.bf16.mxu0 %v1468
        %2493 = vmatmul.mubr.bf16.gmra.mrb[0].mxu0 %v1420
        %v2494 = vpop.f32.mrb[0].mxu0
        %v2495 = vadd.f32 0.0, %v2494
        %v2496 = vpop.f32.mrb[0].mxu0
        %v2497 = vpop.f32.mrb[0].mxu0
        %v2498 = vadd.f32 0.0, %v2497
        %v2499 = vpop.f32.mrb[0].mxu0
        %2500 = vmatprep.mubr.bf16.mxu0 %v1469
        %2501 = vmatmul.mubr.bf16.gmra.mrb[0].mxu0 %v1421
        %v2502 = vpop.f32.mrb[0].mxu0
        %v2503 = vadd.f32 0.0, %v2502
        %v2504 = vpop.f32.mrb[0].mxu0
        %v2505 = vpop.f32.mrb[0].mxu0
        %v2506 = vadd.f32 0.0, %v2505
        %v2507 = vpop.f32.mrb[0].mxu0
        %2508 = vmatprep.mubr.bf16.mxu0 %v1470
        %2509 = vmatmul.mubr.bf16.gmra.mrb[0].mxu0 %v1422
        %v2510 = vpop.f32.mrb[0].mxu0
        %v2511 = vadd.f32 0.0, %v2510
        %v2512 = vpop.f32.mrb[0].mxu0
        %v2513 = vpop.f32.mrb[0].mxu0
        %v2514 = vadd.f32 0.0, %v2513
        %v2515 = vpop.f32.mrb[0].mxu0
        %2516 = vmatprep.mubr.bf16.mxu0 %v1471
        %2517 = vmatmul.mubr.bf16.gmra.mrb[0].mxu0 %v1423
        %v2518 = vpop.f32.mrb[0].mxu0
        %v2519 = vadd.f32 0.0, %v2518
        %v2520 = vpop.f32.mrb[0].mxu0
        %v2521 = vpop.f32.mrb[0].mxu0
        %v2522 = vadd.f32 0.0, %v2521
        %v2523 = vpop.f32.mrb[0].mxu0
        %2524 = vmatprep.mubr.bf16.mxu0 %v1472
        %2525 = vmatmul.mubr.bf16.gmra.mrb[0].mxu0 %v1424
        %v2526 = vpop.f32.mrb[0].mxu0
        %v2527 = vadd.f32 0.0, %v2526
        %v2528 = vpop.f32.mrb[0].mxu0
        %v2529 = vpop.f32.mrb[0].mxu0
        %v2530 = vadd.f32 0.0, %v2529
        %v2531 = vpop.f32.mrb[0].mxu0
        %2532 = vmatprep.mubr.bf16.mxu0 %v1473
        %2533 = vmatmul.mubr.bf16.gmra.mrb[0].mxu0 %v1425
        %v2534 = vpop.f32.mrb[0].mxu0
        %v2535 = vadd.f32 0.0, %v2534
        %v2536 = vpop.f32.mrb[0].mxu0
        %v2537 = vpop.f32.mrb[0].mxu0
        %v2538 = vadd.f32 0.0, %v2537
        %v2539 = vpop.f32.mrb[0].mxu0
        %2540 = vmatprep.mubr.bf16.mxu0 %v1474
        %2541 = vmatmul.mubr.bf16.gmra.mrb[0].mxu0 %v1426
        %v2542 = vpop.f32.mrb[0].mxu0
        %v2543 = vadd.f32 0.0, %v2542
        %v2544 = vpop.f32.mrb[0].mxu0
        %v2545 = vpop.f32.mrb[0].mxu0
        %v2546 = vadd.f32 0.0, %v2545
        %v2547 = vpop.f32.mrb[0].mxu0
        %2548 = vdwg.mxu0
        %2549 = vmatprep.subr.bf16.mxu0 0
        %2550 = vmatpush1.bf16.msra.mxu0 %v2260
        %2551 = vmatprep.subr.bf16.mxu0 0
        %2552 = vmatpush1.bf16.msra.mxu0 %v2261
        %2553 = vmatprep.subr.bf16.mxu0 0
        %2554 = vmatpush1.bf16.msra.mxu0 %v2262
        %2555 = vmatprep.subr.bf16.mxu0 0
        %2556 = vmatpush1.bf16.msra.mxu0 %v2263
        %2557 = vmatprep.subr.bf16.mxu0 0
        %2558 = vmatpush1.bf16.msra.mxu0 %v2264
        %2559 = vmatprep.subr.bf16.mxu0 0
        %2560 = vmatpush1.bf16.msra.mxu0 %v2265
        %2561 = vmatprep.subr.bf16.mxu0 0
        %2562 = vmatpush1.bf16.msra.mxu0 %v2266
        %2563 = vmatprep.subr.bf16.mxu0 0
        %2564 = vmatpush1.bf16.msra.mxu0 %v2267
        %2565 = vmatprep.subr.bf16.mxu0 0
        %2566 = vmatpush1.bf16.msra.mxu0 %v2268
        %2567 = vmatprep.subr.bf16.mxu0 0
        %2568 = vmatpush1.bf16.msra.mxu0 %v2269
        %2569 = vmatprep.subr.bf16.mxu0 0
        %2570 = vmatpush1.bf16.msra.mxu0 %v2270
        %2571 = vmatprep.subr.bf16.mxu0 0
        %2572 = vmatpush1.bf16.msra.mxu0 %v2271
        %2573 = vmatprep.subr.bf16.mxu0 0
        %2574 = vmatpush1.bf16.msra.mxu0 %v2272
        %2575 = vmatprep.subr.bf16.mxu0 0
        %2576 = vmatpush1.bf16.msra.mxu0 %v2273
        %2577 = vmatprep.subr.bf16.mxu0 0
        %2578 = vmatpush1.bf16.msra.mxu0 %v2274
        %2579 = vmatprep.subr.bf16.mxu0 0
        %2580 = vmatpush1.bf16.msra.mxu0 %v2275
        %2581 = vmatprep.mubr.bf16.mxu0 %v1555
        %2582 = vmatmul.mubr.bf16.gmra.mrb[0].mxu0 %v1507
        %v2583 = vpop.f32.mrb[0].mxu0
        %v2584 = vadd.f32 %v2423, %v2583
        %v2585 = vpop.f32.mrb[0].mxu0
        %v2586 = vpop.f32.mrb[0].mxu0
        %v2587 = vadd.f32 %v2426, %v2586
        %v2588 = vpop.f32.mrb[0].mxu0
        %2589 = vmatprep.mubr.bf16.mxu0 %v1556
        %2590 = vmatmul.mubr.bf16.gmra.mrb[0].mxu0 %v1508
        %v2591 = vpop.f32.mrb[0].mxu0
        %v2592 = vadd.f32 %v2431, %v2591
        %v2593 = vpop.f32.mrb[0].mxu0
        %v2594 = vpop.f32.mrb[0].mxu0
        %v2595 = vadd.f32 %v2434, %v2594
        %v2596 = vpop.f32.mrb[0].mxu0
        %2597 = vmatprep.mubr.bf16.mxu0 %v1557
        %2598 = vmatmul.mubr.bf16.gmra.mrb[0].mxu0 %v1509
        %v2599 = vpop.f32.mrb[0].mxu0
        %v2600 = vadd.f32 %v2439, %v2599
        %v2601 = vpop.f32.mrb[0].mxu0
        %v2602 = vpop.f32.mrb[0].mxu0
        %v2603 = vadd.f32 %v2442, %v2602
        %v2604 = vpop.f32.mrb[0].mxu0
        %2605 = vmatprep.mubr.bf16.mxu0 %v1558
        %2606 = vmatmul.mubr.bf16.gmra.mrb[0].mxu0 %v1510
        %v2607 = vpop.f32.mrb[0].mxu0
        %v2608 = vadd.f32 %v2447, %v2607
        %v2609 = vpop.f32.mrb[0].mxu0
        %v2610 = vpop.f32.mrb[0].mxu0
        %v2611 = vadd.f32 %v2450, %v2610
        %v2612 = vpop.f32.mrb[0].mxu0
        %2613 = vmatprep.mubr.bf16.mxu0 %v1559
        %2614 = vmatmul.mubr.bf16.gmra.mrb[0].mxu0 %v1511
        %v2615 = vpop.f32.mrb[0].mxu0
        %v2616 = vadd.f32 %v2455, %v2615
        %v2617 = vpop.f32.mrb[0].mxu0
        %v2618 = vpop.f32.mrb[0].mxu0
        %v2619 = vadd.f32 %v2458, %v2618
        %v2620 = vpop.f32.mrb[0].mxu0
        %2621 = vmatprep.mubr.bf16.mxu0 %v1560
        %2622 = vmatmul.mubr.bf16.gmra.mrb[0].mxu0 %v1512
        %v2623 = vpop.f32.mrb[0].mxu0
        %v2624 = vadd.f32 %v2463, %v2623
        %v2625 = vpop.f32.mrb[0].mxu0
        %v2626 = vpop.f32.mrb[0].mxu0
        %v2627 = vadd.f32 %v2466, %v2626
        %v2628 = vpop.f32.mrb[0].mxu0
        %2629 = vmatprep.mubr.bf16.mxu0 %v1561
        %2630 = vmatmul.mubr.bf16.gmra.mrb[0].mxu0 %v1513
        %v2631 = vpop.f32.mrb[0].mxu0
        %v2632 = vadd.f32 %v2471, %v2631
        %v2633 = vpop.f32.mrb[0].mxu0
        %v2634 = vpop.f32.mrb[0].mxu0
        %v2635 = vadd.f32 %v2474, %v2634
        %v2636 = vpop.f32.mrb[0].mxu0
        %2637 = vmatprep.mubr.bf16.mxu0 %v1562
        %2638 = vmatmul.mubr.bf16.gmra.mrb[0].mxu0 %v1514
        %v2639 = vpop.f32.mrb[0].mxu0
        %v2640 = vadd.f32 %v2479, %v2639
        %v2641 = vpop.f32.mrb[0].mxu0
        %v2642 = vpop.f32.mrb[0].mxu0
        %v2643 = vadd.f32 %v2482, %v2642
        %v2644 = vpop.f32.mrb[0].mxu0
        %2645 = vmatprep.mubr.bf16.mxu0 %v1563
        %2646 = vmatmul.mubr.bf16.gmra.mrb[0].mxu0 %v1515
        %v2647 = vpop.f32.mrb[0].mxu0
        %v2648 = vadd.f32 %v2487, %v2647
        %v2649 = vpop.f32.mrb[0].mxu0
        %v2650 = vpop.f32.mrb[0].mxu0
        %v2651 = vadd.f32 %v2490, %v2650
        %v2652 = vpop.f32.mrb[0].mxu0
        %2653 = vmatprep.mubr.bf16.mxu0 %v1564
        %2654 = vmatmul.mubr.bf16.gmra.mrb[0].mxu0 %v1516
        %v2655 = vpop.f32.mrb[0].mxu0
        %v2656 = vadd.f32 %v2495, %v2655
        %v2657 = vpop.f32.mrb[0].mxu0
        %v2658 = vpop.f32.mrb[0].mxu0
        %v2659 = vadd.f32 %v2498, %v2658
        %v2660 = vpop.f32.mrb[0].mxu0
        %2661 = vmatprep.mubr.bf16.mxu0 %v1565
        %2662 = vmatmul.mubr.bf16.gmra.mrb[0].mxu0 %v1517
        %v2663 = vpop.f32.mrb[0].mxu0
        %v2664 = vadd.f32 %v2503, %v2663
        %v2665 = vpop.f32.mrb[0].mxu0
        %v2666 = vpop.f32.mrb[0].mxu0
        %v2667 = vadd.f32 %v2506, %v2666
        %v2668 = vpop.f32.mrb[0].mxu0
        %2669 = vmatprep.mubr.bf16.mxu0 %v1566
        %2670 = vmatmul.mubr.bf16.gmra.mrb[0].mxu0 %v1518
        %v2671 = vpop.f32.mrb[0].mxu0
        %v2672 = vadd.f32 %v2511, %v2671
        %v2673 = vpop.f32.mrb[0].mxu0
        %v2674 = vpop.f32.mrb[0].mxu0
        %v2675 = vadd.f32 %v2514, %v2674
        %v2676 = vpop.f32.mrb[0].mxu0
        %2677 = vmatprep.mubr.bf16.mxu0 %v1567
        %2678 = vmatmul.mubr.bf16.gmra.mrb[0].mxu0 %v1519
        %v2679 = vpop.f32.mrb[0].mxu0
        %v2680 = vadd.f32 %v2519, %v2679
        %v2681 = vpop.f32.mrb[0].mxu0
        %v2682 = vpop.f32.mrb[0].mxu0
        %v2683 = vadd.f32 %v2522, %v2682
        %v2684 = vpop.f32.mrb[0].mxu0
        %2685 = vmatprep.mubr.bf16.mxu0 %v1568
        %2686 = vmatmul.mubr.bf16.gmra.mrb[0].mxu0 %v1520
        %v2687 = vpop.f32.mrb[0].mxu0
        %v2688 = vadd.f32 %v2527, %v2687
        %v2689 = vpop.f32.mrb[0].mxu0
        %v2690 = vpop.f32.mrb[0].mxu0
        %v2691 = vadd.f32 %v2530, %v2690
        %v2692 = vpop.f32.mrb[0].mxu0
        %2693 = vmatprep.mubr.bf16.mxu0 %v1569
        %2694 = vmatmul.mubr.bf16.gmra.mrb[0].mxu0 %v1521
        %v2695 = vpop.f32.mrb[0].mxu0
        %v2696 = vadd.f32 %v2535, %v2695
        %v2697 = vpop.f32.mrb[0].mxu0
        %v2698 = vpop.f32.mrb[0].mxu0
        %v2699 = vadd.f32 %v2538, %v2698
        %v2700 = vpop.f32.mrb[0].mxu0
        %2701 = vmatprep.mubr.bf16.mxu0 %v1570
        %2702 = vmatmul.mubr.bf16.gmra.mrb[0].mxu0 %v1522
        %v2703 = vpop.f32.mrb[0].mxu0
        %v2704 = vadd.f32 %v2543, %v2703
        %v2705 = vpop.f32.mrb[0].mxu0
        %v2706 = vpop.f32.mrb[0].mxu0
        %v2707 = vadd.f32 %v2546, %v2706
        %v2708 = vpop.f32.mrb[0].mxu0
        %2709 = vdwg.mxu0
        %2710 = vmatprep.subr.bf16.mxu0 0
        %2711 = vmatpush1.bf16.msra.mxu0 %v2276
        %2712 = vmatprep.subr.bf16.mxu0 0
        %2713 = vmatpush1.bf16.msra.mxu0 %v2277
        %2714 = vmatprep.subr.bf16.mxu0 0
        %2715 = vmatpush1.bf16.msra.mxu0 %v2278
        %2716 = vmatprep.subr.bf16.mxu0 0
        %2717 = vmatpush1.bf16.msra.mxu0 %v2279
        %2718 = vmatprep.subr.bf16.mxu0 0
        %2719 = vmatpush1.bf16.msra.mxu0 %v2280
        %2720 = vmatprep.subr.bf16.mxu0 0
        %2721 = vmatpush1.bf16.msra.mxu0 %v2281
        %2722 = vmatprep.subr.bf16.mxu0 0
        %2723 = vmatpush1.bf16.msra.mxu0 %v2282
        %2724 = vmatprep.subr.bf16.mxu0 0
        %2725 = vmatpush1.bf16.msra.mxu0 %v2283
        %2726 = vmatprep.subr.bf16.mxu0 0
        %2727 = vmatpush1.bf16.msra.mxu0 %v2284
        %2728 = vmatprep.subr.bf16.mxu0 0
        %2729 = vmatpush1.bf16.msra.mxu0 %v2285
        %2730 = vmatprep.subr.bf16.mxu0 0
        %2731 = vmatpush1.bf16.msra.mxu0 %v2286
        %2732 = vmatprep.subr.bf16.mxu0 0
        %2733 = vmatpush1.bf16.msra.mxu0 %v2287
        %2734 = vmatprep.subr.bf16.mxu0 0
        %2735 = vmatpush1.bf16.msra.mxu0 %v2288
        %2736 = vmatprep.subr.bf16.mxu0 0
        %2737 = vmatpush1.bf16.msra.mxu0 %v2289
        %2738 = vmatprep.subr.bf16.mxu0 0
        %2739 = vmatpush1.bf16.msra.mxu0 %v2290
        %2740 = vmatprep.subr.bf16.mxu0 0
        %2741 = vmatpush1.bf16.msra.mxu0 %v2291
        %2742 = vmatprep.mubr.bf16.mxu0 %v1651
        %2743 = vmatmul.mubr.bf16.gmra.mrb[0].mxu0 %v1603
        %v2744 = vpop.f32.mrb[0].mxu0
        %v2745 = vadd.f32 %v2584, %v2744
        %v2746 = vpop.f32.mrb[0].mxu0
        %v2747 = vpop.f32.mrb[0].mxu0
        %v2748 = vadd.f32 %v2587, %v2747
        %v2749 = vpop.f32.mrb[0].mxu0
        %2750 = vmatprep.mubr.bf16.mxu0 %v1652
        %2751 = vmatmul.mubr.bf16.gmra.mrb[0].mxu0 %v1604
        %v2752 = vpop.f32.mrb[0].mxu0
        %v2753 = vadd.f32 %v2592, %v2752
        %v2754 = vpop.f32.mrb[0].mxu0
        %v2755 = vpop.f32.mrb[0].mxu0
        %v2756 = vadd.f32 %v2595, %v2755
        %v2757 = vpop.f32.mrb[0].mxu0
        %2758 = vmatprep.mubr.bf16.mxu0 %v1653
        %2759 = vmatmul.mubr.bf16.gmra.mrb[0].mxu0 %v1605
        %v2760 = vpop.f32.mrb[0].mxu0
        %v2761 = vadd.f32 %v2600, %v2760
        %v2762 = vpop.f32.mrb[0].mxu0
        %v2763 = vpop.f32.mrb[0].mxu0
        %v2764 = vadd.f32 %v2603, %v2763
        %v2765 = vpop.f32.mrb[0].mxu0
        %2766 = vmatprep.mubr.bf16.mxu0 %v1654
        %2767 = vmatmul.mubr.bf16.gmra.mrb[0].mxu0 %v1606
        %v2768 = vpop.f32.mrb[0].mxu0
        %v2769 = vadd.f32 %v2608, %v2768
        %v2770 = vpop.f32.mrb[0].mxu0
        %v2771 = vpop.f32.mrb[0].mxu0
        %v2772 = vadd.f32 %v2611, %v2771
        %v2773 = vpop.f32.mrb[0].mxu0
        %2774 = vmatprep.mubr.bf16.mxu0 %v1655
        %2775 = vmatmul.mubr.bf16.gmra.mrb[0].mxu0 %v1607
        %v2776 = vpop.f32.mrb[0].mxu0
        %v2777 = vadd.f32 %v2616, %v2776
        %v2778 = vpop.f32.mrb[0].mxu0
        %v2779 = vpop.f32.mrb[0].mxu0
        %v2780 = vadd.f32 %v2619, %v2779
        %v2781 = vpop.f32.mrb[0].mxu0
        %2782 = vmatprep.mubr.bf16.mxu0 %v1656
        %2783 = vmatmul.mubr.bf16.gmra.mrb[0].mxu0 %v1608
        %v2784 = vpop.f32.mrb[0].mxu0
        %v2785 = vadd.f32 %v2624, %v2784
        %v2786 = vpop.f32.mrb[0].mxu0
        %v2787 = vpop.f32.mrb[0].mxu0
        %v2788 = vadd.f32 %v2627, %v2787
        %v2789 = vpop.f32.mrb[0].mxu0
        %2790 = vmatprep.mubr.bf16.mxu0 %v1657
        %2791 = vmatmul.mubr.bf16.gmra.mrb[0].mxu0 %v1609
        %v2792 = vpop.f32.mrb[0].mxu0
        %v2793 = vadd.f32 %v2632, %v2792
        %v2794 = vpop.f32.mrb[0].mxu0
        %v2795 = vpop.f32.mrb[0].mxu0
        %v2796 = vadd.f32 %v2635, %v2795
        %v2797 = vpop.f32.mrb[0].mxu0
        %2798 = vmatprep.mubr.bf16.mxu0 %v1658
        %2799 = vmatmul.mubr.bf16.gmra.mrb[0].mxu0 %v1610
        %v2800 = vpop.f32.mrb[0].mxu0
        %v2801 = vadd.f32 %v2640, %v2800
        %v2802 = vpop.f32.mrb[0].mxu0
        %v2803 = vpop.f32.mrb[0].mxu0
        %v2804 = vadd.f32 %v2643, %v2803
        %v2805 = vpop.f32.mrb[0].mxu0
        %2806 = vmatprep.mubr.bf16.mxu0 %v1659
        %2807 = vmatmul.mubr.bf16.gmra.mrb[0].mxu0 %v1611
        %v2808 = vpop.f32.mrb[0].mxu0
        %v2809 = vadd.f32 %v2648, %v2808
        %v2810 = vpop.f32.mrb[0].mxu0
        %v2811 = vpop.f32.mrb[0].mxu0
        %v2812 = vadd.f32 %v2651, %v2811
        %v2813 = vpop.f32.mrb[0].mxu0
        %2814 = vmatprep.mubr.bf16.mxu0 %v1660
        %2815 = vmatmul.mubr.bf16.gmra.mrb[0].mxu0 %v1612
        %v2816 = vpop.f32.mrb[0].mxu0
        %v2817 = vadd.f32 %v2656, %v2816
        %v2818 = vpop.f32.mrb[0].mxu0
        %v2819 = vpop.f32.mrb[0].mxu0
        %v2820 = vadd.f32 %v2659, %v2819
        %v2821 = vpop.f32.mrb[0].mxu0
        %2822 = vmatprep.mubr.bf16.mxu0 %v1661
        %2823 = vmatmul.mubr.bf16.gmra.mrb[0].mxu0 %v1613
        %v2824 = vpop.f32.mrb[0].mxu0
        %v2825 = vadd.f32 %v2664, %v2824
        %v2826 = vpop.f32.mrb[0].mxu0
        %v2827 = vpop.f32.mrb[0].mxu0
        %v2828 = vadd.f32 %v2667, %v2827
        %v2829 = vpop.f32.mrb[0].mxu0
        %2830 = vmatprep.mubr.bf16.mxu0 %v1662
        %2831 = vmatmul.mubr.bf16.gmra.mrb[0].mxu0 %v1614
        %v2832 = vpop.f32.mrb[0].mxu0
        %v2833 = vadd.f32 %v2672, %v2832
        %v2834 = vpop.f32.mrb[0].mxu0
        %v2835 = vpop.f32.mrb[0].mxu0
        %v2836 = vadd.f32 %v2675, %v2835
        %v2837 = vpop.f32.mrb[0].mxu0
        %2838 = vmatprep.mubr.bf16.mxu0 %v1663
        %2839 = vmatmul.mubr.bf16.gmra.mrb[0].mxu0 %v1615
        %v2840 = vpop.f32.mrb[0].mxu0
        %v2841 = vadd.f32 %v2680, %v2840
        %v2842 = vpop.f32.mrb[0].mxu0
        %v2843 = vpop.f32.mrb[0].mxu0
        %v2844 = vadd.f32 %v2683, %v2843
        %v2845 = vpop.f32.mrb[0].mxu0
        %2846 = vmatprep.mubr.bf16.mxu0 %v1664
        %2847 = vmatmul.mubr.bf16.gmra.mrb[0].mxu0 %v1616
        %v2848 = vpop.f32.mrb[0].mxu0
        %v2849 = vadd.f32 %v2688, %v2848
        %v2850 = vpop.f32.mrb[0].mxu0
        %v2851 = vpop.f32.mrb[0].mxu0
        %v2852 = vadd.f32 %v2691, %v2851
        %v2853 = vpop.f32.mrb[0].mxu0
        %2854 = vmatprep.mubr.bf16.mxu0 %v1665
        %2855 = vmatmul.mubr.bf16.gmra.mrb[0].mxu0 %v1617
        %v2856 = vpop.f32.mrb[0].mxu0
        %v2857 = vadd.f32 %v2696, %v2856
        %v2858 = vpop.f32.mrb[0].mxu0
        %v2859 = vpop.f32.mrb[0].mxu0
        %v2860 = vadd.f32 %v2699, %v2859
        %v2861 = vpop.f32.mrb[0].mxu0
        %2862 = vmatprep.mubr.bf16.mxu0 %v1666
        %2863 = vmatmul.mubr.bf16.gmra.mrb[0].mxu0 %v1618
        %v2864 = vpop.f32.mrb[0].mxu0
        %v2865 = vadd.f32 %v2704, %v2864
        %v2866 = vpop.f32.mrb[0].mxu0
        %v2867 = vpop.f32.mrb[0].mxu0
        %v2868 = vadd.f32 %v2707, %v2867
        %v2869 = vpop.f32.mrb[0].mxu0
        %2870 = vdwg.mxu0
        %2871 = vmatprep.subr.bf16.mxu0 0
        %2872 = vmatpush1.bf16.msra.mxu0 %v2292
        %2873 = vmatprep.subr.bf16.mxu0 0
        %2874 = vmatpush1.bf16.msra.mxu0 %v2293
        %2875 = vmatprep.subr.bf16.mxu0 0
        %2876 = vmatpush1.bf16.msra.mxu0 %v2294
        %2877 = vmatprep.subr.bf16.mxu0 0
        %2878 = vmatpush1.bf16.msra.mxu0 %v2295
        %2879 = vmatprep.subr.bf16.mxu0 0
        %2880 = vmatpush1.bf16.msra.mxu0 %v2296
        %2881 = vmatprep.subr.bf16.mxu0 0
        %2882 = vmatpush1.bf16.msra.mxu0 %v2297
        %2883 = vmatprep.subr.bf16.mxu0 0
        %2884 = vmatpush1.bf16.msra.mxu0 %v2298
        %2885 = vmatprep.subr.bf16.mxu0 0
        %2886 = vmatpush1.bf16.msra.mxu0 %v2299
        %2887 = vmatprep.subr.bf16.mxu0 0
        %2888 = vmatpush1.bf16.msra.mxu0 %v2300
        %2889 = vmatprep.subr.bf16.mxu0 0
        %2890 = vmatpush1.bf16.msra.mxu0 %v2301
        %2891 = vmatprep.subr.bf16.mxu0 0
        %2892 = vmatpush1.bf16.msra.mxu0 %v2302
        %2893 = vmatprep.subr.bf16.mxu0 0
        %2894 = vmatpush1.bf16.msra.mxu0 %v2303
        %2895 = vmatprep.subr.bf16.mxu0 0
        %2896 = vmatpush1.bf16.msra.mxu0 %v2304
        %2897 = vmatprep.subr.bf16.mxu0 0
        %2898 = vmatpush1.bf16.msra.mxu0 %v2305
        %2899 = vmatprep.subr.bf16.mxu0 0
        %2900 = vmatpush1.bf16.msra.mxu0 %v2306
        %2901 = vmatprep.subr.bf16.mxu0 0
        %2902 = vmatpush1.bf16.msra.mxu0 %v2307
        %2903 = vmatprep.mubr.bf16.mxu0 %v1748
        %2904 = vmatmul.mubr.bf16.gmra.mrb[0].mxu0 %v1700
        %v2905 = vpop.f32.mrb[0].mxu0
        %v2906 = vadd.f32 %v2745, %v2905
        %v2907 = vpop.f32.mrb[0].mxu0
        %v2908 = vpop.f32.mrb[0].mxu0
        %v2909 = vadd.f32 %v2748, %v2908
        %v2910 = vpop.f32.mrb[0].mxu0
        %2911 = vmatprep.mubr.bf16.mxu0 %v1749
        %2912 = vmatmul.mubr.bf16.gmra.mrb[0].mxu0 %v1701
        %v2913 = vpop.f32.mrb[0].mxu0
        %v2914 = vadd.f32 %v2753, %v2913
        %v2915 = vpop.f32.mrb[0].mxu0
        %v2916 = vpop.f32.mrb[0].mxu0
        %v2917 = vadd.f32 %v2756, %v2916
        %v2918 = vpop.f32.mrb[0].mxu0
        %2919 = vmatprep.mubr.bf16.mxu0 %v1750
        %2920 = vmatmul.mubr.bf16.gmra.mrb[0].mxu0 %v1702
        %v2921 = vpop.f32.mrb[0].mxu0
        %v2922 = vadd.f32 %v2761, %v2921
        %v2923 = vpop.f32.mrb[0].mxu0
        %v2924 = vpop.f32.mrb[0].mxu0
        %v2925 = vadd.f32 %v2764, %v2924
        %v2926 = vpop.f32.mrb[0].mxu0
        %2927 = vmatprep.mubr.bf16.mxu0 %v1751
        %2928 = vmatmul.mubr.bf16.gmra.mrb[0].mxu0 %v1703
        %v2929 = vpop.f32.mrb[0].mxu0
        %v2930 = vadd.f32 %v2769, %v2929
        %v2931 = vpop.f32.mrb[0].mxu0
        %v2932 = vpop.f32.mrb[0].mxu0
        %v2933 = vadd.f32 %v2772, %v2932
        %v2934 = vpop.f32.mrb[0].mxu0
        %2935 = vmatprep.mubr.bf16.mxu0 %v1752
        %2936 = vmatmul.mubr.bf16.gmra.mrb[0].mxu0 %v1704
        %v2937 = vpop.f32.mrb[0].mxu0
        %v2938 = vadd.f32 %v2777, %v2937
        %v2939 = vpop.f32.mrb[0].mxu0
        %v2940 = vpop.f32.mrb[0].mxu0
        %v2941 = vadd.f32 %v2780, %v2940
        %v2942 = vpop.f32.mrb[0].mxu0
        %2943 = vmatprep.mubr.bf16.mxu0 %v1753
        %2944 = vmatmul.mubr.bf16.gmra.mrb[0].mxu0 %v1705
        %v2945 = vpop.f32.mrb[0].mxu0
        %v2946 = vadd.f32 %v2785, %v2945
        %v2947 = vpop.f32.mrb[0].mxu0
        %v2948 = vpop.f32.mrb[0].mxu0
        %v2949 = vadd.f32 %v2788, %v2948
        %v2950 = vpop.f32.mrb[0].mxu0
        %2951 = vmatprep.mubr.bf16.mxu0 %v1754
        %2952 = vmatmul.mubr.bf16.gmra.mrb[0].mxu0 %v1706
        %v2953 = vpop.f32.mrb[0].mxu0
        %v2954 = vadd.f32 %v2793, %v2953
        %v2955 = vpop.f32.mrb[0].mxu0
        %v2956 = vpop.f32.mrb[0].mxu0
        %v2957 = vadd.f32 %v2796, %v2956
        %v2958 = vpop.f32.mrb[0].mxu0
        %2959 = vmatprep.mubr.bf16.mxu0 %v1755
        %2960 = vmatmul.mubr.bf16.gmra.mrb[0].mxu0 %v1707
        %v2961 = vpop.f32.mrb[0].mxu0
        %v2962 = vadd.f32 %v2801, %v2961
        %v2963 = vpop.f32.mrb[0].mxu0
        %v2964 = vpop.f32.mrb[0].mxu0
        %v2965 = vadd.f32 %v2804, %v2964
        %v2966 = vpop.f32.mrb[0].mxu0
        %2967 = vmatprep.mubr.bf16.mxu0 %v1756
        %2968 = vmatmul.mubr.bf16.gmra.mrb[0].mxu0 %v1708
        %v2969 = vpop.f32.mrb[0].mxu0
        %v2970 = vadd.f32 %v2809, %v2969
        %v2971 = vpop.f32.mrb[0].mxu0
        %v2972 = vpop.f32.mrb[0].mxu0
        %v2973 = vadd.f32 %v2812, %v2972
        %v2974 = vpop.f32.mrb[0].mxu0
        %2975 = vmatprep.mubr.bf16.mxu0 %v1757
        %2976 = vmatmul.mubr.bf16.gmra.mrb[0].mxu0 %v1709
        %v2977 = vpop.f32.mrb[0].mxu0
        %v2978 = vadd.f32 %v2817, %v2977
        %v2979 = vpop.f32.mrb[0].mxu0
        %v2980 = vpop.f32.mrb[0].mxu0
        %v2981 = vadd.f32 %v2820, %v2980
        %v2982 = vpop.f32.mrb[0].mxu0
        %2983 = vmatprep.mubr.bf16.mxu0 %v1758
        %2984 = vmatmul.mubr.bf16.gmra.mrb[0].mxu0 %v1710
        %v2985 = vpop.f32.mrb[0].mxu0
        %v2986 = vadd.f32 %v2825, %v2985
        %v2987 = vpop.f32.mrb[0].mxu0
        %v2988 = vpop.f32.mrb[0].mxu0
        %v2989 = vadd.f32 %v2828, %v2988
        %v2990 = vpop.f32.mrb[0].mxu0
        %2991 = vmatprep.mubr.bf16.mxu0 %v1759
        %2992 = vmatmul.mubr.bf16.gmra.mrb[0].mxu0 %v1711
        %v2993 = vpop.f32.mrb[0].mxu0
        %v2994 = vadd.f32 %v2833, %v2993
        %v2995 = vpop.f32.mrb[0].mxu0
        %v2996 = vpop.f32.mrb[0].mxu0
        %v2997 = vadd.f32 %v2836, %v2996
        %v2998 = vpop.f32.mrb[0].mxu0
        %2999 = vmatprep.mubr.bf16.mxu0 %v1760
        %3000 = vmatmul.mubr.bf16.gmra.mrb[0].mxu0 %v1712
        %v3001 = vpop.f32.mrb[0].mxu0
        %v3002 = vadd.f32 %v2841, %v3001
        %v3003 = vpop.f32.mrb[0].mxu0
        %v3004 = vpop.f32.mrb[0].mxu0
        %v3005 = vadd.f32 %v2844, %v3004
        %v3006 = vpop.f32.mrb[0].mxu0
        %3007 = vmatprep.mubr.bf16.mxu0 %v1761
        %3008 = vmatmul.mubr.bf16.gmra.mrb[0].mxu0 %v1713
        %v3009 = vpop.f32.mrb[0].mxu0
        %v3010 = vadd.f32 %v2849, %v3009
        %v3011 = vpop.f32.mrb[0].mxu0
        %v3012 = vpop.f32.mrb[0].mxu0
        %v3013 = vadd.f32 %v2852, %v3012
        %v3014 = vpop.f32.mrb[0].mxu0
        %3015 = vmatprep.mubr.bf16.mxu0 %v1762
        %3016 = vmatmul.mubr.bf16.gmra.mrb[0].mxu0 %v1714
        %v3017 = vpop.f32.mrb[0].mxu0
        %v3018 = vadd.f32 %v2857, %v3017
        %v3019 = vpop.f32.mrb[0].mxu0
        %v3020 = vpop.f32.mrb[0].mxu0
        %v3021 = vadd.f32 %v2860, %v3020
        %v3022 = vpop.f32.mrb[0].mxu0
        %3023 = vmatprep.mubr.bf16.mxu0 %v1763
        %3024 = vmatmul.mubr.bf16.gmra.mrb[0].mxu0 %v1715
        %v3025 = vpop.f32.mrb[0].mxu0
        %v3026 = vadd.f32 %v2865, %v3025
        %v3027 = vpop.f32.mrb[0].mxu0
        %v3028 = vpop.f32.mrb[0].mxu0
        %v3029 = vadd.f32 %v2868, %v3028
        %v3030 = vpop.f32.mrb[0].mxu0
        %3031 = vdwg.mxu0
        %3032 = vmatprep.subr.bf16.mxu0 0
        %3033 = vmatpush1.bf16.msra.mxu0 %v2308
        %3034 = vmatprep.subr.bf16.mxu0 0
        %3035 = vmatpush1.bf16.msra.mxu0 %v2309
        %3036 = vmatprep.subr.bf16.mxu0 0
        %3037 = vmatpush1.bf16.msra.mxu0 %v2310
        %3038 = vmatprep.subr.bf16.mxu0 0
        %3039 = vmatpush1.bf16.msra.mxu0 %v2311
        %3040 = vmatprep.subr.bf16.mxu0 0
        %3041 = vmatpush1.bf16.msra.mxu0 %v2312
        %3042 = vmatprep.subr.bf16.mxu0 0
        %3043 = vmatpush1.bf16.msra.mxu0 %v2313
        %3044 = vmatprep.subr.bf16.mxu0 0
        %3045 = vmatpush1.bf16.msra.mxu0 %v2314
        %3046 = vmatprep.subr.bf16.mxu0 0
        %3047 = vmatpush1.bf16.msra.mxu0 %v2315
        %3048 = vmatprep.subr.bf16.mxu0 0
        %3049 = vmatpush1.bf16.msra.mxu0 0
        %3050 = vmatprep.subr.bf16.mxu0 0
        %3051 = vmatpush1.bf16.msra.mxu0 0
        %3052 = vmatprep.subr.bf16.mxu0 0
        %3053 = vmatpush1.bf16.msra.mxu0 0
        %3054 = vmatprep.subr.bf16.mxu0 0
        %3055 = vmatpush1.bf16.msra.mxu0 0
        %3056 = vmatprep.subr.bf16.mxu0 0
        %3057 = vmatpush1.bf16.msra.mxu0 0
        %3058 = vmatprep.subr.bf16.mxu0 0
        %3059 = vmatpush1.bf16.msra.mxu0 0
        %3060 = vmatprep.subr.bf16.mxu0 0
        %3061 = vmatpush1.bf16.msra.mxu0 0
        %3062 = vmatprep.subr.bf16.mxu0 0
        %3063 = vmatpush1.bf16.msra.mxu0 0
        %3064 = vmatprep.mubr.bf16.mxu0 0
        %3065 = vmatmul.mubr.bf16.gmra.mrb[0].mxu0 %v1796
        %v3066 = vpop.f32.mrb[0].mxu0
        %v3067 = vadd.f32 %v2906, %v3066
        %v3068 = vpop.f32.mrb[0].mxu0
        %v3069 = vpop.f32.mrb[0].mxu0
        %v3070 = vadd.f32 %v2909, %v3069
        %v3071 = vpop.f32.mrb[0].mxu0
        %3072 = vmatprep.mubr.bf16.mxu0 0
        %3073 = vmatmul.mubr.bf16.gmra.mrb[0].mxu0 %v1797
        %v3074 = vpop.f32.mrb[0].mxu0
        %v3075 = vadd.f32 %v2914, %v3074
        %v3076 = vpop.f32.mrb[0].mxu0
        %v3077 = vpop.f32.mrb[0].mxu0
        %v3078 = vadd.f32 %v2917, %v3077
        %v3079 = vpop.f32.mrb[0].mxu0
        %3080 = vmatprep.mubr.bf16.mxu0 0
        %3081 = vmatmul.mubr.bf16.gmra.mrb[0].mxu0 %v1798
        %v3082 = vpop.f32.mrb[0].mxu0
        %v3083 = vadd.f32 %v2922, %v3082
        %v3084 = vpop.f32.mrb[0].mxu0
        %v3085 = vpop.f32.mrb[0].mxu0
        %v3086 = vadd.f32 %v2925, %v3085
        %v3087 = vpop.f32.mrb[0].mxu0
        %3088 = vmatprep.mubr.bf16.mxu0 0
        %3089 = vmatmul.mubr.bf16.gmra.mrb[0].mxu0 %v1799
        %v3090 = vpop.f32.mrb[0].mxu0
        %v3091 = vadd.f32 %v2930, %v3090
        %v3092 = vpop.f32.mrb[0].mxu0
        %v3093 = vpop.f32.mrb[0].mxu0
        %v3094 = vadd.f32 %v2933, %v3093
        %v3095 = vpop.f32.mrb[0].mxu0
        %3096 = vmatprep.mubr.bf16.mxu0 0
        %3097 = vmatmul.mubr.bf16.gmra.mrb[0].mxu0 %v1800
        %v3098 = vpop.f32.mrb[0].mxu0
        %v3099 = vadd.f32 %v2938, %v3098
        %v3100 = vpop.f32.mrb[0].mxu0
        %v3101 = vpop.f32.mrb[0].mxu0
        %v3102 = vadd.f32 %v2941, %v3101
        %v3103 = vpop.f32.mrb[0].mxu0
        %3104 = vmatprep.mubr.bf16.mxu0 0
        %3105 = vmatmul.mubr.bf16.gmra.mrb[0].mxu0 %v1801
        %v3106 = vpop.f32.mrb[0].mxu0
        %v3107 = vadd.f32 %v2946, %v3106
        %v3108 = vpop.f32.mrb[0].mxu0
        %v3109 = vpop.f32.mrb[0].mxu0
        %v3110 = vadd.f32 %v2949, %v3109
        %v3111 = vpop.f32.mrb[0].mxu0
        %3112 = vmatprep.mubr.bf16.mxu0 0
        %3113 = vmatmul.mubr.bf16.gmra.mrb[0].mxu0 %v1802
        %v3114 = vpop.f32.mrb[0].mxu0
        %v3115 = vadd.f32 %v2954, %v3114
        %v3116 = vpop.f32.mrb[0].mxu0
        %v3117 = vpop.f32.mrb[0].mxu0
        %v3118 = vadd.f32 %v2957, %v3117
        %v3119 = vpop.f32.mrb[0].mxu0
        %3120 = vmatprep.mubr.bf16.mxu0 0
        %3121 = vmatmul.mubr.bf16.gmra.mrb[0].mxu0 %v1803
        %v3122 = vpop.f32.mrb[0].mxu0
        %v3123 = vadd.f32 %v2962, %v3122
        %v3124 = vpop.f32.mrb[0].mxu0
        %v3125 = vpop.f32.mrb[0].mxu0
        %v3126 = vadd.f32 %v2965, %v3125
        %v3127 = vpop.f32.mrb[0].mxu0
        %3128 = vmatprep.mubr.bf16.mxu0 0
        %3129 = vmatmul.mubr.bf16.gmra.mrb[0].mxu0 %v1804
        %v3130 = vpop.f32.mrb[0].mxu0
        %v3131 = vadd.f32 %v2970, %v3130
        %v3132 = vpop.f32.mrb[0].mxu0
        %v3133 = vpop.f32.mrb[0].mxu0
        %v3134 = vadd.f32 %v2973, %v3133
        %v3135 = vpop.f32.mrb[0].mxu0
        %3136 = vmatprep.mubr.bf16.mxu0 0
        %3137 = vmatmul.mubr.bf16.gmra.mrb[0].mxu0 %v1805
        %v3138 = vpop.f32.mrb[0].mxu0
        %v3139 = vadd.f32 %v2978, %v3138
        %v3140 = vpop.f32.mrb[0].mxu0
        %v3141 = vpop.f32.mrb[0].mxu0
        %v3142 = vadd.f32 %v2981, %v3141
        %v3143 = vpop.f32.mrb[0].mxu0
        %3144 = vmatprep.mubr.bf16.mxu0 0
        %3145 = vmatmul.mubr.bf16.gmra.mrb[0].mxu0 %v1806
        %v3146 = vpop.f32.mrb[0].mxu0
        %v3147 = vadd.f32 %v2986, %v3146
        %v3148 = vpop.f32.mrb[0].mxu0
        %v3149 = vpop.f32.mrb[0].mxu0
        %v3150 = vadd.f32 %v2989, %v3149
        %v3151 = vpop.f32.mrb[0].mxu0
        %3152 = vmatprep.mubr.bf16.mxu0 0
        %3153 = vmatmul.mubr.bf16.gmra.mrb[0].mxu0 %v1807
        %v3154 = vpop.f32.mrb[0].mxu0
        %v3155 = vadd.f32 %v2994, %v3154
        %v3156 = vpop.f32.mrb[0].mxu0
        %v3157 = vpop.f32.mrb[0].mxu0
        %v3158 = vadd.f32 %v2997, %v3157
        %v3159 = vpop.f32.mrb[0].mxu0
        %3160 = vmatprep.mubr.bf16.mxu0 0
        %3161 = vmatmul.mubr.bf16.gmra.mrb[0].mxu0 %v1808
        %v3162 = vpop.f32.mrb[0].mxu0
        %v3163 = vadd.f32 %v3002, %v3162
        %v3164 = vpop.f32.mrb[0].mxu0
        %v3165 = vpop.f32.mrb[0].mxu0
        %v3166 = vadd.f32 %v3005, %v3165
        %v3167 = vpop.f32.mrb[0].mxu0
        %3168 = vmatprep.mubr.bf16.mxu0 0
        %3169 = vmatmul.mubr.bf16.gmra.mrb[0].mxu0 %v1809
        %v3170 = vpop.f32.mrb[0].mxu0
        %v3171 = vadd.f32 %v3010, %v3170
        %v3172 = vpop.f32.mrb[0].mxu0
        %v3173 = vpop.f32.mrb[0].mxu0
        %v3174 = vadd.f32 %v3013, %v3173
        %v3175 = vpop.f32.mrb[0].mxu0
        %3176 = vmatprep.mubr.bf16.mxu0 0
        %3177 = vmatmul.mubr.bf16.gmra.mrb[0].mxu0 %v1810
        %v3178 = vpop.f32.mrb[0].mxu0
        %v3179 = vadd.f32 %v3018, %v3178
        %v3180 = vpop.f32.mrb[0].mxu0
        %v3181 = vpop.f32.mrb[0].mxu0
        %v3182 = vadd.f32 %v3021, %v3181
        %v3183 = vpop.f32.mrb[0].mxu0
        %3184 = vmatprep.mubr.bf16.mxu0 0
        %3185 = vmatmul.mubr.bf16.gmra.mrb[0].mxu0 %v1811
        %v3186 = vpop.f32.mrb[0].mxu0
        %v3187 = vadd.f32 %v3026, %v3186
        %v3188 = vpop.f32.mrb[0].mxu0
        %v3189 = vpop.f32.mrb[0].mxu0
        %v3190 = vadd.f32 %v3029, %v3189
        %v3191 = vpop.f32.mrb[0].mxu0
        %3192 = vdwg.mxu0
        %v3193 = vld [vmem:[%s5] sm:$0x1]
        %v3195 = vlaneseq
        %v3196 = vshrl.u32 %v3195, 7
        %v3197 = vsub.s32 0, %v3196
        %v3198 = vrot.slane %v3193, %v3197
        %v3200 = vmul.f32 %v3067, %v3198
        %v3201 = vmul.f32 %v3070, %v3198
        %v3202 = vmul.f32 %v3075, %v3198
        %v3203 = vmul.f32 %v3078, %v3198
        %v3204 = vmul.f32 %v3083, %v3198
        %v3205 = vmul.f32 %v3086, %v3198
        %v3206 = vmul.f32 %v3091, %v3198
        %v3207 = vmul.f32 %v3094, %v3198
        %v3208 = vmul.f32 %v3099, %v3198
        %v3209 = vmul.f32 %v3102, %v3198
        %v3210 = vmul.f32 %v3107, %v3198
        %v3211 = vmul.f32 %v3110, %v3198
        %v3212 = vmul.f32 %v3115, %v3198
        %v3213 = vmul.f32 %v3118, %v3198
        %v3214 = vmul.f32 %v3123, %v3198
        %v3215 = vmul.f32 %v3126, %v3198
        %v3216 = vmul.f32 %v3131, %v3198
        %v3217 = vmul.f32 %v3134, %v3198
        %v3218 = vmul.f32 %v3139, %v3198
        %v3219 = vmul.f32 %v3142, %v3198
        %v3220 = vmul.f32 %v3147, %v3198
        %v3221 = vmul.f32 %v3150, %v3198
        %v3222 = vmul.f32 %v3155, %v3198
        %v3223 = vmul.f32 %v3158, %v3198
        %v3224 = vmul.f32 %v3163, %v3198
        %v3225 = vmul.f32 %v3166, %v3198
        %v3226 = vmul.f32 %v3171, %v3198
        %v3227 = vmul.f32 %v3174, %v3198
        %v3228 = vmul.f32 %v3179, %v3198
        %v3229 = vmul.f32 %v3182, %v3198
        %v3230 = vmul.f32 %v3187, %v3198
        %v3231 = vmul.f32 %v3190, %v3198
        %v3232 = vld [vmem:[%s6] sm:$0x1]
        %v3234 = vlaneseq
        %v3235 = vshrl.u32 %v3234, 7
        %v3236 = vsub.s32 0, %v3235
        %v3237 = vrot.slane %v3232, %v3236
        %v3239 = vadd.f32 %v3200, %v3237
        %v3240 = vadd.f32 %v3201, %v3237
        %v3241 = vadd.f32 %v3202, %v3237
        %v3242 = vadd.f32 %v3203, %v3237
        %v3243 = vadd.f32 %v3204, %v3237
        %v3244 = vadd.f32 %v3205, %v3237
        %v3245 = vadd.f32 %v3206, %v3237
        %v3246 = vadd.f32 %v3207, %v3237
        %v3247 = vadd.f32 %v3208, %v3237
        %v3248 = vadd.f32 %v3209, %v3237
        %v3249 = vadd.f32 %v3210, %v3237
        %v3250 = vadd.f32 %v3211, %v3237
        %v3251 = vadd.f32 %v3212, %v3237
        %v3252 = vadd.f32 %v3213, %v3237
        %v3253 = vadd.f32 %v3214, %v3237
        %v3254 = vadd.f32 %v3215, %v3237
        %v3255 = vadd.f32 %v3216, %v3237
        %v3256 = vadd.f32 %v3217, %v3237
        %v3257 = vadd.f32 %v3218, %v3237
        %v3258 = vadd.f32 %v3219, %v3237
        %v3259 = vadd.f32 %v3220, %v3237
        %v3260 = vadd.f32 %v3221, %v3237
        %v3261 = vadd.f32 %v3222, %v3237
        %v3262 = vadd.f32 %v3223, %v3237
        %v3263 = vadd.f32 %v3224, %v3237
        %v3264 = vadd.f32 %v3225, %v3237
        %v3265 = vadd.f32 %v3226, %v3237
        %v3266 = vadd.f32 %v3227, %v3237
        %v3267 = vadd.f32 %v3228, %v3237
        %v3268 = vadd.f32 %v3229, %v3237
        %v3269 = vadd.f32 %v3230, %v3237
        %v3270 = vadd.f32 %v3231, %v3237
        %v3271 = vmax.f32 %v3239, 0.0
        %v3272 = vmax.f32 %v3240, 0.0
        %v3273 = vmax.f32 %v3241, 0.0
        %v3274 = vmax.f32 %v3242, 0.0
        %v3275 = vmax.f32 %v3243, 0.0
        %v3276 = vmax.f32 %v3244, 0.0
        %v3277 = vmax.f32 %v3245, 0.0
        %v3278 = vmax.f32 %v3246, 0.0
        %v3279 = vmax.f32 %v3247, 0.0
        %v3280 = vmax.f32 %v3248, 0.0
        %v3281 = vmax.f32 %v3249, 0.0
        %v3282 = vmax.f32 %v3250, 0.0
        %v3283 = vmax.f32 %v3251, 0.0
        %v3284 = vmax.f32 %v3252, 0.0
        %v3285 = vmax.f32 %v3253, 0.0
        %v3286 = vmax.f32 %v3254, 0.0
        %v3287 = vmax.f32 %v3255, 0.0
        %v3288 = vmax.f32 %v3256, 0.0
        %v3289 = vmax.f32 %v3257, 0.0
        %v3290 = vmax.f32 %v3258, 0.0
        %v3291 = vmax.f32 %v3259, 0.0
        %v3292 = vmax.f32 %v3260, 0.0
        %v3293 = vmax.f32 %v3261, 0.0
        %v3294 = vmax.f32 %v3262, 0.0
        %v3295 = vmax.f32 %v3263, 0.0
        %v3296 = vmax.f32 %v3264, 0.0
        %v3297 = vmax.f32 %v3265, 0.0
        %v3298 = vmax.f32 %v3266, 0.0
        %v3299 = vmax.f32 %v3267, 0.0
        %v3300 = vmax.f32 %v3268, 0.0
        %v3301 = vmax.f32 %v3269, 0.0
        %v3302 = vmax.f32 %v3270, 0.0
        %v3303 = vpack.c.bf16 %v3272, %v3271
        %v3304 = vpack.c.bf16 %v3274, %v3273
        %v3305 = vpack.c.bf16 %v3276, %v3275
        %v3306 = vpack.c.bf16 %v3278, %v3277
        %v3307 = vpack.c.bf16 %v3280, %v3279
        %v3308 = vpack.c.bf16 %v3282, %v3281
        %v3309 = vpack.c.bf16 %v3284, %v3283
        %v3310 = vpack.c.bf16 %v3286, %v3285
        %v3311 = vpack.c.bf16 %v3288, %v3287
        %v3312 = vpack.c.bf16 %v3290, %v3289
        %v3313 = vpack.c.bf16 %v3292, %v3291
        %v3314 = vpack.c.bf16 %v3294, %v3293
        %v3315 = vpack.c.bf16 %v3296, %v3295
        %v3316 = vpack.c.bf16 %v3298, %v3297
        %v3317 = vpack.c.bf16 %v3300, %v3299
        %v3318 = vpack.c.bf16 %v3302, %v3301
        %v3319 = vld [vmem:[#allocation9] sm:$0xff]
        %v3320 = vld [vmem:[#allocation9 + $0x8] sm:$0xff]
        %v3321 = vld [vmem:[#allocation9 + $0x10] sm:$0xff]
        %v3322 = vld [vmem:[#allocation9 + $0x18] sm:$0xff]
        %v3323 = vld [vmem:[#allocation9 + $0x20] sm:$0xff]
        %v3324 = vld [vmem:[#allocation9 + $0x28] sm:$0xff]
        %v3325 = vld [vmem:[#allocation9 + $0x30] sm:$0xff]
        %v3326 = vld [vmem:[#allocation9 + $0x38] sm:$0xff]
        %v3327 = vld [vmem:[#allocation9 + $0x40] sm:$0xff]
        %v3328 = vld [vmem:[#allocation9 + $0x48] sm:$0xff]
        %v3329 = vld [vmem:[#allocation9 + $0x50] sm:$0xff]
        %v3330 = vld [vmem:[#allocation9 + $0x58] sm:$0xff]
        %v3331 = vld [vmem:[#allocation9 + $0x60] sm:$0xff]
        %v3332 = vld [vmem:[#allocation9 + $0x68] sm:$0xff]
        %v3333 = vld [vmem:[#allocation9 + $0x70] sm:$0xff]
        %v3334 = vld [vmem:[#allocation9 + $0x78] sm:$0xff]
        %v3335 = vld [vmem:[#allocation9 + $0x80] sm:$0xff]
        %v3336 = vld [vmem:[#allocation9 + $0x88] sm:$0xff]
        %v3337 = vld [vmem:[#allocation9 + $0x90] sm:$0xff]
        %v3338 = vld [vmem:[#allocation9 + $0x98] sm:$0xff]
        %v3339 = vld [vmem:[#allocation9 + $0xa0] sm:$0xff]
        %v3340 = vld [vmem:[#allocation9 + $0xa8] sm:$0xff]
        %v3341 = vld [vmem:[#allocation9 + $0xb0] sm:$0xff]
        %v3342 = vld [vmem:[#allocation9 + $0xb8] sm:$0xff]
        %v3343 = vld [vmem:[#allocation9 + $0xc0] sm:$0xff]
        %v3344 = vld [vmem:[#allocation9 + $0xc8] sm:$0xff]
        %v3345 = vld [vmem:[#allocation9 + $0xd0] sm:$0xff]
        %v3346 = vld [vmem:[#allocation9 + $0xd8] sm:$0xff]
        %v3347 = vld [vmem:[#allocation9 + $0xe0] sm:$0xff]
        %v3348 = vld [vmem:[#allocation9 + $0xe8] sm:$0xff]
        %v3349 = vld [vmem:[#allocation9 + $0xf0] sm:$0xff]
        %v3350 = vld [vmem:[#allocation9 + $0xf8] sm:$0xff]
        %v3383 = vunpack.c.l.b16 %v3319
        %v3384 = vunpack.c.h.b16 %v3319
        %v3385 = vunpack.c.l.b16 %v3320
        %v3386 = vunpack.c.h.b16 %v3320
        %v3387 = vunpack.c.l.b16 %v3321
        %v3388 = vunpack.c.h.b16 %v3321
        %v3389 = vunpack.c.l.b16 %v3322
        %v3390 = vunpack.c.h.b16 %v3322
        %v3391 = vunpack.c.l.b16 %v3323
        %v3392 = vunpack.c.h.b16 %v3323
        %v3393 = vunpack.c.l.b16 %v3324
        %v3394 = vunpack.c.h.b16 %v3324
        %v3395 = vunpack.c.l.b16 %v3325
        %v3396 = vunpack.c.h.b16 %v3325
        %v3397 = vunpack.c.l.b16 %v3326
        %v3398 = vunpack.c.h.b16 %v3326
        %v3399 = vunpack.c.l.b16 %v3327
        %v3400 = vunpack.c.h.b16 %v3327
        %v3401 = vunpack.c.l.b16 %v3328
        %v3402 = vunpack.c.h.b16 %v3328
        %v3403 = vunpack.c.l.b16 %v3329
        %v3404 = vunpack.c.h.b16 %v3329
        %v3405 = vunpack.c.l.b16 %v3330
        %v3406 = vunpack.c.h.b16 %v3330
        %v3407 = vunpack.c.l.b16 %v3331
        %v3408 = vunpack.c.h.b16 %v3331
        %v3409 = vunpack.c.l.b16 %v3332
        %v3410 = vunpack.c.h.b16 %v3332
        %v3411 = vunpack.c.l.b16 %v3333
        %v3412 = vunpack.c.h.b16 %v3333
        %v3413 = vunpack.c.l.b16 %v3334
        %v3414 = vunpack.c.h.b16 %v3334
        %v3415 = vunpack.c.l.b16 %v3335
        %v3416 = vunpack.c.h.b16 %v3335
        %v3417 = vunpack.c.l.b16 %v3336
        %v3418 = vunpack.c.h.b16 %v3336
        %v3419 = vunpack.c.l.b16 %v3337
        %v3420 = vunpack.c.h.b16 %v3337
        %v3421 = vunpack.c.l.b16 %v3338
        %v3422 = vunpack.c.h.b16 %v3338
        %v3423 = vunpack.c.l.b16 %v3339
        %v3424 = vunpack.c.h.b16 %v3339
        %v3425 = vunpack.c.l.b16 %v3340
        %v3426 = vunpack.c.h.b16 %v3340
        %v3427 = vunpack.c.l.b16 %v3341
        %v3428 = vunpack.c.h.b16 %v3341
        %v3429 = vunpack.c.l.b16 %v3342
        %v3430 = vunpack.c.h.b16 %v3342
        %v3431 = vunpack.c.l.b16 %v3343
        %v3432 = vunpack.c.h.b16 %v3343
        %v3433 = vunpack.c.l.b16 %v3344
        %v3434 = vunpack.c.h.b16 %v3344
        %v3435 = vunpack.c.l.b16 %v3345
        %v3436 = vunpack.c.h.b16 %v3345
        %v3437 = vunpack.c.l.b16 %v3346
        %v3438 = vunpack.c.h.b16 %v3346
        %v3439 = vunpack.c.l.b16 %v3347
        %v3440 = vunpack.c.h.b16 %v3347
        %v3441 = vunpack.c.l.b16 %v3348
        %v3442 = vunpack.c.h.b16 %v3348
        %v3443 = vunpack.c.l.b16 %v3349
        %v3444 = vunpack.c.h.b16 %v3349
        %v3445 = vunpack.c.l.b16 %v3350
        %v3446 = vunpack.c.h.b16 %v3350
        %v3447 = vpack.c.b16 %v3387, %v3383
        %v3448 = vpack.c.b16 %v3388, %v3384
        %v3449 = vpack.c.b16 %v3389, %v3385
        %v3450 = vpack.c.b16 %v3390, %v3386
        %v3451 = vpack.c.b16 %v3395, %v3391
        %v3452 = vpack.c.b16 %v3396, %v3392
        %v3453 = vpack.c.b16 %v3397, %v3393
        %v3454 = vpack.c.b16 %v3398, %v3394
        %v3455 = vpack.c.b16 %v3403, %v3399
        %v3456 = vpack.c.b16 %v3404, %v3400
        %v3457 = vpack.c.b16 %v3405, %v3401
        %v3458 = vpack.c.b16 %v3406, %v3402
        %v3459 = vpack.c.b16 %v3411, %v3407
        %v3460 = vpack.c.b16 %v3412, %v3408
        %v3461 = vpack.c.b16 %v3413, %v3409
        %v3462 = vpack.c.b16 %v3414, %v3410
        %v3463 = vpack.c.b16 %v3419, %v3415
        %v3464 = vpack.c.b16 %v3420, %v3416
        %v3465 = vpack.c.b16 %v3421, %v3417
        %v3466 = vpack.c.b16 %v3422, %v3418
        %v3467 = vpack.c.b16 %v3427, %v3423
        %v3468 = vpack.c.b16 %v3428, %v3424
        %v3469 = vpack.c.b16 %v3429, %v3425
        %v3470 = vpack.c.b16 %v3430, %v3426
        %v3471 = vpack.c.b16 %v3435, %v3431
        %v3472 = vpack.c.b16 %v3436, %v3432
        %v3473 = vpack.c.b16 %v3437, %v3433
        %v3474 = vpack.c.b16 %v3438, %v3434
        %v3475 = vpack.c.b16 %v3443, %v3439
        %v3476 = vpack.c.b16 %v3444, %v3440
        %v3477 = vpack.c.b16 %v3445, %v3441
        %v3478 = vpack.c.b16 %v3446, %v3442
        %3511 = vmatprep.subr.bf16.mxu0 %v3448
        %3512 = vmatpush1.bf16.msra.mxu0 %v3447
        %3513 = vmatprep.subr.bf16.mxu0 %v3452
        %3514 = vmatpush1.bf16.msra.mxu0 %v3451
        %3515 = vmatprep.subr.bf16.mxu0 %v3456
        %3516 = vmatpush1.bf16.msra.mxu0 %v3455
        %3517 = vmatprep.subr.bf16.mxu0 %v3460
        %3518 = vmatpush1.bf16.msra.mxu0 %v3459
        %3519 = vmatprep.subr.bf16.mxu0 %v3464
        %3520 = vmatpush1.bf16.msra.mxu0 %v3463
        %3521 = vmatprep.subr.bf16.mxu0 %v3468
        %3522 = vmatpush1.bf16.msra.mxu0 %v3467
        %3523 = vmatprep.subr.bf16.mxu0 %v3472
        %3524 = vmatpush1.bf16.msra.mxu0 %v3471
        %3525 = vmatprep.subr.bf16.mxu0 %v3476
        %3526 = vmatpush1.bf16.msra.mxu0 %v3475
        %3527 = vmatprep.subr.bf16.mxu0 0
        %3528 = vmatpush1.bf16.msra.mxu0 0
        %3529 = vmatprep.subr.bf16.mxu0 0
        %3530 = vmatpush1.bf16.msra.mxu0 0
        %3531 = vmatprep.subr.bf16.mxu0 0
        %3532 = vmatpush1.bf16.msra.mxu0 0
        %3533 = vmatprep.subr.bf16.mxu0 0
        %3534 = vmatpush1.bf16.msra.mxu0 0
        %3535 = vmatprep.subr.bf16.mxu0 0
        %3536 = vmatpush1.bf16.msra.mxu0 0
        %3537 = vmatprep.subr.bf16.mxu0 0
        %3538 = vmatpush1.bf16.msra.mxu0 0
        %3539 = vmatprep.subr.bf16.mxu0 0
        %3540 = vmatpush1.bf16.msra.mxu0 0
        %3541 = vmatprep.subr.bf16.mxu0 0
        %3542 = vmatpush1.bf16.msra.mxu0 0
        %3543 = vmatprep.mubr.bf16.mxu0 0
        %3544 = vmatmul.mubr.bf16.gmra.mrb[0].mxu0 %v3303
        %v3545 = vpop.f32.mrb[0].mxu0
        %v3546 = vadd.f32 0.0, %v3545
        %v3547 = vpop.f32.mrb[0].mxu0
        %v3548 = vadd.f32 0.0, %v3547
        %v3549 = vpop.f32.mrb[0].mxu0
        %v3550 = vadd.f32 0.0, %v3549
        %v3551 = vpop.f32.mrb[0].mxu0
        %v3552 = vadd.f32 0.0, %v3551
        %3553 = vmatprep.mubr.bf16.mxu0 0
        %3554 = vmatmul.mubr.bf16.gmra.mrb[0].mxu0 %v3304
        %v3555 = vpop.f32.mrb[0].mxu0
        %v3556 = vadd.f32 0.0, %v3555
        %v3557 = vpop.f32.mrb[0].mxu0
        %v3558 = vadd.f32 0.0, %v3557
        %v3559 = vpop.f32.mrb[0].mxu0
        %v3560 = vadd.f32 0.0, %v3559
        %v3561 = vpop.f32.mrb[0].mxu0
        %v3562 = vadd.f32 0.0, %v3561
        %3563 = vmatprep.mubr.bf16.mxu0 0
        %3564 = vmatmul.mubr.bf16.gmra.mrb[0].mxu0 %v3305
        %v3565 = vpop.f32.mrb[0].mxu0
        %v3566 = vadd.f32 0.0, %v3565
        %v3567 = vpop.f32.mrb[0].mxu0
        %v3568 = vadd.f32 0.0, %v3567
        %v3569 = vpop.f32.mrb[0].mxu0
        %v3570 = vadd.f32 0.0, %v3569
        %v3571 = vpop.f32.mrb[0].mxu0
        %v3572 = vadd.f32 0.0, %v3571
        %3573 = vmatprep.mubr.bf16.mxu0 0
        %3574 = vmatmul.mubr.bf16.gmra.mrb[0].mxu0 %v3306
        %v3575 = vpop.f32.mrb[0].mxu0
        %v3576 = vadd.f32 0.0, %v3575
        %v3577 = vpop.f32.mrb[0].mxu0
        %v3578 = vadd.f32 0.0, %v3577
        %v3579 = vpop.f32.mrb[0].mxu0
        %v3580 = vadd.f32 0.0, %v3579
        %v3581 = vpop.f32.mrb[0].mxu0
        %v3582 = vadd.f32 0.0, %v3581
        %3583 = vmatprep.mubr.bf16.mxu0 0
        %3584 = vmatmul.mubr.bf16.gmra.mrb[0].mxu0 %v3307
        %v3585 = vpop.f32.mrb[0].mxu0
        %v3586 = vadd.f32 0.0, %v3585
        %v3587 = vpop.f32.mrb[0].mxu0
        %v3588 = vadd.f32 0.0, %v3587
        %v3589 = vpop.f32.mrb[0].mxu0
        %v3590 = vadd.f32 0.0, %v3589
        %v3591 = vpop.f32.mrb[0].mxu0
        %v3592 = vadd.f32 0.0, %v3591
        %3593 = vmatprep.mubr.bf16.mxu0 0
        %3594 = vmatmul.mubr.bf16.gmra.mrb[0].mxu0 %v3308
        %v3595 = vpop.f32.mrb[0].mxu0
        %v3596 = vadd.f32 0.0, %v3595
        %v3597 = vpop.f32.mrb[0].mxu0
        %v3598 = vadd.f32 0.0, %v3597
        %v3599 = vpop.f32.mrb[0].mxu0
        %v3600 = vadd.f32 0.0, %v3599
        %v3601 = vpop.f32.mrb[0].mxu0
        %v3602 = vadd.f32 0.0, %v3601
        %3603 = vmatprep.mubr.bf16.mxu0 0
        %3604 = vmatmul.mubr.bf16.gmra.mrb[0].mxu0 %v3309
        %v3605 = vpop.f32.mrb[0].mxu0
        %v3606 = vadd.f32 0.0, %v3605
        %v3607 = vpop.f32.mrb[0].mxu0
        %v3608 = vadd.f32 0.0, %v3607
        %v3609 = vpop.f32.mrb[0].mxu0
        %v3610 = vadd.f32 0.0, %v3609
        %v3611 = vpop.f32.mrb[0].mxu0
        %v3612 = vadd.f32 0.0, %v3611
        %3613 = vmatprep.mubr.bf16.mxu0 0
        %3614 = vmatmul.mubr.bf16.gmra.mrb[0].mxu0 %v3310
        %v3615 = vpop.f32.mrb[0].mxu0
        %v3616 = vadd.f32 0.0, %v3615
        %v3617 = vpop.f32.mrb[0].mxu0
        %v3618 = vadd.f32 0.0, %v3617
        %v3619 = vpop.f32.mrb[0].mxu0
        %v3620 = vadd.f32 0.0, %v3619
        %v3621 = vpop.f32.mrb[0].mxu0
        %v3622 = vadd.f32 0.0, %v3621
        %3623 = vmatprep.mubr.bf16.mxu0 0
        %3624 = vmatmul.mubr.bf16.gmra.mrb[0].mxu0 %v3311
        %v3625 = vpop.f32.mrb[0].mxu0
        %v3626 = vadd.f32 0.0, %v3625
        %v3627 = vpop.f32.mrb[0].mxu0
        %v3628 = vadd.f32 0.0, %v3627
        %v3629 = vpop.f32.mrb[0].mxu0
        %v3630 = vadd.f32 0.0, %v3629
        %v3631 = vpop.f32.mrb[0].mxu0
        %v3632 = vadd.f32 0.0, %v3631
        %3633 = vmatprep.mubr.bf16.mxu0 0
        %3634 = vmatmul.mubr.bf16.gmra.mrb[0].mxu0 %v3312
        %v3635 = vpop.f32.mrb[0].mxu0
        %v3636 = vadd.f32 0.0, %v3635
        %v3637 = vpop.f32.mrb[0].mxu0
        %v3638 = vadd.f32 0.0, %v3637
        %v3639 = vpop.f32.mrb[0].mxu0
        %v3640 = vadd.f32 0.0, %v3639
        %v3641 = vpop.f32.mrb[0].mxu0
        %v3642 = vadd.f32 0.0, %v3641
        %3643 = vmatprep.mubr.bf16.mxu0 0
        %3644 = vmatmul.mubr.bf16.gmra.mrb[0].mxu0 %v3313
        %v3645 = vpop.f32.mrb[0].mxu0
        %v3646 = vadd.f32 0.0, %v3645
        %v3647 = vpop.f32.mrb[0].mxu0
        %v3648 = vadd.f32 0.0, %v3647
        %v3649 = vpop.f32.mrb[0].mxu0
        %v3650 = vadd.f32 0.0, %v3649
        %v3651 = vpop.f32.mrb[0].mxu0
        %v3652 = vadd.f32 0.0, %v3651
        %3653 = vmatprep.mubr.bf16.mxu0 0
        %3654 = vmatmul.mubr.bf16.gmra.mrb[0].mxu0 %v3314
        %v3655 = vpop.f32.mrb[0].mxu0
        %v3656 = vadd.f32 0.0, %v3655
        %v3657 = vpop.f32.mrb[0].mxu0
        %v3658 = vadd.f32 0.0, %v3657
        %v3659 = vpop.f32.mrb[0].mxu0
        %v3660 = vadd.f32 0.0, %v3659
        %v3661 = vpop.f32.mrb[0].mxu0
        %v3662 = vadd.f32 0.0, %v3661
        %3663 = vmatprep.mubr.bf16.mxu0 0
        %3664 = vmatmul.mubr.bf16.gmra.mrb[0].mxu0 %v3315
        %v3665 = vpop.f32.mrb[0].mxu0
        %v3666 = vadd.f32 0.0, %v3665
        %v3667 = vpop.f32.mrb[0].mxu0
        %v3668 = vadd.f32 0.0, %v3667
        %v3669 = vpop.f32.mrb[0].mxu0
        %v3670 = vadd.f32 0.0, %v3669
        %v3671 = vpop.f32.mrb[0].mxu0
        %v3672 = vadd.f32 0.0, %v3671
        %3673 = vmatprep.mubr.bf16.mxu0 0
        %3674 = vmatmul.mubr.bf16.gmra.mrb[0].mxu0 %v3316
        %v3675 = vpop.f32.mrb[0].mxu0
        %v3676 = vadd.f32 0.0, %v3675
        %v3677 = vpop.f32.mrb[0].mxu0
        %v3678 = vadd.f32 0.0, %v3677
        %v3679 = vpop.f32.mrb[0].mxu0
        %v3680 = vadd.f32 0.0, %v3679
        %v3681 = vpop.f32.mrb[0].mxu0
        %v3682 = vadd.f32 0.0, %v3681
        %3683 = vmatprep.mubr.bf16.mxu0 0
        %3684 = vmatmul.mubr.bf16.gmra.mrb[0].mxu0 %v3317
        %v3685 = vpop.f32.mrb[0].mxu0
        %v3686 = vadd.f32 0.0, %v3685
        %v3687 = vpop.f32.mrb[0].mxu0
        %v3688 = vadd.f32 0.0, %v3687
        %v3689 = vpop.f32.mrb[0].mxu0
        %v3690 = vadd.f32 0.0, %v3689
        %v3691 = vpop.f32.mrb[0].mxu0
        %v3692 = vadd.f32 0.0, %v3691
        %3693 = vmatprep.mubr.bf16.mxu0 0
        %3694 = vmatmul.mubr.bf16.gmra.mrb[0].mxu0 %v3318
        %v3695 = vpop.f32.mrb[0].mxu0
        %v3696 = vadd.f32 0.0, %v3695
        %v3697 = vpop.f32.mrb[0].mxu0
        %v3698 = vadd.f32 0.0, %v3697
        %v3699 = vpop.f32.mrb[0].mxu0
        %v3700 = vadd.f32 0.0, %v3699
        %v3701 = vpop.f32.mrb[0].mxu0
        %v3702 = vadd.f32 0.0, %v3701
        %3703 = vdwg.mxu0
        %3704 = vmatprep.subr.bf16.mxu0 %v3450
        %3705 = vmatpush1.bf16.msra.mxu0 %v3449
        %3706 = vmatprep.subr.bf16.mxu0 %v3454
        %3707 = vmatpush1.bf16.msra.mxu0 %v3453
        %3708 = vmatprep.subr.bf16.mxu0 %v3458
        %3709 = vmatpush1.bf16.msra.mxu0 %v3457
        %3710 = vmatprep.subr.bf16.mxu0 %v3462
        %3711 = vmatpush1.bf16.msra.mxu0 %v3461
        %3712 = vmatprep.subr.bf16.mxu0 %v3466
        %3713 = vmatpush1.bf16.msra.mxu0 %v3465
        %3714 = vmatprep.subr.bf16.mxu0 %v3470
        %3715 = vmatpush1.bf16.msra.mxu0 %v3469
        %3716 = vmatprep.subr.bf16.mxu0 %v3474
        %3717 = vmatpush1.bf16.msra.mxu0 %v3473
        %3718 = vmatprep.subr.bf16.mxu0 %v3478
        %3719 = vmatpush1.bf16.msra.mxu0 %v3477
        %3720 = vmatprep.subr.bf16.mxu0 0
        %3721 = vmatpush1.bf16.msra.mxu0 0
        %3722 = vmatprep.subr.bf16.mxu0 0
        %3723 = vmatpush1.bf16.msra.mxu0 0
        %3724 = vmatprep.subr.bf16.mxu0 0
        %3725 = vmatpush1.bf16.msra.mxu0 0
        %3726 = vmatprep.subr.bf16.mxu0 0
        %3727 = vmatpush1.bf16.msra.mxu0 0
        %3728 = vmatprep.subr.bf16.mxu0 0
        %3729 = vmatpush1.bf16.msra.mxu0 0
        %3730 = vmatprep.subr.bf16.mxu0 0
        %3731 = vmatpush1.bf16.msra.mxu0 0
        %3732 = vmatprep.subr.bf16.mxu0 0
        %3733 = vmatpush1.bf16.msra.mxu0 0
        %3734 = vmatprep.subr.bf16.mxu0 0
        %3735 = vmatpush1.bf16.msra.mxu0 0
        %3736 = vmatprep.mubr.bf16.mxu0 0
        %3737 = vmatmul.mubr.bf16.gmra.mrb[0].mxu0 %v3303
        %v3738 = vpop.f32.mrb[0].mxu0
        %v3739 = vadd.f32 0.0, %v3738
        %v3740 = vpop.f32.mrb[0].mxu0
        %v3741 = vadd.f32 0.0, %v3740
        %v3742 = vpop.f32.mrb[0].mxu0
        %v3743 = vadd.f32 0.0, %v3742
        %v3744 = vpop.f32.mrb[0].mxu0
        %v3745 = vadd.f32 0.0, %v3744
        %3746 = vmatprep.mubr.bf16.mxu0 0
        %3747 = vmatmul.mubr.bf16.gmra.mrb[0].mxu0 %v3304
        %v3748 = vpop.f32.mrb[0].mxu0
        %v3749 = vadd.f32 0.0, %v3748
        %v3750 = vpop.f32.mrb[0].mxu0
        %v3751 = vadd.f32 0.0, %v3750
        %v3752 = vpop.f32.mrb[0].mxu0
        %v3753 = vadd.f32 0.0, %v3752
        %v3754 = vpop.f32.mrb[0].mxu0
        %v3755 = vadd.f32 0.0, %v3754
        %3756 = vmatprep.mubr.bf16.mxu0 0
        %3757 = vmatmul.mubr.bf16.gmra.mrb[0].mxu0 %v3305
        %v3758 = vpop.f32.mrb[0].mxu0
        %v3759 = vadd.f32 0.0, %v3758
        %v3760 = vpop.f32.mrb[0].mxu0
        %v3761 = vadd.f32 0.0, %v3760
        %v3762 = vpop.f32.mrb[0].mxu0
        %v3763 = vadd.f32 0.0, %v3762
        %v3764 = vpop.f32.mrb[0].mxu0
        %v3765 = vadd.f32 0.0, %v3764
        %3766 = vmatprep.mubr.bf16.mxu0 0
        %3767 = vmatmul.mubr.bf16.gmra.mrb[0].mxu0 %v3306
        %v3768 = vpop.f32.mrb[0].mxu0
        %v3769 = vadd.f32 0.0, %v3768
        %v3770 = vpop.f32.mrb[0].mxu0
        %v3771 = vadd.f32 0.0, %v3770
        %v3772 = vpop.f32.mrb[0].mxu0
        %v3773 = vadd.f32 0.0, %v3772
        %v3774 = vpop.f32.mrb[0].mxu0
        %v3775 = vadd.f32 0.0, %v3774
        %3776 = vmatprep.mubr.bf16.mxu0 0
        %3777 = vmatmul.mubr.bf16.gmra.mrb[0].mxu0 %v3307
        %v3778 = vpop.f32.mrb[0].mxu0
        %v3779 = vadd.f32 0.0, %v3778
        %v3780 = vpop.f32.mrb[0].mxu0
        %v3781 = vadd.f32 0.0, %v3780
        %v3782 = vpop.f32.mrb[0].mxu0
        %v3783 = vadd.f32 0.0, %v3782
        %v3784 = vpop.f32.mrb[0].mxu0
        %v3785 = vadd.f32 0.0, %v3784
        %3786 = vmatprep.mubr.bf16.mxu0 0
        %3787 = vmatmul.mubr.bf16.gmra.mrb[0].mxu0 %v3308
        %v3788 = vpop.f32.mrb[0].mxu0
        %v3789 = vadd.f32 0.0, %v3788
        %v3790 = vpop.f32.mrb[0].mxu0
        %v3791 = vadd.f32 0.0, %v3790
        %v3792 = vpop.f32.mrb[0].mxu0
        %v3793 = vadd.f32 0.0, %v3792
        %v3794 = vpop.f32.mrb[0].mxu0
        %v3795 = vadd.f32 0.0, %v3794
        %3796 = vmatprep.mubr.bf16.mxu0 0
        %3797 = vmatmul.mubr.bf16.gmra.mrb[0].mxu0 %v3309
        %v3798 = vpop.f32.mrb[0].mxu0
        %v3799 = vadd.f32 0.0, %v3798
        %v3800 = vpop.f32.mrb[0].mxu0
        %v3801 = vadd.f32 0.0, %v3800
        %v3802 = vpop.f32.mrb[0].mxu0
        %v3803 = vadd.f32 0.0, %v3802
        %v3804 = vpop.f32.mrb[0].mxu0
        %v3805 = vadd.f32 0.0, %v3804
        %3806 = vmatprep.mubr.bf16.mxu0 0
        %3807 = vmatmul.mubr.bf16.gmra.mrb[0].mxu0 %v3310
        %v3808 = vpop.f32.mrb[0].mxu0
        %v3809 = vadd.f32 0.0, %v3808
        %v3810 = vpop.f32.mrb[0].mxu0
        %v3811 = vadd.f32 0.0, %v3810
        %v3812 = vpop.f32.mrb[0].mxu0
        %v3813 = vadd.f32 0.0, %v3812
        %v3814 = vpop.f32.mrb[0].mxu0
        %v3815 = vadd.f32 0.0, %v3814
        %3816 = vmatprep.mubr.bf16.mxu0 0
        %3817 = vmatmul.mubr.bf16.gmra.mrb[0].mxu0 %v3311
        %v3818 = vpop.f32.mrb[0].mxu0
        %v3819 = vadd.f32 0.0, %v3818
        %v3820 = vpop.f32.mrb[0].mxu0
        %v3821 = vadd.f32 0.0, %v3820
        %v3822 = vpop.f32.mrb[0].mxu0
        %v3823 = vadd.f32 0.0, %v3822
        %v3824 = vpop.f32.mrb[0].mxu0
        %v3825 = vadd.f32 0.0, %v3824
        %3826 = vmatprep.mubr.bf16.mxu0 0
        %3827 = vmatmul.mubr.bf16.gmra.mrb[0].mxu0 %v3312
        %v3828 = vpop.f32.mrb[0].mxu0
        %v3829 = vadd.f32 0.0, %v3828
        %v3830 = vpop.f32.mrb[0].mxu0
        %v3831 = vadd.f32 0.0, %v3830
        %v3832 = vpop.f32.mrb[0].mxu0
        %v3833 = vadd.f32 0.0, %v3832
        %v3834 = vpop.f32.mrb[0].mxu0
        %v3835 = vadd.f32 0.0, %v3834
        %3836 = vmatprep.mubr.bf16.mxu0 0
        %3837 = vmatmul.mubr.bf16.gmra.mrb[0].mxu0 %v3313
        %v3838 = vpop.f32.mrb[0].mxu0
        %v3839 = vadd.f32 0.0, %v3838
        %v3840 = vpop.f32.mrb[0].mxu0
        %v3841 = vadd.f32 0.0, %v3840
        %v3842 = vpop.f32.mrb[0].mxu0
        %v3843 = vadd.f32 0.0, %v3842
        %v3844 = vpop.f32.mrb[0].mxu0
        %v3845 = vadd.f32 0.0, %v3844
        %3846 = vmatprep.mubr.bf16.mxu0 0
        %3847 = vmatmul.mubr.bf16.gmra.mrb[0].mxu0 %v3314
        %v3848 = vpop.f32.mrb[0].mxu0
        %v3849 = vadd.f32 0.0, %v3848
        %v3850 = vpop.f32.mrb[0].mxu0
        %v3851 = vadd.f32 0.0, %v3850
        %v3852 = vpop.f32.mrb[0].mxu0
        %v3853 = vadd.f32 0.0, %v3852
        %v3854 = vpop.f32.mrb[0].mxu0
        %v3855 = vadd.f32 0.0, %v3854
        %3856 = vmatprep.mubr.bf16.mxu0 0
        %3857 = vmatmul.mubr.bf16.gmra.mrb[0].mxu0 %v3315
        %v3858 = vpop.f32.mrb[0].mxu0
        %v3859 = vadd.f32 0.0, %v3858
        %v3860 = vpop.f32.mrb[0].mxu0
        %v3861 = vadd.f32 0.0, %v3860
        %v3862 = vpop.f32.mrb[0].mxu0
        %v3863 = vadd.f32 0.0, %v3862
        %v3864 = vpop.f32.mrb[0].mxu0
        %v3865 = vadd.f32 0.0, %v3864
        %3866 = vmatprep.mubr.bf16.mxu0 0
        %3867 = vmatmul.mubr.bf16.gmra.mrb[0].mxu0 %v3316
        %v3868 = vpop.f32.mrb[0].mxu0
        %v3869 = vadd.f32 0.0, %v3868
        %v3870 = vpop.f32.mrb[0].mxu0
        %v3871 = vadd.f32 0.0, %v3870
        %v3872 = vpop.f32.mrb[0].mxu0
        %v3873 = vadd.f32 0.0, %v3872
        %v3874 = vpop.f32.mrb[0].mxu0
        %v3875 = vadd.f32 0.0, %v3874
        %3876 = vmatprep.mubr.bf16.mxu0 0
        %3877 = vmatmul.mubr.bf16.gmra.mrb[0].mxu0 %v3317
        %v3878 = vpop.f32.mrb[0].mxu0
        %v3879 = vadd.f32 0.0, %v3878
        %v3880 = vpop.f32.mrb[0].mxu0
        %v3881 = vadd.f32 0.0, %v3880
        %v3882 = vpop.f32.mrb[0].mxu0
        %v3883 = vadd.f32 0.0, %v3882
        %v3884 = vpop.f32.mrb[0].mxu0
        %v3885 = vadd.f32 0.0, %v3884
        %3886 = vmatprep.mubr.bf16.mxu0 0
        %3887 = vmatmul.mubr.bf16.gmra.mrb[0].mxu0 %v3318
        %v3888 = vpop.f32.mrb[0].mxu0
        %v3889 = vadd.f32 0.0, %v3888
        %v3890 = vpop.f32.mrb[0].mxu0
        %v3891 = vadd.f32 0.0, %v3890
        %v3892 = vpop.f32.mrb[0].mxu0
        %v3893 = vadd.f32 0.0, %v3892
        %v3894 = vpop.f32.mrb[0].mxu0
        %v3895 = vadd.f32 0.0, %v3894
        %3896 = vdwg.mxu0
        %v3897 = vld [vmem:[%s8] sm:$0xf]
        %v3899 = vlaneseq
        %v3900 = vshrl.u32 %v3899, 7
        %v3901 = vsub.s32 0, %v3900
        %v3902 = vrot.slane %v3897, %v3901
        %v3903 = vlaneseq
        %v3904 = vshrl.u32 %v3903, 7
        %v3905 = vsub.s32 1, %v3904
        %v3906 = vrot.slane %v3897, %v3905
        %v3907 = vlaneseq
        %v3908 = vshrl.u32 %v3907, 7
        %v3909 = vsub.s32 2, %v3908
        %v3910 = vrot.slane %v3897, %v3909
        %v3911 = vlaneseq
        %v3912 = vshrl.u32 %v3911, 7
        %v3913 = vsub.s32 3, %v3912
        %v3914 = vrot.slane %v3897, %v3913
        %v3919 = vmul.f32 %v3546, %v3902
        %v3920 = vmul.f32 %v3548, %v3906
        %v3921 = vmul.f32 %v3739, %v3910
        %v3922 = vmul.f32 %v3741, %v3914
        %v3923 = vmul.f32 %v3550, %v3902
        %v3924 = vmul.f32 %v3552, %v3906
        %v3925 = vmul.f32 %v3743, %v3910
        %v3926 = vmul.f32 %v3745, %v3914
        %v3927 = vmul.f32 %v3556, %v3902
        %v3928 = vmul.f32 %v3558, %v3906
        %v3929 = vmul.f32 %v3749, %v3910
        %v3930 = vmul.f32 %v3751, %v3914
        %v3931 = vmul.f32 %v3560, %v3902
        %v3932 = vmul.f32 %v3562, %v3906
        %v3933 = vmul.f32 %v3753, %v3910
        %v3934 = vmul.f32 %v3755, %v3914
        %v3935 = vmul.f32 %v3566, %v3902
        %v3936 = vmul.f32 %v3568, %v3906
        %v3937 = vmul.f32 %v3759, %v3910
        %v3938 = vmul.f32 %v3761, %v3914
        %v3939 = vmul.f32 %v3570, %v3902
        %v3940 = vmul.f32 %v3572, %v3906
        %v3941 = vmul.f32 %v3763, %v3910
        %v3942 = vmul.f32 %v3765, %v3914
        %v3943 = vmul.f32 %v3576, %v3902
        %v3944 = vmul.f32 %v3578, %v3906
        %v3945 = vmul.f32 %v3769, %v3910
        %v3946 = vmul.f32 %v3771, %v3914
        %v3947 = vmul.f32 %v3580, %v3902
        %v3948 = vmul.f32 %v3582, %v3906
        %v3949 = vmul.f32 %v3773, %v3910
        %v3950 = vmul.f32 %v3775, %v3914
        %v3951 = vmul.f32 %v3586, %v3902
        %v3952 = vmul.f32 %v3588, %v3906
        %v3953 = vmul.f32 %v3779, %v3910
        %v3954 = vmul.f32 %v3781, %v3914
        %v3955 = vmul.f32 %v3590, %v3902
        %v3956 = vmul.f32 %v3592, %v3906
        %v3957 = vmul.f32 %v3783, %v3910
        %v3958 = vmul.f32 %v3785, %v3914
        %v3959 = vmul.f32 %v3596, %v3902
        %v3960 = vmul.f32 %v3598, %v3906
        %v3961 = vmul.f32 %v3789, %v3910
        %v3962 = vmul.f32 %v3791, %v3914
        %v3963 = vmul.f32 %v3600, %v3902
        %v3964 = vmul.f32 %v3602, %v3906
        %v3965 = vmul.f32 %v3793, %v3910
        %v3966 = vmul.f32 %v3795, %v3914
        %v3967 = vmul.f32 %v3606, %v3902
        %v3968 = vmul.f32 %v3608, %v3906
        %v3969 = vmul.f32 %v3799, %v3910
        %v3970 = vmul.f32 %v3801, %v3914
        %v3971 = vmul.f32 %v3610, %v3902
        %v3972 = vmul.f32 %v3612, %v3906
        %v3973 = vmul.f32 %v3803, %v3910
        %v3974 = vmul.f32 %v3805, %v3914
        %v3975 = vmul.f32 %v3616, %v3902
        %v3976 = vmul.f32 %v3618, %v3906
        %v3977 = vmul.f32 %v3809, %v3910
        %v3978 = vmul.f32 %v3811, %v3914
        %v3979 = vmul.f32 %v3620, %v3902
        %v3980 = vmul.f32 %v3622, %v3906
        %v3981 = vmul.f32 %v3813, %v3910
        %v3982 = vmul.f32 %v3815, %v3914
        %v3983 = vmul.f32 %v3626, %v3902
        %v3984 = vmul.f32 %v3628, %v3906
        %v3985 = vmul.f32 %v3819, %v3910
        %v3986 = vmul.f32 %v3821, %v3914
        %v3987 = vmul.f32 %v3630, %v3902
        %v3988 = vmul.f32 %v3632, %v3906
        %v3989 = vmul.f32 %v3823, %v3910
        %v3990 = vmul.f32 %v3825, %v3914
        %v3991 = vmul.f32 %v3636, %v3902
        %v3992 = vmul.f32 %v3638, %v3906
        %v3993 = vmul.f32 %v3829, %v3910
        %v3994 = vmul.f32 %v3831, %v3914
        %v3995 = vmul.f32 %v3640, %v3902
        %v3996 = vmul.f32 %v3642, %v3906
        %v3997 = vmul.f32 %v3833, %v3910
        %v3998 = vmul.f32 %v3835, %v3914
        %v3999 = vmul.f32 %v3646, %v3902
        %v4000 = vmul.f32 %v3648, %v3906
        %v4001 = vmul.f32 %v3839, %v3910
        %v4002 = vmul.f32 %v3841, %v3914
        %v4003 = vmul.f32 %v3650, %v3902
        %v4004 = vmul.f32 %v3652, %v3906
        %v4005 = vmul.f32 %v3843, %v3910
        %v4006 = vmul.f32 %v3845, %v3914
        %v4007 = vmul.f32 %v3656, %v3902
        %v4008 = vmul.f32 %v3658, %v3906
        %v4009 = vmul.f32 %v3849, %v3910
        %v4010 = vmul.f32 %v3851, %v3914
        %v4011 = vmul.f32 %v3660, %v3902
        %v4012 = vmul.f32 %v3662, %v3906
        %v4013 = vmul.f32 %v3853, %v3910
        %v4014 = vmul.f32 %v3855, %v3914
        %v4015 = vmul.f32 %v3666, %v3902
        %v4016 = vmul.f32 %v3668, %v3906
        %v4017 = vmul.f32 %v3859, %v3910
        %v4018 = vmul.f32 %v3861, %v3914
        %v4019 = vmul.f32 %v3670, %v3902
        %v4020 = vmul.f32 %v3672, %v3906
        %v4021 = vmul.f32 %v3863, %v3910
        %v4022 = vmul.f32 %v3865, %v3914
        %v4023 = vmul.f32 %v3676, %v3902
        %v4024 = vmul.f32 %v3678, %v3906
        %v4025 = vmul.f32 %v3869, %v3910
        %v4026 = vmul.f32 %v3871, %v3914
        %v4027 = vmul.f32 %v3680, %v3902
        %v4028 = vmul.f32 %v3682, %v3906
        %v4029 = vmul.f32 %v3873, %v3910
        %v4030 = vmul.f32 %v3875, %v3914
        %v4031 = vmul.f32 %v3686, %v3902
        %v4032 = vmul.f32 %v3688, %v3906
        %v4033 = vmul.f32 %v3879, %v3910
        %v4034 = vmul.f32 %v3881, %v3914
        %v4035 = vmul.f32 %v3690, %v3902
        %v4036 = vmul.f32 %v3692, %v3906
        %v4037 = vmul.f32 %v3883, %v3910
        %v4038 = vmul.f32 %v3885, %v3914
        %v4039 = vmul.f32 %v3696, %v3902
        %v4040 = vmul.f32 %v3698, %v3906
        %v4041 = vmul.f32 %v3889, %v3910
        %v4042 = vmul.f32 %v3891, %v3914
        %v4043 = vmul.f32 %v3700, %v3902
        %v4044 = vmul.f32 %v3702, %v3906
        %v4045 = vmul.f32 %v3893, %v3910
        %v4046 = vmul.f32 %v3895, %v3914
        %v4047 = vld [vmem:[%s9] sm:$0xf]
        %v4049 = vlaneseq
        %v4050 = vshrl.u32 %v4049, 7
        %v4051 = vsub.s32 0, %v4050
        %v4052 = vrot.slane %v4047, %v4051
        %v4053 = vlaneseq
        %v4054 = vshrl.u32 %v4053, 7
        %v4055 = vsub.s32 1, %v4054
        %v4056 = vrot.slane %v4047, %v4055
        %v4057 = vlaneseq
        %v4058 = vshrl.u32 %v4057, 7
        %v4059 = vsub.s32 2, %v4058
        %v4060 = vrot.slane %v4047, %v4059
        %v4061 = vlaneseq
        %v4062 = vshrl.u32 %v4061, 7
        %v4063 = vsub.s32 3, %v4062
        %v4064 = vrot.slane %v4047, %v4063
        %v4069 = vadd.f32 %v3919, %v4052
        %v4070 = vadd.f32 %v3920, %v4056
        %v4071 = vadd.f32 %v3921, %v4060
        %v4072 = vadd.f32 %v3922, %v4064
        %v4073 = vadd.f32 %v3923, %v4052
        %v4074 = vadd.f32 %v3924, %v4056
        %v4075 = vadd.f32 %v3925, %v4060
        %v4076 = vadd.f32 %v3926, %v4064
        %v4077 = vadd.f32 %v3927, %v4052
        %v4078 = vadd.f32 %v3928, %v4056
        %v4079 = vadd.f32 %v3929, %v4060
        %v4080 = vadd.f32 %v3930, %v4064
        %v4081 = vadd.f32 %v3931, %v4052
        %v4082 = vadd.f32 %v3932, %v4056
        %v4083 = vadd.f32 %v3933, %v4060
        %v4084 = vadd.f32 %v3934, %v4064
        %v4085 = vadd.f32 %v3935, %v4052
        %v4086 = vadd.f32 %v3936, %v4056
        %v4087 = vadd.f32 %v3937, %v4060
        %v4088 = vadd.f32 %v3938, %v4064
        %v4089 = vadd.f32 %v3939, %v4052
        %v4090 = vadd.f32 %v3940, %v4056
        %v4091 = vadd.f32 %v3941, %v4060
        %v4092 = vadd.f32 %v3942, %v4064
        %v4093 = vadd.f32 %v3943, %v4052
        %v4094 = vadd.f32 %v3944, %v4056
        %v4095 = vadd.f32 %v3945, %v4060
        %v4096 = vadd.f32 %v3946, %v4064
        %v4097 = vadd.f32 %v3947, %v4052
        %v4098 = vadd.f32 %v3948, %v4056
        %v4099 = vadd.f32 %v3949, %v4060
        %v4100 = vadd.f32 %v3950, %v4064
        %v4101 = vadd.f32 %v3951, %v4052
        %v4102 = vadd.f32 %v3952, %v4056
        %v4103 = vadd.f32 %v3953, %v4060
        %v4104 = vadd.f32 %v3954, %v4064
        %v4105 = vadd.f32 %v3955, %v4052
        %v4106 = vadd.f32 %v3956, %v4056
        %v4107 = vadd.f32 %v3957, %v4060
        %v4108 = vadd.f32 %v3958, %v4064
        %v4109 = vadd.f32 %v3959, %v4052
        %v4110 = vadd.f32 %v3960, %v4056
        %v4111 = vadd.f32 %v3961, %v4060
        %v4112 = vadd.f32 %v3962, %v4064
        %v4113 = vadd.f32 %v3963, %v4052
        %v4114 = vadd.f32 %v3964, %v4056
        %v4115 = vadd.f32 %v3965, %v4060
        %v4116 = vadd.f32 %v3966, %v4064
        %v4117 = vadd.f32 %v3967, %v4052
        %v4118 = vadd.f32 %v3968, %v4056
        %v4119 = vadd.f32 %v3969, %v4060
        %v4120 = vadd.f32 %v3970, %v4064
        %v4121 = vadd.f32 %v3971, %v4052
        %v4122 = vadd.f32 %v3972, %v4056
        %v4123 = vadd.f32 %v3973, %v4060
        %v4124 = vadd.f32 %v3974, %v4064
        %v4125 = vadd.f32 %v3975, %v4052
        %v4126 = vadd.f32 %v3976, %v4056
        %v4127 = vadd.f32 %v3977, %v4060
        %v4128 = vadd.f32 %v3978, %v4064
        %v4129 = vadd.f32 %v3979, %v4052
        %v4130 = vadd.f32 %v3980, %v4056
        %v4131 = vadd.f32 %v3981, %v4060
        %v4132 = vadd.f32 %v3982, %v4064
        %v4133 = vadd.f32 %v3983, %v4052
        %v4134 = vadd.f32 %v3984, %v4056
        %v4135 = vadd.f32 %v3985, %v4060
        %v4136 = vadd.f32 %v3986, %v4064
        %v4137 = vadd.f32 %v3987, %v4052
        %v4138 = vadd.f32 %v3988, %v4056
        %v4139 = vadd.f32 %v3989, %v4060
        %v4140 = vadd.f32 %v3990, %v4064
        %v4141 = vadd.f32 %v3991, %v4052
        %v4142 = vadd.f32 %v3992, %v4056
        %v4143 = vadd.f32 %v3993, %v4060
        %v4144 = vadd.f32 %v3994, %v4064
        %v4145 = vadd.f32 %v3995, %v4052
        %v4146 = vadd.f32 %v3996, %v4056
        %v4147 = vadd.f32 %v3997, %v4060
        %v4148 = vadd.f32 %v3998, %v4064
        %v4149 = vadd.f32 %v3999, %v4052
        %v4150 = vadd.f32 %v4000, %v4056
        %v4151 = vadd.f32 %v4001, %v4060
        %v4152 = vadd.f32 %v4002, %v4064
        %v4153 = vadd.f32 %v4003, %v4052
        %v4154 = vadd.f32 %v4004, %v4056
        %v4155 = vadd.f32 %v4005, %v4060
        %v4156 = vadd.f32 %v4006, %v4064
        %v4157 = vadd.f32 %v4007, %v4052
        %v4158 = vadd.f32 %v4008, %v4056
        %v4159 = vadd.f32 %v4009, %v4060
        %v4160 = vadd.f32 %v4010, %v4064
        %v4161 = vadd.f32 %v4011, %v4052
        %v4162 = vadd.f32 %v4012, %v4056
        %v4163 = vadd.f32 %v4013, %v4060
        %v4164 = vadd.f32 %v4014, %v4064
        %v4165 = vadd.f32 %v4015, %v4052
        %v4166 = vadd.f32 %v4016, %v4056
        %v4167 = vadd.f32 %v4017, %v4060
        %v4168 = vadd.f32 %v4018, %v4064
        %v4169 = vadd.f32 %v4019, %v4052
        %v4170 = vadd.f32 %v4020, %v4056
        %v4171 = vadd.f32 %v4021, %v4060
        %v4172 = vadd.f32 %v4022, %v4064
        %v4173 = vadd.f32 %v4023, %v4052
        %v4174 = vadd.f32 %v4024, %v4056
        %v4175 = vadd.f32 %v4025, %v4060
        %v4176 = vadd.f32 %v4026, %v4064
        %v4177 = vadd.f32 %v4027, %v4052
        %v4178 = vadd.f32 %v4028, %v4056
        %v4179 = vadd.f32 %v4029, %v4060
        %v4180 = vadd.f32 %v4030, %v4064
        %v4181 = vadd.f32 %v4031, %v4052
        %v4182 = vadd.f32 %v4032, %v4056
        %v4183 = vadd.f32 %v4033, %v4060
        %v4184 = vadd.f32 %v4034, %v4064
        %v4185 = vadd.f32 %v4035, %v4052
        %v4186 = vadd.f32 %v4036, %v4056
        %v4187 = vadd.f32 %v4037, %v4060
        %v4188 = vadd.f32 %v4038, %v4064
        %v4189 = vadd.f32 %v4039, %v4052
        %v4190 = vadd.f32 %v4040, %v4056
        %v4191 = vadd.f32 %v4041, %v4060
        %v4192 = vadd.f32 %v4042, %v4064
        %v4193 = vadd.f32 %v4043, %v4052
        %v4194 = vadd.f32 %v4044, %v4056
        %v4195 = vadd.f32 %v4045, %v4060
        %v4196 = vadd.f32 %v4046, %v4064
        %v4197 = vld [vmem:[%s373] sm:$0xff]
        %v4198 = vld [vmem:[%s373 + $0x8] sm:$0xff]
        %v4199 = vld [vmem:[%s373 + $0x10] sm:$0xff]
        %v4200 = vld [vmem:[%s373 + $0x18] sm:$0xff]
        %v4201 = vld [vmem:[%s373 + $0x20] sm:$0xff]
        %v4202 = vld [vmem:[%s373 + $0x28] sm:$0xff]
        %v4203 = vld [vmem:[%s373 + $0x30] sm:$0xff]
        %v4204 = vld [vmem:[%s373 + $0x38] sm:$0xff]
        %v4205 = vld [vmem:[%s373 + $0x40] sm:$0xff]
        %v4206 = vld [vmem:[%s373 + $0x48] sm:$0xff]
        %v4207 = vld [vmem:[%s373 + $0x50] sm:$0xff]
        %v4208 = vld [vmem:[%s373 + $0x58] sm:$0xff]
        %v4209 = vld [vmem:[%s373 + $0x60] sm:$0xff]
        %v4210 = vld [vmem:[%s373 + $0x68] sm:$0xff]
        %v4211 = vld [vmem:[%s373 + $0x70] sm:$0xff]
        %v4212 = vld [vmem:[%s373 + $0x78] sm:$0xff]
        %v4213 = vld [vmem:[%s373 + $0x80] sm:$0xff]
        %v4214 = vld [vmem:[%s373 + $0x88] sm:$0xff]
        %v4215 = vld [vmem:[%s373 + $0x90] sm:$0xff]
        %v4216 = vld [vmem:[%s373 + $0x98] sm:$0xff]
        %v4217 = vld [vmem:[%s373 + $0xa0] sm:$0xff]
        %v4218 = vld [vmem:[%s373 + $0xa8] sm:$0xff]
        %v4219 = vld [vmem:[%s373 + $0xb0] sm:$0xff]
        %v4220 = vld [vmem:[%s373 + $0xb8] sm:$0xff]
        %v4221 = vld [vmem:[%s373 + $0xc0] sm:$0xff]
        %v4222 = vld [vmem:[%s373 + $0xc8] sm:$0xff]
        %v4223 = vld [vmem:[%s373 + $0xd0] sm:$0xff]
        %v4224 = vld [vmem:[%s373 + $0xd8] sm:$0xff]
        %v4225 = vld [vmem:[%s373 + $0xe0] sm:$0xff]
        %v4226 = vld [vmem:[%s373 + $0xe8] sm:$0xff]
        %v4227 = vld [vmem:[%s373 + $0xf0] sm:$0xff]
        %v4228 = vld [vmem:[%s373 + $0xf8] sm:$0xff]
        %v4229 = vld [vmem:[%s373 + $0x100] sm:$0xff]
        %v4230 = vld [vmem:[%s373 + $0x108] sm:$0xff]
        %v4231 = vld [vmem:[%s373 + $0x110] sm:$0xff]
        %v4232 = vld [vmem:[%s373 + $0x118] sm:$0xff]
        %v4233 = vld [vmem:[%s373 + $0x120] sm:$0xff]
        %v4234 = vld [vmem:[%s373 + $0x128] sm:$0xff]
        %v4235 = vld [vmem:[%s373 + $0x130] sm:$0xff]
        %v4236 = vld [vmem:[%s373 + $0x138] sm:$0xff]
        %v4237 = vld [vmem:[%s373 + $0x140] sm:$0xff]
        %v4238 = vld [vmem:[%s373 + $0x148] sm:$0xff]
        %v4239 = vld [vmem:[%s373 + $0x150] sm:$0xff]
        %v4240 = vld [vmem:[%s373 + $0x158] sm:$0xff]
        %v4241 = vld [vmem:[%s373 + $0x160] sm:$0xff]
        %v4242 = vld [vmem:[%s373 + $0x168] sm:$0xff]
        %v4243 = vld [vmem:[%s373 + $0x170] sm:$0xff]
        %v4244 = vld [vmem:[%s373 + $0x178] sm:$0xff]
        %v4245 = vld [vmem:[%s373 + $0x180] sm:$0xff]
        %v4246 = vld [vmem:[%s373 + $0x188] sm:$0xff]
        %v4247 = vld [vmem:[%s373 + $0x190] sm:$0xff]
        %v4248 = vld [vmem:[%s373 + $0x198] sm:$0xff]
        %v4249 = vld [vmem:[%s373 + $0x1a0] sm:$0xff]
        %v4250 = vld [vmem:[%s373 + $0x1a8] sm:$0xff]
        %v4251 = vld [vmem:[%s373 + $0x1b0] sm:$0xff]
        %v4252 = vld [vmem:[%s373 + $0x1b8] sm:$0xff]
        %v4253 = vld [vmem:[%s373 + $0x1c0] sm:$0xff]
        %v4254 = vld [vmem:[%s373 + $0x1c8] sm:$0xff]
        %v4255 = vld [vmem:[%s373 + $0x1d0] sm:$0xff]
        %v4256 = vld [vmem:[%s373 + $0x1d8] sm:$0xff]
        %v4257 = vld [vmem:[%s373 + $0x1e0] sm:$0xff]
        %v4258 = vld [vmem:[%s373 + $0x1e8] sm:$0xff]
        %v4259 = vld [vmem:[%s373 + $0x1f0] sm:$0xff]
        %v4260 = vld [vmem:[%s373 + $0x1f8] sm:$0xff]
        %v4261 = vld [vmem:[%s373 + $0x200] sm:$0xff]
        %v4262 = vld [vmem:[%s373 + $0x208] sm:$0xff]
        %v4263 = vld [vmem:[%s373 + $0x210] sm:$0xff]
        %v4264 = vld [vmem:[%s373 + $0x218] sm:$0xff]
        %v4265 = vld [vmem:[%s373 + $0x220] sm:$0xff]
        %v4266 = vld [vmem:[%s373 + $0x228] sm:$0xff]
        %v4267 = vld [vmem:[%s373 + $0x230] sm:$0xff]
        %v4268 = vld [vmem:[%s373 + $0x238] sm:$0xff]
        %v4269 = vld [vmem:[%s373 + $0x240] sm:$0xff]
        %v4270 = vld [vmem:[%s373 + $0x248] sm:$0xff]
        %v4271 = vld [vmem:[%s373 + $0x250] sm:$0xff]
        %v4272 = vld [vmem:[%s373 + $0x258] sm:$0xff]
        %v4273 = vld [vmem:[%s373 + $0x260] sm:$0xff]
        %v4274 = vld [vmem:[%s373 + $0x268] sm:$0xff]
        %v4275 = vld [vmem:[%s373 + $0x270] sm:$0xff]
        %v4276 = vld [vmem:[%s373 + $0x278] sm:$0xff]
        %v4277 = vld [vmem:[%s373 + $0x280] sm:$0xff]
        %v4278 = vld [vmem:[%s373 + $0x288] sm:$0xff]
        %v4279 = vld [vmem:[%s373 + $0x290] sm:$0xff]
        %v4280 = vld [vmem:[%s373 + $0x298] sm:$0xff]
        %v4281 = vld [vmem:[%s373 + $0x2a0] sm:$0xff]
        %v4282 = vld [vmem:[%s373 + $0x2a8] sm:$0xff]
        %v4283 = vld [vmem:[%s373 + $0x2b0] sm:$0xff]
        %v4284 = vld [vmem:[%s373 + $0x2b8] sm:$0xff]
        %v4285 = vld [vmem:[%s373 + $0x2c0] sm:$0xff]
        %v4286 = vld [vmem:[%s373 + $0x2c8] sm:$0xff]
        %v4287 = vld [vmem:[%s373 + $0x2d0] sm:$0xff]
        %v4288 = vld [vmem:[%s373 + $0x2d8] sm:$0xff]
        %v4289 = vld [vmem:[%s373 + $0x2e0] sm:$0xff]
        %v4290 = vld [vmem:[%s373 + $0x2e8] sm:$0xff]
        %v4291 = vld [vmem:[%s373 + $0x2f0] sm:$0xff]
        %v4292 = vld [vmem:[%s373 + $0x2f8] sm:$0xff]
        %v4293 = vld [vmem:[%s373 + $0x300] sm:$0xff]
        %v4294 = vld [vmem:[%s373 + $0x308] sm:$0xff]
        %v4295 = vld [vmem:[%s373 + $0x310] sm:$0xff]
        %v4296 = vld [vmem:[%s373 + $0x318] sm:$0xff]
        %v4297 = vld [vmem:[%s373 + $0x320] sm:$0xff]
        %v4298 = vld [vmem:[%s373 + $0x328] sm:$0xff]
        %v4299 = vld [vmem:[%s373 + $0x330] sm:$0xff]
        %v4300 = vld [vmem:[%s373 + $0x338] sm:$0xff]
        %v4301 = vld [vmem:[%s373 + $0x340] sm:$0xff]
        %v4302 = vld [vmem:[%s373 + $0x348] sm:$0xff]
        %v4303 = vld [vmem:[%s373 + $0x350] sm:$0xff]
        %v4304 = vld [vmem:[%s373 + $0x358] sm:$0xff]
        %v4305 = vld [vmem:[%s373 + $0x360] sm:$0xff]
        %v4306 = vld [vmem:[%s373 + $0x368] sm:$0xff]
        %v4307 = vld [vmem:[%s373 + $0x370] sm:$0xff]
        %v4308 = vld [vmem:[%s373 + $0x378] sm:$0xff]
        %v4309 = vld [vmem:[%s373 + $0x380] sm:$0xff]
        %v4310 = vld [vmem:[%s373 + $0x388] sm:$0xff]
        %v4311 = vld [vmem:[%s373 + $0x390] sm:$0xff]
        %v4312 = vld [vmem:[%s373 + $0x398] sm:$0xff]
        %v4313 = vld [vmem:[%s373 + $0x3a0] sm:$0xff]
        %v4314 = vld [vmem:[%s373 + $0x3a8] sm:$0xff]
        %v4315 = vld [vmem:[%s373 + $0x3b0] sm:$0xff]
        %v4316 = vld [vmem:[%s373 + $0x3b8] sm:$0xff]
        %v4317 = vld [vmem:[%s373 + $0x3c0] sm:$0xff]
        %v4318 = vld [vmem:[%s373 + $0x3c8] sm:$0xff]
        %v4319 = vld [vmem:[%s373 + $0x3d0] sm:$0xff]
        %v4320 = vld [vmem:[%s373 + $0x3d8] sm:$0xff]
        %v4321 = vld [vmem:[%s373 + $0x3e0] sm:$0xff]
        %v4322 = vld [vmem:[%s373 + $0x3e8] sm:$0xff]
        %v4323 = vld [vmem:[%s373 + $0x3f0] sm:$0xff]
        %v4324 = vld [vmem:[%s373 + $0x3f8] sm:$0xff]
        %v4325 = vadd.f32 %v4069, %v4197
        %v4326 = vadd.f32 %v4070, %v4198
        %v4327 = vadd.f32 %v4071, %v4199
        %v4328 = vadd.f32 %v4072, %v4200
        %v4329 = vadd.f32 %v4073, %v4201
        %v4330 = vadd.f32 %v4074, %v4202
        %v4331 = vadd.f32 %v4075, %v4203
        %v4332 = vadd.f32 %v4076, %v4204
        %v4333 = vadd.f32 %v4077, %v4205
        %v4334 = vadd.f32 %v4078, %v4206
        %v4335 = vadd.f32 %v4079, %v4207
        %v4336 = vadd.f32 %v4080, %v4208
        %v4337 = vadd.f32 %v4081, %v4209
        %v4338 = vadd.f32 %v4082, %v4210
        %v4339 = vadd.f32 %v4083, %v4211
        %v4340 = vadd.f32 %v4084, %v4212
        %v4341 = vadd.f32 %v4085, %v4213
        %v4342 = vadd.f32 %v4086, %v4214
        %v4343 = vadd.f32 %v4087, %v4215
        %v4344 = vadd.f32 %v4088, %v4216
        %v4345 = vadd.f32 %v4089, %v4217
        %v4346 = vadd.f32 %v4090, %v4218
        %v4347 = vadd.f32 %v4091, %v4219
        %v4348 = vadd.f32 %v4092, %v4220
        %v4349 = vadd.f32 %v4093, %v4221
        %v4350 = vadd.f32 %v4094, %v4222
        %v4351 = vadd.f32 %v4095, %v4223
        %v4352 = vadd.f32 %v4096, %v4224
        %v4353 = vadd.f32 %v4097, %v4225
        %v4354 = vadd.f32 %v4098, %v4226
        %v4355 = vadd.f32 %v4099, %v4227
        %v4356 = vadd.f32 %v4100, %v4228
        %v4357 = vadd.f32 %v4101, %v4229
        %v4358 = vadd.f32 %v4102, %v4230
        %v4359 = vadd.f32 %v4103, %v4231
        %v4360 = vadd.f32 %v4104, %v4232
        %v4361 = vadd.f32 %v4105, %v4233
        %v4362 = vadd.f32 %v4106, %v4234
        %v4363 = vadd.f32 %v4107, %v4235
        %v4364 = vadd.f32 %v4108, %v4236
        %v4365 = vadd.f32 %v4109, %v4237
        %v4366 = vadd.f32 %v4110, %v4238
        %v4367 = vadd.f32 %v4111, %v4239
        %v4368 = vadd.f32 %v4112, %v4240
        %v4369 = vadd.f32 %v4113, %v4241
        %v4370 = vadd.f32 %v4114, %v4242
        %v4371 = vadd.f32 %v4115, %v4243
        %v4372 = vadd.f32 %v4116, %v4244
        %v4373 = vadd.f32 %v4117, %v4245
        %v4374 = vadd.f32 %v4118, %v4246
        %v4375 = vadd.f32 %v4119, %v4247
        %v4376 = vadd.f32 %v4120, %v4248
        %v4377 = vadd.f32 %v4121, %v4249
        %v4378 = vadd.f32 %v4122, %v4250
        %v4379 = vadd.f32 %v4123, %v4251
        %v4380 = vadd.f32 %v4124, %v4252
        %v4381 = vadd.f32 %v4125, %v4253
        %v4382 = vadd.f32 %v4126, %v4254
        %v4383 = vadd.f32 %v4127, %v4255
        %v4384 = vadd.f32 %v4128, %v4256
        %v4385 = vadd.f32 %v4129, %v4257
        %v4386 = vadd.f32 %v4130, %v4258
        %v4387 = vadd.f32 %v4131, %v4259
        %v4388 = vadd.f32 %v4132, %v4260
        %v4389 = vadd.f32 %v4133, %v4261
        %v4390 = vadd.f32 %v4134, %v4262
        %v4391 = vadd.f32 %v4135, %v4263
        %v4392 = vadd.f32 %v4136, %v4264
        %v4393 = vadd.f32 %v4137, %v4265
        %v4394 = vadd.f32 %v4138, %v4266
        %v4395 = vadd.f32 %v4139, %v4267
        %v4396 = vadd.f32 %v4140, %v4268
        %v4397 = vadd.f32 %v4141, %v4269
        %v4398 = vadd.f32 %v4142, %v4270
        %v4399 = vadd.f32 %v4143, %v4271
        %v4400 = vadd.f32 %v4144, %v4272
        %v4401 = vadd.f32 %v4145, %v4273
        %v4402 = vadd.f32 %v4146, %v4274
        %v4403 = vadd.f32 %v4147, %v4275
        %v4404 = vadd.f32 %v4148, %v4276
        %v4405 = vadd.f32 %v4149, %v4277
        %v4406 = vadd.f32 %v4150, %v4278
        %v4407 = vadd.f32 %v4151, %v4279
        %v4408 = vadd.f32 %v4152, %v4280
        %v4409 = vadd.f32 %v4153, %v4281
        %v4410 = vadd.f32 %v4154, %v4282
        %v4411 = vadd.f32 %v4155, %v4283
        %v4412 = vadd.f32 %v4156, %v4284
        %v4413 = vadd.f32 %v4157, %v4285
        %v4414 = vadd.f32 %v4158, %v4286
        %v4415 = vadd.f32 %v4159, %v4287
        %v4416 = vadd.f32 %v4160, %v4288
        %v4417 = vadd.f32 %v4161, %v4289
        %v4418 = vadd.f32 %v4162, %v4290
        %v4419 = vadd.f32 %v4163, %v4291
        %v4420 = vadd.f32 %v4164, %v4292
        %v4421 = vadd.f32 %v4165, %v4293
        %v4422 = vadd.f32 %v4166, %v4294
        %v4423 = vadd.f32 %v4167, %v4295
        %v4424 = vadd.f32 %v4168, %v4296
        %v4425 = vadd.f32 %v4169, %v4297
        %v4426 = vadd.f32 %v4170, %v4298
        %v4427 = vadd.f32 %v4171, %v4299
        %v4428 = vadd.f32 %v4172, %v4300
        %v4429 = vadd.f32 %v4173, %v4301
        %v4430 = vadd.f32 %v4174, %v4302
        %v4431 = vadd.f32 %v4175, %v4303
        %v4432 = vadd.f32 %v4176, %v4304
        %v4433 = vadd.f32 %v4177, %v4305
        %v4434 = vadd.f32 %v4178, %v4306
        %v4435 = vadd.f32 %v4179, %v4307
        %v4436 = vadd.f32 %v4180, %v4308
        %v4437 = vadd.f32 %v4181, %v4309
        %v4438 = vadd.f32 %v4182, %v4310
        %v4439 = vadd.f32 %v4183, %v4311
        %v4440 = vadd.f32 %v4184, %v4312
        %v4441 = vadd.f32 %v4185, %v4313
        %v4442 = vadd.f32 %v4186, %v4314
        %v4443 = vadd.f32 %v4187, %v4315
        %v4444 = vadd.f32 %v4188, %v4316
        %v4445 = vadd.f32 %v4189, %v4317
        %v4446 = vadd.f32 %v4190, %v4318
        %v4447 = vadd.f32 %v4191, %v4319
        %v4448 = vadd.f32 %v4192, %v4320
        %v4449 = vadd.f32 %v4193, %v4321
        %v4450 = vadd.f32 %v4194, %v4322
        %v4451 = vadd.f32 %v4195, %v4323
        %v4452 = vadd.f32 %v4196, %v4324
        %v4453 = vmax.f32 %v4325, 0.0
        %v4454 = vmax.f32 %v4326, 0.0
        %v4455 = vmax.f32 %v4327, 0.0
        %v4456 = vmax.f32 %v4328, 0.0
        %v4457 = vmax.f32 %v4329, 0.0
        %v4458 = vmax.f32 %v4330, 0.0
        %v4459 = vmax.f32 %v4331, 0.0
        %v4460 = vmax.f32 %v4332, 0.0
        %v4461 = vmax.f32 %v4333, 0.0
        %v4462 = vmax.f32 %v4334, 0.0
        %v4463 = vmax.f32 %v4335, 0.0
        %v4464 = vmax.f32 %v4336, 0.0
        %v4465 = vmax.f32 %v4337, 0.0
        %v4466 = vmax.f32 %v4338, 0.0
        %v4467 = vmax.f32 %v4339, 0.0
        %v4468 = vmax.f32 %v4340, 0.0
        %v4469 = vmax.f32 %v4341, 0.0
        %v4470 = vmax.f32 %v4342, 0.0
        %v4471 = vmax.f32 %v4343, 0.0
        %v4472 = vmax.f32 %v4344, 0.0
        %v4473 = vmax.f32 %v4345, 0.0
        %v4474 = vmax.f32 %v4346, 0.0
        %v4475 = vmax.f32 %v4347, 0.0
        %v4476 = vmax.f32 %v4348, 0.0
        %v4477 = vmax.f32 %v4349, 0.0
        %v4478 = vmax.f32 %v4350, 0.0
        %v4479 = vmax.f32 %v4351, 0.0
        %v4480 = vmax.f32 %v4352, 0.0
        %v4481 = vmax.f32 %v4353, 0.0
        %v4482 = vmax.f32 %v4354, 0.0
        %v4483 = vmax.f32 %v4355, 0.0
        %v4484 = vmax.f32 %v4356, 0.0
        %v4485 = vmax.f32 %v4357, 0.0
        %v4486 = vmax.f32 %v4358, 0.0
        %v4487 = vmax.f32 %v4359, 0.0
        %v4488 = vmax.f32 %v4360, 0.0
        %v4489 = vmax.f32 %v4361, 0.0
        %v4490 = vmax.f32 %v4362, 0.0
        %v4491 = vmax.f32 %v4363, 0.0
        %v4492 = vmax.f32 %v4364, 0.0
        %v4493 = vmax.f32 %v4365, 0.0
        %v4494 = vmax.f32 %v4366, 0.0
        %v4495 = vmax.f32 %v4367, 0.0
        %v4496 = vmax.f32 %v4368, 0.0
        %v4497 = vmax.f32 %v4369, 0.0
        %v4498 = vmax.f32 %v4370, 0.0
        %v4499 = vmax.f32 %v4371, 0.0
        %v4500 = vmax.f32 %v4372, 0.0
        %v4501 = vmax.f32 %v4373, 0.0
        %v4502 = vmax.f32 %v4374, 0.0
        %v4503 = vmax.f32 %v4375, 0.0
        %v4504 = vmax.f32 %v4376, 0.0
        %v4505 = vmax.f32 %v4377, 0.0
        %v4506 = vmax.f32 %v4378, 0.0
        %v4507 = vmax.f32 %v4379, 0.0
        %v4508 = vmax.f32 %v4380, 0.0
        %v4509 = vmax.f32 %v4381, 0.0
        %v4510 = vmax.f32 %v4382, 0.0
        %v4511 = vmax.f32 %v4383, 0.0
        %v4512 = vmax.f32 %v4384, 0.0
        %v4513 = vmax.f32 %v4385, 0.0
        %v4514 = vmax.f32 %v4386, 0.0
        %v4515 = vmax.f32 %v4387, 0.0
        %v4516 = vmax.f32 %v4388, 0.0
        %v4517 = vmax.f32 %v4389, 0.0
        %v4518 = vmax.f32 %v4390, 0.0
        %v4519 = vmax.f32 %v4391, 0.0
        %v4520 = vmax.f32 %v4392, 0.0
        %v4521 = vmax.f32 %v4393, 0.0
        %v4522 = vmax.f32 %v4394, 0.0
        %v4523 = vmax.f32 %v4395, 0.0
        %v4524 = vmax.f32 %v4396, 0.0
        %v4525 = vmax.f32 %v4397, 0.0
        %v4526 = vmax.f32 %v4398, 0.0
        %v4527 = vmax.f32 %v4399, 0.0
        %v4528 = vmax.f32 %v4400, 0.0
        %v4529 = vmax.f32 %v4401, 0.0
        %v4530 = vmax.f32 %v4402, 0.0
        %v4531 = vmax.f32 %v4403, 0.0
        %v4532 = vmax.f32 %v4404, 0.0
        %v4533 = vmax.f32 %v4405, 0.0
        %v4534 = vmax.f32 %v4406, 0.0
        %v4535 = vmax.f32 %v4407, 0.0
        %v4536 = vmax.f32 %v4408, 0.0
        %v4537 = vmax.f32 %v4409, 0.0
        %v4538 = vmax.f32 %v4410, 0.0
        %v4539 = vmax.f32 %v4411, 0.0
        %v4540 = vmax.f32 %v4412, 0.0
        %v4541 = vmax.f32 %v4413, 0.0
        %v4542 = vmax.f32 %v4414, 0.0
        %v4543 = vmax.f32 %v4415, 0.0
        %v4544 = vmax.f32 %v4416, 0.0
        %v4545 = vmax.f32 %v4417, 0.0
        %v4546 = vmax.f32 %v4418, 0.0
        %v4547 = vmax.f32 %v4419, 0.0
        %v4548 = vmax.f32 %v4420, 0.0
        %v4549 = vmax.f32 %v4421, 0.0
        %v4550 = vmax.f32 %v4422, 0.0
        %v4551 = vmax.f32 %v4423, 0.0
        %v4552 = vmax.f32 %v4424, 0.0
        %v4553 = vmax.f32 %v4425, 0.0
        %v4554 = vmax.f32 %v4426, 0.0
        %v4555 = vmax.f32 %v4427, 0.0
        %v4556 = vmax.f32 %v4428, 0.0
        %v4557 = vmax.f32 %v4429, 0.0
        %v4558 = vmax.f32 %v4430, 0.0
        %v4559 = vmax.f32 %v4431, 0.0
        %v4560 = vmax.f32 %v4432, 0.0
        %v4561 = vmax.f32 %v4433, 0.0
        %v4562 = vmax.f32 %v4434, 0.0
        %v4563 = vmax.f32 %v4435, 0.0
        %v4564 = vmax.f32 %v4436, 0.0
        %v4565 = vmax.f32 %v4437, 0.0
        %v4566 = vmax.f32 %v4438, 0.0
        %v4567 = vmax.f32 %v4439, 0.0
        %v4568 = vmax.f32 %v4440, 0.0
        %v4569 = vmax.f32 %v4441, 0.0
        %v4570 = vmax.f32 %v4442, 0.0
        %v4571 = vmax.f32 %v4443, 0.0
        %v4572 = vmax.f32 %v4444, 0.0
        %v4573 = vmax.f32 %v4445, 0.0
        %v4574 = vmax.f32 %v4446, 0.0
        %v4575 = vmax.f32 %v4447, 0.0
        %v4576 = vmax.f32 %v4448, 0.0
        %v4577 = vmax.f32 %v4449, 0.0
        %v4578 = vmax.f32 %v4450, 0.0
        %v4579 = vmax.f32 %v4451, 0.0
        %v4580 = vmax.f32 %v4452, 0.0
        %4581 = vst [vmem:[%s421] sm:$0xff] %v4453
        %4582 = vst [vmem:[%s421 + $0x8] sm:$0xff] %v4454
        %4583 = vst [vmem:[%s421 + $0x10] sm:$0xff] %v4455
        %4584 = vst [vmem:[%s421 + $0x18] sm:$0xff] %v4456
        %4585 = vst [vmem:[%s421 + $0x20] sm:$0xff] %v4457
        %4586 = vst [vmem:[%s421 + $0x28] sm:$0xff] %v4458
        %4587 = vst [vmem:[%s421 + $0x30] sm:$0xff] %v4459
        %4588 = vst [vmem:[%s421 + $0x38] sm:$0xff] %v4460
        %4589 = vst [vmem:[%s421 + $0x40] sm:$0xff] %v4461
        %4590 = vst [vmem:[%s421 + $0x48] sm:$0xff] %v4462
        %4591 = vst [vmem:[%s421 + $0x50] sm:$0xff] %v4463
        %4592 = vst [vmem:[%s421 + $0x58] sm:$0xff] %v4464
        %4593 = vst [vmem:[%s421 + $0x60] sm:$0xff] %v4465
        %4594 = vst [vmem:[%s421 + $0x68] sm:$0xff] %v4466
        %4595 = vst [vmem:[%s421 + $0x70] sm:$0xff] %v4467
        %4596 = vst [vmem:[%s421 + $0x78] sm:$0xff] %v4468
        %4597 = vst [vmem:[%s421 + $0x80] sm:$0xff] %v4469
        %4598 = vst [vmem:[%s421 + $0x88] sm:$0xff] %v4470
        %4599 = vst [vmem:[%s421 + $0x90] sm:$0xff] %v4471
        %4600 = vst [vmem:[%s421 + $0x98] sm:$0xff] %v4472
        %4601 = vst [vmem:[%s421 + $0xa0] sm:$0xff] %v4473
        %4602 = vst [vmem:[%s421 + $0xa8] sm:$0xff] %v4474
        %4603 = vst [vmem:[%s421 + $0xb0] sm:$0xff] %v4475
        %4604 = vst [vmem:[%s421 + $0xb8] sm:$0xff] %v4476
        %4605 = vst [vmem:[%s421 + $0xc0] sm:$0xff] %v4477
        %4606 = vst [vmem:[%s421 + $0xc8] sm:$0xff] %v4478
        %4607 = vst [vmem:[%s421 + $0xd0] sm:$0xff] %v4479
        %4608 = vst [vmem:[%s421 + $0xd8] sm:$0xff] %v4480
        %4609 = vst [vmem:[%s421 + $0xe0] sm:$0xff] %v4481
        %4610 = vst [vmem:[%s421 + $0xe8] sm:$0xff] %v4482
        %4611 = vst [vmem:[%s421 + $0xf0] sm:$0xff] %v4483
        %4612 = vst [vmem:[%s421 + $0xf8] sm:$0xff] %v4484
        %4613 = vst [vmem:[%s421 + $0x100] sm:$0xff] %v4485
        %4614 = vst [vmem:[%s421 + $0x108] sm:$0xff] %v4486
        %4615 = vst [vmem:[%s421 + $0x110] sm:$0xff] %v4487
        %4616 = vst [vmem:[%s421 + $0x118] sm:$0xff] %v4488
        %4617 = vst [vmem:[%s421 + $0x120] sm:$0xff] %v4489
        %4618 = vst [vmem:[%s421 + $0x128] sm:$0xff] %v4490
        %4619 = vst [vmem:[%s421 + $0x130] sm:$0xff] %v4491
        %4620 = vst [vmem:[%s421 + $0x138] sm:$0xff] %v4492
        %4621 = vst [vmem:[%s421 + $0x140] sm:$0xff] %v4493
        %4622 = vst [vmem:[%s421 + $0x148] sm:$0xff] %v4494
        %4623 = vst [vmem:[%s421 + $0x150] sm:$0xff] %v4495
        %4624 = vst [vmem:[%s421 + $0x158] sm:$0xff] %v4496
        %4625 = vst [vmem:[%s421 + $0x160] sm:$0xff] %v4497
        %4626 = vst [vmem:[%s421 + $0x168] sm:$0xff] %v4498
        %4627 = vst [vmem:[%s421 + $0x170] sm:$0xff] %v4499
        %4628 = vst [vmem:[%s421 + $0x178] sm:$0xff] %v4500
        %4629 = vst [vmem:[%s421 + $0x180] sm:$0xff] %v4501
        %4630 = vst [vmem:[%s421 + $0x188] sm:$0xff] %v4502
        %4631 = vst [vmem:[%s421 + $0x190] sm:$0xff] %v4503
        %4632 = vst [vmem:[%s421 + $0x198] sm:$0xff] %v4504
        %4633 = vst [vmem:[%s421 + $0x1a0] sm:$0xff] %v4505
        %4634 = vst [vmem:[%s421 + $0x1a8] sm:$0xff] %v4506
        %4635 = vst [vmem:[%s421 + $0x1b0] sm:$0xff] %v4507
        %4636 = vst [vmem:[%s421 + $0x1b8] sm:$0xff] %v4508
        %4637 = vst [vmem:[%s421 + $0x1c0] sm:$0xff] %v4509
        %4638 = vst [vmem:[%s421 + $0x1c8] sm:$0xff] %v4510
        %4639 = vst [vmem:[%s421 + $0x1d0] sm:$0xff] %v4511
        %4640 = vst [vmem:[%s421 + $0x1d8] sm:$0xff] %v4512
        %4641 = vst [vmem:[%s421 + $0x1e0] sm:$0xff] %v4513
        %4642 = vst [vmem:[%s421 + $0x1e8] sm:$0xff] %v4514
        %4643 = vst [vmem:[%s421 + $0x1f0] sm:$0xff] %v4515
        %4644 = vst [vmem:[%s421 + $0x1f8] sm:$0xff] %v4516
        %4645 = vst [vmem:[%s421 + $0x200] sm:$0xff] %v4517
        %4646 = vst [vmem:[%s421 + $0x208] sm:$0xff] %v4518
        %4647 = vst [vmem:[%s421 + $0x210] sm:$0xff] %v4519
        %4648 = vst [vmem:[%s421 + $0x218] sm:$0xff] %v4520
        %4649 = vst [vmem:[%s421 + $0x220] sm:$0xff] %v4521
        %4650 = vst [vmem:[%s421 + $0x228] sm:$0xff] %v4522
        %4651 = vst [vmem:[%s421 + $0x230] sm:$0xff] %v4523
        %4652 = vst [vmem:[%s421 + $0x238] sm:$0xff] %v4524
        %4653 = vst [vmem:[%s421 + $0x240] sm:$0xff] %v4525
        %4654 = vst [vmem:[%s421 + $0x248] sm:$0xff] %v4526
        %4655 = vst [vmem:[%s421 + $0x250] sm:$0xff] %v4527
        %4656 = vst [vmem:[%s421 + $0x258] sm:$0xff] %v4528
        %4657 = vst [vmem:[%s421 + $0x260] sm:$0xff] %v4529
        %4658 = vst [vmem:[%s421 + $0x268] sm:$0xff] %v4530
        %4659 = vst [vmem:[%s421 + $0x270] sm:$0xff] %v4531
        %4660 = vst [vmem:[%s421 + $0x278] sm:$0xff] %v4532
        %4661 = vst [vmem:[%s421 + $0x280] sm:$0xff] %v4533
        %4662 = vst [vmem:[%s421 + $0x288] sm:$0xff] %v4534
        %4663 = vst [vmem:[%s421 + $0x290] sm:$0xff] %v4535
        %4664 = vst [vmem:[%s421 + $0x298] sm:$0xff] %v4536
        %4665 = vst [vmem:[%s421 + $0x2a0] sm:$0xff] %v4537
        %4666 = vst [vmem:[%s421 + $0x2a8] sm:$0xff] %v4538
        %4667 = vst [vmem:[%s421 + $0x2b0] sm:$0xff] %v4539
        %4668 = vst [vmem:[%s421 + $0x2b8] sm:$0xff] %v4540
        %4669 = vst [vmem:[%s421 + $0x2c0] sm:$0xff] %v4541
        %4670 = vst [vmem:[%s421 + $0x2c8] sm:$0xff] %v4542
        %4671 = vst [vmem:[%s421 + $0x2d0] sm:$0xff] %v4543
        %4672 = vst [vmem:[%s421 + $0x2d8] sm:$0xff] %v4544
        %4673 = vst [vmem:[%s421 + $0x2e0] sm:$0xff] %v4545
        %4674 = vst [vmem:[%s421 + $0x2e8] sm:$0xff] %v4546
        %4675 = vst [vmem:[%s421 + $0x2f0] sm:$0xff] %v4547
        %4676 = vst [vmem:[%s421 + $0x2f8] sm:$0xff] %v4548
        %4677 = vst [vmem:[%s421 + $0x300] sm:$0xff] %v4549
        %4678 = vst [vmem:[%s421 + $0x308] sm:$0xff] %v4550
        %4679 = vst [vmem:[%s421 + $0x310] sm:$0xff] %v4551
        %4680 = vst [vmem:[%s421 + $0x318] sm:$0xff] %v4552
        %4681 = vst [vmem:[%s421 + $0x320] sm:$0xff] %v4553
        %4682 = vst [vmem:[%s421 + $0x328] sm:$0xff] %v4554
        %4683 = vst [vmem:[%s421 + $0x330] sm:$0xff] %v4555
        %4684 = vst [vmem:[%s421 + $0x338] sm:$0xff] %v4556
        %4685 = vst [vmem:[%s421 + $0x340] sm:$0xff] %v4557
        %4686 = vst [vmem:[%s421 + $0x348] sm:$0xff] %v4558
        %4687 = vst [vmem:[%s421 + $0x350] sm:$0xff] %v4559
        %4688 = vst [vmem:[%s421 + $0x358] sm:$0xff] %v4560
        %4689 = vst [vmem:[%s421 + $0x360] sm:$0xff] %v4561
        %4690 = vst [vmem:[%s421 + $0x368] sm:$0xff] %v4562
        %4691 = vst [vmem:[%s421 + $0x370] sm:$0xff] %v4563
        %4692 = vst [vmem:[%s421 + $0x378] sm:$0xff] %v4564
        %4693 = vst [vmem:[%s421 + $0x380] sm:$0xff] %v4565
        %4694 = vst [vmem:[%s421 + $0x388] sm:$0xff] %v4566
        %4695 = vst [vmem:[%s421 + $0x390] sm:$0xff] %v4567
        %4696 = vst [vmem:[%s421 + $0x398] sm:$0xff] %v4568
        %4697 = vst [vmem:[%s421 + $0x3a0] sm:$0xff] %v4569
        %4698 = vst [vmem:[%s421 + $0x3a8] sm:$0xff] %v4570
        %4699 = vst [vmem:[%s421 + $0x3b0] sm:$0xff] %v4571
        %4700 = vst [vmem:[%s421 + $0x3b8] sm:$0xff] %v4572
        %4701 = vst [vmem:[%s421 + $0x3c0] sm:$0xff] %v4573
        %4702 = vst [vmem:[%s421 + $0x3c8] sm:$0xff] %v4574
        %4703 = vst [vmem:[%s421 + $0x3d0] sm:$0xff] %v4575
        %4704 = vst [vmem:[%s421 + $0x3d8] sm:$0xff] %v4576
        %4705 = vst [vmem:[%s421 + $0x3e0] sm:$0xff] %v4577
        %4706 = vst [vmem:[%s421 + $0x3e8] sm:$0xff] %v4578
        %4707 = vst [vmem:[%s421 + $0x3f0] sm:$0xff] %v4579
        %4708 = vst [vmem:[%s421 + $0x3f8] sm:$0xff] %v4580
        %s4709 = sand.u32 %s252, 1
        %s4710 = scalar_lea.sflag [#allocation5], %s4709
        %s4711 = sand.u32 %s252, 1
        %s4712 = smul.addr %s4711, 1024
        %s4713 = scalar_lea.vmem [#allocation11], %s4712
        // Predicated region
        $region77: #{tpu_custom_call.1} parent=59 // pred_check
          %p4714 = pneg %p262
        $region78: #{tpu_custom_call.1} parent=59 // pred_check_branch
          %4716 = sbr.rel (%p4714) target = $region80
        $region79: #{tpu_custom_call.1} parent=59 // pred_region
          %s4718 = ssub.s32 16384, 16384
          %4719 = vsyncadd %s4710, %s4718
          %s4720 = smul.addr %s29, 128
          %s4721 = smul.addr %s4720, 128
          %s4722 = scalar_lea.hbm %s10, %s4721
          %s4723 = sshll.u32 %s4713, 4
          %s4724 = int_to_ptr.vmem [resolvable:$true] %s4723
          %4729 = dma.vmem_to_hbm [thread:$0]  %s4724, 16384, %s4722, %s4710, 512, 512, 32
        $region80: #{tpu_custom_call.1} parent=59 // pred_fallthru
          _
      $region60: #{tpu_custom_call.1} parent=5 // pred_fallthru
        _
      %p4730 = scmp.le.s32.totalorder 2, %s24
      // Predicated region
      $region81: #{tpu_custom_call.1} parent=5 // pred_check
        %p4731 = pneg %p4730
      $region82: #{tpu_custom_call.1} parent=5 // pred_check_branch
        %4733 = sbr.rel (%p4731) target = $region84
      $region83: #{tpu_custom_call.1} parent=5 // pred_region
        %s4734 = ssub.s32 %s24, 2
        // Predicated region
        $region85: #{tpu_custom_call.1} parent=83 // pred_check
          %p4735 = pneg %p268
        $region86: #{tpu_custom_call.1} parent=83 // pred_check_branch
          %4737 = sbr.rel (%p4735) target = $region88
        $region87: #{tpu_custom_call.1} parent=83 // pred_region
          %s4738 = sand.u32 %s253, 1
          %s4739 = scalar_lea.sflag [#allocation5], %s4738
          %s4740 = sand.u32 %s253, 1
          %s4741 = smul.addr %s4740, 1024
          %s4742 = scalar_lea.vmem [#allocation11], %s4741
          %4743 = dma.done %s4739, 16384
        $region88: #{tpu_custom_call.1} parent=83 // pred_fallthru
          _
      $region84: #{tpu_custom_call.1} parent=5 // pred_fallthru
        _
    $region6: #{tpu_custom_call.1} parent=1 // loop_footer
      %s28 = sadd.s32 1, %s24
    $region7: #{tpu_custom_call.1} parent=1 // loop_footer_branch
      %23 = sbr.rel target = $region3
    $region8: #{tpu_custom_call.1} parent=1 // loop_exit
      _
    %4744 = vsyncpa [#allocation4], 1
    %s4745 = scalar_lea.sflag [#allocation4], 1
    %4746 = vsyncpa %s4745, 1
    %4747 = vsyncpa [#allocation7], 1
    %4748 = vsyncpa [#allocation10], 1
    %4749 = vsyncpa [#allocation5], 1
    %s4750 = scalar_lea.sflag [#allocation5], 1
    %4751 = vsyncpa %s4750, 1

</llo_original>
